<compile_context>
chip_gen: v5e
topology: v5e:2x2
jax: 0.10.0
libtpu: 0.0.40
codegen_flags: <defaults>
</compile_context>

<pallas_src>
import jax
import jax.numpy as jnp
from jax import lax
from jax.experimental import pallas as pl
from jax.experimental.pallas import tpu as pltpu

LANE = 128          # lanes per row of the lane-dense view (one input element per lane)
SUB = 8             # sub-tile rows per inner chunk (= 1 f32 vreg deep) -> spill-free
UNROLL = 2          # chunks per fori_loop iteration (keeps live set <= ~40 vregs)
BLOCK_ROWS = 1024   # rows per grid step; in+out double-buffered = 2 MiB VMEM


def _round_up(a, m):
    return ((a + m - 1) // m) * m


def _make_kernel(d1, d2, blk):
    """Kernel for fixed hidden sizes (d1, d2); params are packed flat in SMEM."""
    o_w1 = 0
    o_b1 = o_w1 + d1
    o_w2 = o_b1 + d1
    o_b2 = o_w2 + d1 * d2
    o_w3 = o_b2 + d2
    o_b3 = o_w3 + d2

    n_chunks = blk // SUB  # blk is always a multiple of SUB

    def kernel(params_ref, x_ref, o_ref):
        # params_ref : SMEM f32[2*d1 + d1*d2 + 2*d2 + 1]
        # x_ref/o_ref: VMEM f32[blk, 128] tiles
        #
        # Hoisted once per grid step: every parameter scalar is read exactly once
        # from SMEM (NOT re-read / re-broadcast per sub-chunk).
        w1 = [params_ref[o_w1 + j] for j in range(d1)]
        b1 = [params_ref[o_b1 + j] for j in range(d1)]
        w2 = [[params_ref[o_w2 + j * d2 + k] for k in range(d2)] for j in range(d1)]
        b2 = [params_ref[o_b2 + k] for k in range(d2)]
        w3 = [params_ref[o_w3 + k] for k in range(d2)]
        b3 = params_ref[o_b3]

        def chunk(r):
            # One 8-row sub-tile: each value below is a single (SUB, 128) f32 vreg,
            # so x + y1_j + the d2 accumulators + temps stay register-resident.
            if isinstance(r, int):
                start = r
            else:
                start = pl.multiple_of(r, SUB)
            x = x_ref[pl.ds(start, SUB), :]

            # Layer 1 fused into the layer-2 accumulation (y1_j is transient).
            acc2 = [None] * d2
            for j in range(d1):
                y1_j = jnp.maximum(x * w1[j] + b1[j], 0.0)      # relu(x @ W1 + B1)[:, j]
                for k in range(d2):
                    t = y1_j * w2[j][k]
                    acc2[k] = t if acc2[k] is None else acc2[k] + t

            # Layer 2 relu + layer 3 contraction.
            out = None
            for k in range(d2):
                y2_k = jnp.maximum(acc2[k] + b2[k], 0.0)        # relu(y1 @ W2 + B2)[:, k]
                t = y2_k * w3[k]
                out = t if out is None else out + t

            o_ref[pl.ds(start, SUB), :] = jnp.maximum(out + b3, 0.0)

        if n_chunks <= 4:
            # Tiny block: fully static unroll (small trace, no loop overhead).
            for c in range(n_chunks):
                chunk(c * SUB)
        else:
            # Large block: rolled loop over sub-chunks (unrolled x UNROLL) keeps
            # compile time/code size bounded while giving the scheduler ILP.
            n_iter = n_chunks // UNROLL
            rem = n_chunks % UNROLL

            def body(i, carry):
                base = i * (SUB * UNROLL)
                for u in range(UNROLL):
                    chunk(base + u * SUB)
                return carry

            lax.fori_loop(0, n_iter, body, 0)
            for c in range(n_chunks - rem, n_chunks):           # static tail chunks
                chunk(c * SUB)

    return kernel


def flix_nn_forward(x, W1, B1, W2, B2, W3, B3, *, block_rows=BLOCK_ROWS):
    """Pallas implementation of flixNN.forward.

    x  : any shape (flattened to (-1, 1) like PyTorch .view(-1, 1))
    W1 : (1, d1), B1 : (d1,), W2 : (d1, d2), B2 : (d2,), W3 : (d2, 1), B3 : (1,)
    returns: (N, 1) float32 where N = x.size
    """
    d1 = W1.shape[1]
    d2 = W2.shape[1]

    x_flat = jnp.ravel(x).astype(jnp.float32)
    n = x_flat.shape[0]

    # Pad so the lane-dense (rows, 128) view has a whole number of 8-row sublane tiles.
    padded_len = _round_up(max(n, 1), LANE * SUB)
    if padded_len != n:
        x_flat = jnp.pad(x_flat, (0, padded_len - n))
    rows = padded_len // LANE
    x2d = x_flat.reshape(rows, LANE)

    # Block size: multiple of SUB, <= block_rows, and sized so the grid has ~4 blocks
    # when possible (keeps both v7x TensorCores busy via the "parallel" axis while
    # still amortizing the ~0.35us per-grid-step overhead).
    blk = min(block_rows, max(SUB, _round_up(pl.cdiv(rows, 4), SUB)), rows)
    num_blocks = pl.cdiv(rows, blk)

    params = jnp.concatenate([
        jnp.ravel(W1), jnp.ravel(B1),
        jnp.ravel(W2), jnp.ravel(B2),
        jnp.ravel(W3), jnp.ravel(B3),
    ]).astype(jnp.float32)                                      # (2*d1 + d1*d2 + 2*d2 + 1,)

    cost = pl.CostEstimate(
        flops=2 * rows * LANE * (d1 + d1 * d2 + d2),
        transcendentals=0,
        bytes_accessed=8 * rows * LANE + 4 * int(params.shape[0]),
    )

    out2d = pl.pallas_call(
        _make_kernel(d1, d2, blk),
        out_shape=jax.ShapeDtypeStruct((rows, LANE), jnp.float32),
        grid_spec=pltpu.PrefetchScalarGridSpec(
            num_scalar_prefetch=1,                               # params -> SMEM
            grid=(num_blocks,),
            in_specs=[pl.BlockSpec((blk, LANE), lambda i, p: (i, 0))],
            out_specs=pl.BlockSpec((blk, LANE), lambda i, p: (i, 0)),
        ),
        compiler_params=pltpu.CompilerParams(
            dimension_semantics=("parallel",),                   # rows axis shards over TCs
        ),
        cost_estimate=cost,
    )(params, x2d)

    out_flat = out2d.reshape(-1)
    if padded_len != n:
        out_flat = out_flat[:n]
    return out_flat.reshape(n, 1)


def _reference_forward(x, W1, B1, W2, B2, W3, B3):
    xf = jnp.ravel(x).astype(jnp.float32).reshape(-1, 1)
    y1 = jnp.maximum(xf @ W1 + B1, 0.0)
    y2 = jnp.maximum(y1 @ W2 + B2, 0.0)
    return jnp.maximum(y2 @ W3 + B3, 0.0)


if __name__ == "__main__":
    key = jax.random.PRNGKey(0)
    kx, kx2, k1, k2, k3, k4, k5, k6 = jax.random.split(key, 8)

    dim1, dim2 = 16, 16                                          # module defaults
    W1 = jax.random.normal(k1, (1, dim1), dtype=jnp.float32)
    B1 = jax.random.normal(k2, (dim1,), dtype=jnp.float32)
    W2 = jax.random.normal(k3, (dim1, dim2), dtype=jnp.float32)
    B2 = jax.random.normal(k4, (dim2,), dtype=jnp.float32)
    W3 = jax.random.normal(k5, (dim2, 1), dtype=jnp.float32)
    B3 = jax.random.normal(k6, (1,), dtype=jnp.float32)

    # Small input; .view(-1, 1) flattens to (2048, 1) -> 16 lane-dense rows, 2 grid blocks.
    x = jax.random.normal(kx, (2, 4, 16, 16), dtype=jnp.float32)
    out = jax.block_until_ready(flix_nn_forward(x, W1, B1, W2, B2, W3, B3))
    ref = _reference_forward(x, W1, B1, W2, B2, W3, B3)
    assert out.shape == (x.size, 1), out.shape
    assert jnp.allclose(out, ref, atol=1e-4, rtol=1e-4), "mismatch vs reference (small)"

    # Second check: ragged size exercising padding, partial last block and the
    # rolled fori_loop sub-chunk path.
    x_big = jax.random.normal(kx2, (40000,), dtype=jnp.float32)
    out_b = jax.block_until_ready(flix_nn_forward(x_big, W1, B1, W2, B2, W3, B3))
    ref_b = _reference_forward(x_big, W1, B1, W2, B2, W3, B3)
    assert out_b.shape == (x_big.size, 1), out_b.shape
    assert jnp.allclose(out_b, ref_b, atol=1e-4, rtol=1e-4), "mismatch vs reference (large)"

    print("KERNEL_OK")
</pallas_src>

<mosaic_0001>
module attributes {stable_mosaic.version = 11 : i64} {
  func.func @kernel(%arg0: i32, %arg1: memref<321xf32, #tpu.memory_space<smem>>, %arg2: memref<8x128xf32, #tpu.memory_space<vmem>>, %arg3: memref<8x128xf32, #tpu.memory_space<vmem>>) attributes {dimension_semantics = [#tpu.dimension_semantics<parallel>], iteration_bounds = array<i64: 2>, scalar_prefetch = 1 : i64, scratch_operands = 0 : i64, tpu.core_type = #tpu.core_type<tc>, window_params = [{transform_indices = @transform_0, window_bounds = array<i64: 8, 128>}, {transform_indices = @transform_1, window_bounds = array<i64: 8, 128>}]} {
    %c0 = arith.constant 0 : index
    %0 = memref.load %arg1[%c0] : memref<321xf32, #tpu.memory_space<smem>>
    %c1 = arith.constant 1 : index
    %1 = memref.load %arg1[%c1] : memref<321xf32, #tpu.memory_space<smem>>
    %c2 = arith.constant 2 : index
    %2 = memref.load %arg1[%c2] : memref<321xf32, #tpu.memory_space<smem>>
    %c3 = arith.constant 3 : index
    %3 = memref.load %arg1[%c3] : memref<321xf32, #tpu.memory_space<smem>>
    %c4 = arith.constant 4 : index
    %4 = memref.load %arg1[%c4] : memref<321xf32, #tpu.memory_space<smem>>
    %c5 = arith.constant 5 : index
    %5 = memref.load %arg1[%c5] : memref<321xf32, #tpu.memory_space<smem>>
    %c6 = arith.constant 6 : index
    %6 = memref.load %arg1[%c6] : memref<321xf32, #tpu.memory_space<smem>>
    %c7 = arith.constant 7 : index
    %7 = memref.load %arg1[%c7] : memref<321xf32, #tpu.memory_space<smem>>
    %c8 = arith.constant 8 : index
    %8 = memref.load %arg1[%c8] : memref<321xf32, #tpu.memory_space<smem>>
    %c9 = arith.constant 9 : index
    %9 = memref.load %arg1[%c9] : memref<321xf32, #tpu.memory_space<smem>>
    %c10 = arith.constant 10 : index
    %10 = memref.load %arg1[%c10] : memref<321xf32, #tpu.memory_space<smem>>
    %c11 = arith.constant 11 : index
    %11 = memref.load %arg1[%c11] : memref<321xf32, #tpu.memory_space<smem>>
    %c12 = arith.constant 12 : index
    %12 = memref.load %arg1[%c12] : memref<321xf32, #tpu.memory_space<smem>>
    %c13 = arith.constant 13 : index
    %13 = memref.load %arg1[%c13] : memref<321xf32, #tpu.memory_space<smem>>
    %c14 = arith.constant 14 : index
    %14 = memref.load %arg1[%c14] : memref<321xf32, #tpu.memory_space<smem>>
    %c15 = arith.constant 15 : index
    %15 = memref.load %arg1[%c15] : memref<321xf32, #tpu.memory_space<smem>>
    %c16 = arith.constant 16 : index
    %16 = memref.load %arg1[%c16] : memref<321xf32, #tpu.memory_space<smem>>
    %c17 = arith.constant 17 : index
    %17 = memref.load %arg1[%c17] : memref<321xf32, #tpu.memory_space<smem>>
    %c18 = arith.constant 18 : index
    %18 = memref.load %arg1[%c18] : memref<321xf32, #tpu.memory_space<smem>>
    %c19 = arith.constant 19 : index
    %19 = memref.load %arg1[%c19] : memref<321xf32, #tpu.memory_space<smem>>
    %c20 = arith.constant 20 : index
    %20 = memref.load %arg1[%c20] : memref<321xf32, #tpu.memory_space<smem>>
    %c21 = arith.constant 21 : index
    %21 = memref.load %arg1[%c21] : memref<321xf32, #tpu.memory_space<smem>>
    %c22 = arith.constant 22 : index
    %22 = memref.load %arg1[%c22] : memref<321xf32, #tpu.memory_space<smem>>
    %c23 = arith.constant 23 : index
    %23 = memref.load %arg1[%c23] : memref<321xf32, #tpu.memory_space<smem>>
    %c24 = arith.constant 24 : index
    %24 = memref.load %arg1[%c24] : memref<321xf32, #tpu.memory_space<smem>>
    %c25 = arith.constant 25 : index
    %25 = memref.load %arg1[%c25] : memref<321xf32, #tpu.memory_space<smem>>
    %c26 = arith.constant 26 : index
    %26 = memref.load %arg1[%c26] : memref<321xf32, #tpu.memory_space<smem>>
    %c27 = arith.constant 27 : index
    %27 = memref.load %arg1[%c27] : memref<321xf32, #tpu.memory_space<smem>>
    %c28 = arith.constant 28 : index
    %28 = memref.load %arg1[%c28] : memref<321xf32, #tpu.memory_space<smem>>
    %c29 = arith.constant 29 : index
    %29 = memref.load %arg1[%c29] : memref<321xf32, #tpu.memory_space<smem>>
    %c30 = arith.constant 30 : index
    %30 = memref.load %arg1[%c30] : memref<321xf32, #tpu.memory_space<smem>>
    %c31 = arith.constant 31 : index
    %31 = memref.load %arg1[%c31] : memref<321xf32, #tpu.memory_space<smem>>
    %c32 = arith.constant 32 : index
    %32 = memref.load %arg1[%c32] : memref<321xf32, #tpu.memory_space<smem>>
    %c33 = arith.constant 33 : index
    %33 = memref.load %arg1[%c33] : memref<321xf32, #tpu.memory_space<smem>>
    %c34 = arith.constant 34 : index
    %34 = memref.load %arg1[%c34] : memref<321xf32, #tpu.memory_space<smem>>
    %c35 = arith.constant 35 : index
    %35 = memref.load %arg1[%c35] : memref<321xf32, #tpu.memory_space<smem>>
    %c36 = arith.constant 36 : index
    %36 = memref.load %arg1[%c36] : memref<321xf32, #tpu.memory_space<smem>>
    %c37 = arith.constant 37 : index
    %37 = memref.load %arg1[%c37] : memref<321xf32, #tpu.memory_space<smem>>
    %c38 = arith.constant 38 : index
    %38 = memref.load %arg1[%c38] : memref<321xf32, #tpu.memory_space<smem>>
    %c39 = arith.constant 39 : index
    %39 = memref.load %arg1[%c39] : memref<321xf32, #tpu.memory_space<smem>>
    %c40 = arith.constant 40 : index
    %40 = memref.load %arg1[%c40] : memref<321xf32, #tpu.memory_space<smem>>
    %c41 = arith.constant 41 : index
    %41 = memref.load %arg1[%c41] : memref<321xf32, #tpu.memory_space<smem>>
    %c42 = arith.constant 42 : index
    %42 = memref.load %arg1[%c42] : memref<321xf32, #tpu.memory_space<smem>>
    %c43 = arith.constant 43 : index
    %43 = memref.load %arg1[%c43] : memref<321xf32, #tpu.memory_space<smem>>
    %c44 = arith.constant 44 : index
    %44 = memref.load %arg1[%c44] : memref<321xf32, #tpu.memory_space<smem>>
    %c45 = arith.constant 45 : index
    %45 = memref.load %arg1[%c45] : memref<321xf32, #tpu.memory_space<smem>>
    %c46 = arith.constant 46 : index
    %46 = memref.load %arg1[%c46] : memref<321xf32, #tpu.memory_space<smem>>
    %c47 = arith.constant 47 : index
    %47 = memref.load %arg1[%c47] : memref<321xf32, #tpu.memory_space<smem>>
    %c48 = arith.constant 48 : index
    %48 = memref.load %arg1[%c48] : memref<321xf32, #tpu.memory_space<smem>>
    %c49 = arith.constant 49 : index
    %49 = memref.load %arg1[%c49] : memref<321xf32, #tpu.memory_space<smem>>
    %c50 = arith.constant 50 : index
    %50 = memref.load %arg1[%c50] : memref<321xf32, #tpu.memory_space<smem>>
    %c51 = arith.constant 51 : index
    %51 = memref.load %arg1[%c51] : memref<321xf32, #tpu.memory_space<smem>>
    %c52 = arith.constant 52 : index
    %52 = memref.load %arg1[%c52] : memref<321xf32, #tpu.memory_space<smem>>
    %c53 = arith.constant 53 : index
    %53 = memref.load %arg1[%c53] : memref<321xf32, #tpu.memory_space<smem>>
    %c54 = arith.constant 54 : index
    %54 = memref.load %arg1[%c54] : memref<321xf32, #tpu.memory_space<smem>>
    %c55 = arith.constant 55 : index
    %55 = memref.load %arg1[%c55] : memref<321xf32, #tpu.memory_space<smem>>
    %c56 = arith.constant 56 : index
    %56 = memref.load %arg1[%c56] : memref<321xf32, #tpu.memory_space<smem>>
    %c57 = arith.constant 57 : index
    %57 = memref.load %arg1[%c57] : memref<321xf32, #tpu.memory_space<smem>>
    %c58 = arith.constant 58 : index
    %58 = memref.load %arg1[%c58] : memref<321xf32, #tpu.memory_space<smem>>
    %c59 = arith.constant 59 : index
    %59 = memref.load %arg1[%c59] : memref<321xf32, #tpu.memory_space<smem>>
    %c60 = arith.constant 60 : index
    %60 = memref.load %arg1[%c60] : memref<321xf32, #tpu.memory_space<smem>>
    %c61 = arith.constant 61 : index
    %61 = memref.load %arg1[%c61] : memref<321xf32, #tpu.memory_space<smem>>
    %c62 = arith.constant 62 : index
    %62 = memref.load %arg1[%c62] : memref<321xf32, #tpu.memory_space<smem>>
    %c63 = arith.constant 63 : index
    %63 = memref.load %arg1[%c63] : memref<321xf32, #tpu.memory_space<smem>>
    %c64 = arith.constant 64 : index
    %64 = memref.load %arg1[%c64] : memref<321xf32, #tpu.memory_space<smem>>
    %c65 = arith.constant 65 : index
    %65 = memref.load %arg1[%c65] : memref<321xf32, #tpu.memory_space<smem>>
    %c66 = arith.constant 66 : index
    %66 = memref.load %arg1[%c66] : memref<321xf32, #tpu.memory_space<smem>>
    %c67 = arith.constant 67 : index
    %67 = memref.load %arg1[%c67] : memref<321xf32, #tpu.memory_space<smem>>
    %c68 = arith.constant 68 : index
    %68 = memref.load %arg1[%c68] : memref<321xf32, #tpu.memory_space<smem>>
    %c69 = arith.constant 69 : index
    %69 = memref.load %arg1[%c69] : memref<321xf32, #tpu.memory_space<smem>>
    %c70 = arith.constant 70 : index
    %70 = memref.load %arg1[%c70] : memref<321xf32, #tpu.memory_space<smem>>
    %c71 = arith.constant 71 : index
    %71 = memref.load %arg1[%c71] : memref<321xf32, #tpu.memory_space<smem>>
    %c72 = arith.constant 72 : index
    %72 = memref.load %arg1[%c72] : memref<321xf32, #tpu.memory_space<smem>>
    %c73 = arith.constant 73 : index
    %73 = memref.load %arg1[%c73] : memref<321xf32, #tpu.memory_space<smem>>
    %c74 = arith.constant 74 : index
    %74 = memref.load %arg1[%c74] : memref<321xf32, #tpu.memory_space<smem>>
    %c75 = arith.constant 75 : index
    %75 = memref.load %arg1[%c75] : memref<321xf32, #tpu.memory_space<smem>>
    %c76 = arith.constant 76 : index
    %76 = memref.load %arg1[%c76] : memref<321xf32, #tpu.memory_space<smem>>
    %c77 = arith.constant 77 : index
    %77 = memref.load %arg1[%c77] : memref<321xf32, #tpu.memory_space<smem>>
    %c78 = arith.constant 78 : index
    %78 = memref.load %arg1[%c78] : memref<321xf32, #tpu.memory_space<smem>>
    %c79 = arith.constant 79 : index
    %79 = memref.load %arg1[%c79] : memref<321xf32, #tpu.memory_space<smem>>
    %c80 = arith.constant 80 : index
    %80 = memref.load %arg1[%c80] : memref<321xf32, #tpu.memory_space<smem>>
    %c81 = arith.constant 81 : index
    %81 = memref.load %arg1[%c81] : memref<321xf32, #tpu.memory_space<smem>>
    %c82 = arith.constant 82 : index
    %82 = memref.load %arg1[%c82] : memref<321xf32, #tpu.memory_space<smem>>
    %c83 = arith.constant 83 : index
    %83 = memref.load %arg1[%c83] : memref<321xf32, #tpu.memory_space<smem>>
    %c84 = arith.constant 84 : index
    %84 = memref.load %arg1[%c84] : memref<321xf32, #tpu.memory_space<smem>>
    %c85 = arith.constant 85 : index
    %85 = memref.load %arg1[%c85] : memref<321xf32, #tpu.memory_space<smem>>
    %c86 = arith.constant 86 : index
    %86 = memref.load %arg1[%c86] : memref<321xf32, #tpu.memory_space<smem>>
    %c87 = arith.constant 87 : index
    %87 = memref.load %arg1[%c87] : memref<321xf32, #tpu.memory_space<smem>>
    %c88 = arith.constant 88 : index
    %88 = memref.load %arg1[%c88] : memref<321xf32, #tpu.memory_space<smem>>
    %c89 = arith.constant 89 : index
    %89 = memref.load %arg1[%c89] : memref<321xf32, #tpu.memory_space<smem>>
    %c90 = arith.constant 90 : index
    %90 = memref.load %arg1[%c90] : memref<321xf32, #tpu.memory_space<smem>>
    %c91 = arith.constant 91 : index
    %91 = memref.load %arg1[%c91] : memref<321xf32, #tpu.memory_space<smem>>
    %c92 = arith.constant 92 : index
    %92 = memref.load %arg1[%c92] : memref<321xf32, #tpu.memory_space<smem>>
    %c93 = arith.constant 93 : index
    %93 = memref.load %arg1[%c93] : memref<321xf32, #tpu.memory_space<smem>>
    %c94 = arith.constant 94 : index
    %94 = memref.load %arg1[%c94] : memref<321xf32, #tpu.memory_space<smem>>
    %c95 = arith.constant 95 : index
    %95 = memref.load %arg1[%c95] : memref<321xf32, #tpu.memory_space<smem>>
    %c96 = arith.constant 96 : index
    %96 = memref.load %arg1[%c96] : memref<321xf32, #tpu.memory_space<smem>>
    %c97 = arith.constant 97 : index
    %97 = memref.load %arg1[%c97] : memref<321xf32, #tpu.memory_space<smem>>
    %c98 = arith.constant 98 : index
    %98 = memref.load %arg1[%c98] : memref<321xf32, #tpu.memory_space<smem>>
    %c99 = arith.constant 99 : index
    %99 = memref.load %arg1[%c99] : memref<321xf32, #tpu.memory_space<smem>>
    %c100 = arith.constant 100 : index
    %100 = memref.load %arg1[%c100] : memref<321xf32, #tpu.memory_space<smem>>
    %c101 = arith.constant 101 : index
    %101 = memref.load %arg1[%c101] : memref<321xf32, #tpu.memory_space<smem>>
    %c102 = arith.constant 102 : index
    %102 = memref.load %arg1[%c102] : memref<321xf32, #tpu.memory_space<smem>>
    %c103 = arith.constant 103 : index
    %103 = memref.load %arg1[%c103] : memref<321xf32, #tpu.memory_space<smem>>
    %c104 = arith.constant 104 : index
    %104 = memref.load %arg1[%c104] : memref<321xf32, #tpu.memory_space<smem>>
    %c105 = arith.constant 105 : index
    %105 = memref.load %arg1[%c105] : memref<321xf32, #tpu.memory_space<smem>>
    %c106 = arith.constant 106 : index
    %106 = memref.load %arg1[%c106] : memref<321xf32, #tpu.memory_space<smem>>
    %c107 = arith.constant 107 : index
    %107 = memref.load %arg1[%c107] : memref<321xf32, #tpu.memory_space<smem>>
    %c108 = arith.constant 108 : index
    %108 = memref.load %arg1[%c108] : memref<321xf32, #tpu.memory_space<smem>>
    %c109 = arith.constant 109 : index
    %109 = memref.load %arg1[%c109] : memref<321xf32, #tpu.memory_space<smem>>
    %c110 = arith.constant 110 : index
    %110 = memref.load %arg1[%c110] : memref<321xf32, #tpu.memory_space<smem>>
    %c111 = arith.constant 111 : index
    %111 = memref.load %arg1[%c111] : memref<321xf32, #tpu.memory_space<smem>>
    %c112 = arith.constant 112 : index
    %112 = memref.load %arg1[%c112] : memref<321xf32, #tpu.memory_space<smem>>
    %c113 = arith.constant 113 : index
    %113 = memref.load %arg1[%c113] : memref<321xf32, #tpu.memory_space<smem>>
    %c114 = arith.constant 114 : index
    %114 = memref.load %arg1[%c114] : memref<321xf32, #tpu.memory_space<smem>>
    %c115 = arith.constant 115 : index
    %115 = memref.load %arg1[%c115] : memref<321xf32, #tpu.memory_space<smem>>
    %c116 = arith.constant 116 : index
    %116 = memref.load %arg1[%c116] : memref<321xf32, #tpu.memory_space<smem>>
    %c117 = arith.constant 117 : index
    %117 = memref.load %arg1[%c117] : memref<321xf32, #tpu.memory_space<smem>>
    %c118 = arith.constant 118 : index
    %118 = memref.load %arg1[%c118] : memref<321xf32, #tpu.memory_space<smem>>
    %c119 = arith.constant 119 : index
    %119 = memref.load %arg1[%c119] : memref<321xf32, #tpu.memory_space<smem>>
    %c120 = arith.constant 120 : index
    %120 = memref.load %arg1[%c120] : memref<321xf32, #tpu.memory_space<smem>>
    %c121 = arith.constant 121 : index
    %121 = memref.load %arg1[%c121] : memref<321xf32, #tpu.memory_space<smem>>
    %c122 = arith.constant 122 : index
    %122 = memref.load %arg1[%c122] : memref<321xf32, #tpu.memory_space<smem>>
    %c123 = arith.constant 123 : index
    %123 = memref.load %arg1[%c123] : memref<321xf32, #tpu.memory_space<smem>>
    %c124 = arith.constant 124 : index
    %124 = memref.load %arg1[%c124] : memref<321xf32, #tpu.memory_space<smem>>
    %c125 = arith.constant 125 : index
    %125 = memref.load %arg1[%c125] : memref<321xf32, #tpu.memory_space<smem>>
    %c126 = arith.constant 126 : index
    %126 = memref.load %arg1[%c126] : memref<321xf32, #tpu.memory_space<smem>>
    %c127 = arith.constant 127 : index
    %127 = memref.load %arg1[%c127] : memref<321xf32, #tpu.memory_space<smem>>
    %c128 = arith.constant 128 : index
    %128 = memref.load %arg1[%c128] : memref<321xf32, #tpu.memory_space<smem>>
    %c129 = arith.constant 129 : index
    %129 = memref.load %arg1[%c129] : memref<321xf32, #tpu.memory_space<smem>>
    %c130 = arith.constant 130 : index
    %130 = memref.load %arg1[%c130] : memref<321xf32, #tpu.memory_space<smem>>
    %c131 = arith.constant 131 : index
    %131 = memref.load %arg1[%c131] : memref<321xf32, #tpu.memory_space<smem>>
    %c132 = arith.constant 132 : index
    %132 = memref.load %arg1[%c132] : memref<321xf32, #tpu.memory_space<smem>>
    %c133 = arith.constant 133 : index
    %133 = memref.load %arg1[%c133] : memref<321xf32, #tpu.memory_space<smem>>
    %c134 = arith.constant 134 : index
    %134 = memref.load %arg1[%c134] : memref<321xf32, #tpu.memory_space<smem>>
    %c135 = arith.constant 135 : index
    %135 = memref.load %arg1[%c135] : memref<321xf32, #tpu.memory_space<smem>>
    %c136 = arith.constant 136 : index
    %136 = memref.load %arg1[%c136] : memref<321xf32, #tpu.memory_space<smem>>
    %c137 = arith.constant 137 : index
    %137 = memref.load %arg1[%c137] : memref<321xf32, #tpu.memory_space<smem>>
    %c138 = arith.constant 138 : index
    %138 = memref.load %arg1[%c138] : memref<321xf32, #tpu.memory_space<smem>>
    %c139 = arith.constant 139 : index
    %139 = memref.load %arg1[%c139] : memref<321xf32, #tpu.memory_space<smem>>
    %c140 = arith.constant 140 : index
    %140 = memref.load %arg1[%c140] : memref<321xf32, #tpu.memory_space<smem>>
    %c141 = arith.constant 141 : index
    %141 = memref.load %arg1[%c141] : memref<321xf32, #tpu.memory_space<smem>>
    %c142 = arith.constant 142 : index
    %142 = memref.load %arg1[%c142] : memref<321xf32, #tpu.memory_space<smem>>
    %c143 = arith.constant 143 : index
    %143 = memref.load %arg1[%c143] : memref<321xf32, #tpu.memory_space<smem>>
    %c144 = arith.constant 144 : index
    %144 = memref.load %arg1[%c144] : memref<321xf32, #tpu.memory_space<smem>>
    %c145 = arith.constant 145 : index
    %145 = memref.load %arg1[%c145] : memref<321xf32, #tpu.memory_space<smem>>
    %c146 = arith.constant 146 : index
    %146 = memref.load %arg1[%c146] : memref<321xf32, #tpu.memory_space<smem>>
    %c147 = arith.constant 147 : index
    %147 = memref.load %arg1[%c147] : memref<321xf32, #tpu.memory_space<smem>>
    %c148 = arith.constant 148 : index
    %148 = memref.load %arg1[%c148] : memref<321xf32, #tpu.memory_space<smem>>
    %c149 = arith.constant 149 : index
    %149 = memref.load %arg1[%c149] : memref<321xf32, #tpu.memory_space<smem>>
    %c150 = arith.constant 150 : index
    %150 = memref.load %arg1[%c150] : memref<321xf32, #tpu.memory_space<smem>>
    %c151 = arith.constant 151 : index
    %151 = memref.load %arg1[%c151] : memref<321xf32, #tpu.memory_space<smem>>
    %c152 = arith.constant 152 : index
    %152 = memref.load %arg1[%c152] : memref<321xf32, #tpu.memory_space<smem>>
    %c153 = arith.constant 153 : index
    %153 = memref.load %arg1[%c153] : memref<321xf32, #tpu.memory_space<smem>>
    %c154 = arith.constant 154 : index
    %154 = memref.load %arg1[%c154] : memref<321xf32, #tpu.memory_space<smem>>
    %c155 = arith.constant 155 : index
    %155 = memref.load %arg1[%c155] : memref<321xf32, #tpu.memory_space<smem>>
    %c156 = arith.constant 156 : index
    %156 = memref.load %arg1[%c156] : memref<321xf32, #tpu.memory_space<smem>>
    %c157 = arith.constant 157 : index
    %157 = memref.load %arg1[%c157] : memref<321xf32, #tpu.memory_space<smem>>
    %c158 = arith.constant 158 : index
    %158 = memref.load %arg1[%c158] : memref<321xf32, #tpu.memory_space<smem>>
    %c159 = arith.constant 159 : index
    %159 = memref.load %arg1[%c159] : memref<321xf32, #tpu.memory_space<smem>>
    %c160 = arith.constant 160 : index
    %160 = memref.load %arg1[%c160] : memref<321xf32, #tpu.memory_space<smem>>
    %c161 = arith.constant 161 : index
    %161 = memref.load %arg1[%c161] : memref<321xf32, #tpu.memory_space<smem>>
    %c162 = arith.constant 162 : index
    %162 = memref.load %arg1[%c162] : memref<321xf32, #tpu.memory_space<smem>>
    %c163 = arith.constant 163 : index
    %163 = memref.load %arg1[%c163] : memref<321xf32, #tpu.memory_space<smem>>
    %c164 = arith.constant 164 : index
    %164 = memref.load %arg1[%c164] : memref<321xf32, #tpu.memory_space<smem>>
    %c165 = arith.constant 165 : index
    %165 = memref.load %arg1[%c165] : memref<321xf32, #tpu.memory_space<smem>>
    %c166 = arith.constant 166 : index
    %166 = memref.load %arg1[%c166] : memref<321xf32, #tpu.memory_space<smem>>
    %c167 = arith.constant 167 : index
    %167 = memref.load %arg1[%c167] : memref<321xf32, #tpu.memory_space<smem>>
    %c168 = arith.constant 168 : index
    %168 = memref.load %arg1[%c168] : memref<321xf32, #tpu.memory_space<smem>>
    %c169 = arith.constant 169 : index
    %169 = memref.load %arg1[%c169] : memref<321xf32, #tpu.memory_space<smem>>
    %c170 = arith.constant 170 : index
    %170 = memref.load %arg1[%c170] : memref<321xf32, #tpu.memory_space<smem>>
    %c171 = arith.constant 171 : index
    %171 = memref.load %arg1[%c171] : memref<321xf32, #tpu.memory_space<smem>>
    %c172 = arith.constant 172 : index
    %172 = memref.load %arg1[%c172] : memref<321xf32, #tpu.memory_space<smem>>
    %c173 = arith.constant 173 : index
    %173 = memref.load %arg1[%c173] : memref<321xf32, #tpu.memory_space<smem>>
    %c174 = arith.constant 174 : index
    %174 = memref.load %arg1[%c174] : memref<321xf32, #tpu.memory_space<smem>>
    %c175 = arith.constant 175 : index
    %175 = memref.load %arg1[%c175] : memref<321xf32, #tpu.memory_space<smem>>
    %c176 = arith.constant 176 : index
    %176 = memref.load %arg1[%c176] : memref<321xf32, #tpu.memory_space<smem>>
    %c177 = arith.constant 177 : index
    %177 = memref.load %arg1[%c177] : memref<321xf32, #tpu.memory_space<smem>>
    %c178 = arith.constant 178 : index
    %178 = memref.load %arg1[%c178] : memref<321xf32, #tpu.memory_space<smem>>
    %c179 = arith.constant 179 : index
    %179 = memref.load %arg1[%c179] : memref<321xf32, #tpu.memory_space<smem>>
    %c180 = arith.constant 180 : index
    %180 = memref.load %arg1[%c180] : memref<321xf32, #tpu.memory_space<smem>>
    %c181 = arith.constant 181 : index
    %181 = memref.load %arg1[%c181] : memref<321xf32, #tpu.memory_space<smem>>
    %c182 = arith.constant 182 : index
    %182 = memref.load %arg1[%c182] : memref<321xf32, #tpu.memory_space<smem>>
    %c183 = arith.constant 183 : index
    %183 = memref.load %arg1[%c183] : memref<321xf32, #tpu.memory_space<smem>>
    %c184 = arith.constant 184 : index
    %184 = memref.load %arg1[%c184] : memref<321xf32, #tpu.memory_space<smem>>
    %c185 = arith.constant 185 : index
    %185 = memref.load %arg1[%c185] : memref<321xf32, #tpu.memory_space<smem>>
    %c186 = arith.constant 186 : index
    %186 = memref.load %arg1[%c186] : memref<321xf32, #tpu.memory_space<smem>>
    %c187 = arith.constant 187 : index
    %187 = memref.load %arg1[%c187] : memref<321xf32, #tpu.memory_space<smem>>
    %c188 = arith.constant 188 : index
    %188 = memref.load %arg1[%c188] : memref<321xf32, #tpu.memory_space<smem>>
    %c189 = arith.constant 189 : index
    %189 = memref.load %arg1[%c189] : memref<321xf32, #tpu.memory_space<smem>>
    %c190 = arith.constant 190 : index
    %190 = memref.load %arg1[%c190] : memref<321xf32, #tpu.memory_space<smem>>
    %c191 = arith.constant 191 : index
    %191 = memref.load %arg1[%c191] : memref<321xf32, #tpu.memory_space<smem>>
    %c192 = arith.constant 192 : index
    %192 = memref.load %arg1[%c192] : memref<321xf32, #tpu.memory_space<smem>>
    %c193 = arith.constant 193 : index
    %193 = memref.load %arg1[%c193] : memref<321xf32, #tpu.memory_space<smem>>
    %c194 = arith.constant 194 : index
    %194 = memref.load %arg1[%c194] : memref<321xf32, #tpu.memory_space<smem>>
    %c195 = arith.constant 195 : index
    %195 = memref.load %arg1[%c195] : memref<321xf32, #tpu.memory_space<smem>>
    %c196 = arith.constant 196 : index
    %196 = memref.load %arg1[%c196] : memref<321xf32, #tpu.memory_space<smem>>
    %c197 = arith.constant 197 : index
    %197 = memref.load %arg1[%c197] : memref<321xf32, #tpu.memory_space<smem>>
    %c198 = arith.constant 198 : index
    %198 = memref.load %arg1[%c198] : memref<321xf32, #tpu.memory_space<smem>>
    %c199 = arith.constant 199 : index
    %199 = memref.load %arg1[%c199] : memref<321xf32, #tpu.memory_space<smem>>
    %c200 = arith.constant 200 : index
    %200 = memref.load %arg1[%c200] : memref<321xf32, #tpu.memory_space<smem>>
    %c201 = arith.constant 201 : index
    %201 = memref.load %arg1[%c201] : memref<321xf32, #tpu.memory_space<smem>>
    %c202 = arith.constant 202 : index
    %202 = memref.load %arg1[%c202] : memref<321xf32, #tpu.memory_space<smem>>
    %c203 = arith.constant 203 : index
    %203 = memref.load %arg1[%c203] : memref<321xf32, #tpu.memory_space<smem>>
    %c204 = arith.constant 204 : index
    %204 = memref.load %arg1[%c204] : memref<321xf32, #tpu.memory_space<smem>>
    %c205 = arith.constant 205 : index
    %205 = memref.load %arg1[%c205] : memref<321xf32, #tpu.memory_space<smem>>
    %c206 = arith.constant 206 : index
    %206 = memref.load %arg1[%c206] : memref<321xf32, #tpu.memory_space<smem>>
    %c207 = arith.constant 207 : index
    %207 = memref.load %arg1[%c207] : memref<321xf32, #tpu.memory_space<smem>>
    %c208 = arith.constant 208 : index
    %208 = memref.load %arg1[%c208] : memref<321xf32, #tpu.memory_space<smem>>
    %c209 = arith.constant 209 : index
    %209 = memref.load %arg1[%c209] : memref<321xf32, #tpu.memory_space<smem>>
    %c210 = arith.constant 210 : index
    %210 = memref.load %arg1[%c210] : memref<321xf32, #tpu.memory_space<smem>>
    %c211 = arith.constant 211 : index
    %211 = memref.load %arg1[%c211] : memref<321xf32, #tpu.memory_space<smem>>
    %c212 = arith.constant 212 : index
    %212 = memref.load %arg1[%c212] : memref<321xf32, #tpu.memory_space<smem>>
    %c213 = arith.constant 213 : index
    %213 = memref.load %arg1[%c213] : memref<321xf32, #tpu.memory_space<smem>>
    %c214 = arith.constant 214 : index
    %214 = memref.load %arg1[%c214] : memref<321xf32, #tpu.memory_space<smem>>
    %c215 = arith.constant 215 : index
    %215 = memref.load %arg1[%c215] : memref<321xf32, #tpu.memory_space<smem>>
    %c216 = arith.constant 216 : index
    %216 = memref.load %arg1[%c216] : memref<321xf32, #tpu.memory_space<smem>>
    %c217 = arith.constant 217 : index
    %217 = memref.load %arg1[%c217] : memref<321xf32, #tpu.memory_space<smem>>
    %c218 = arith.constant 218 : index
    %218 = memref.load %arg1[%c218] : memref<321xf32, #tpu.memory_space<smem>>
    %c219 = arith.constant 219 : index
    %219 = memref.load %arg1[%c219] : memref<321xf32, #tpu.memory_space<smem>>
    %c220 = arith.constant 220 : index
    %220 = memref.load %arg1[%c220] : memref<321xf32, #tpu.memory_space<smem>>
    %c221 = arith.constant 221 : index
    %221 = memref.load %arg1[%c221] : memref<321xf32, #tpu.memory_space<smem>>
    %c222 = arith.constant 222 : index
    %222 = memref.load %arg1[%c222] : memref<321xf32, #tpu.memory_space<smem>>
    %c223 = arith.constant 223 : index
    %223 = memref.load %arg1[%c223] : memref<321xf32, #tpu.memory_space<smem>>
    %c224 = arith.constant 224 : index
    %224 = memref.load %arg1[%c224] : memref<321xf32, #tpu.memory_space<smem>>
    %c225 = arith.constant 225 : index
    %225 = memref.load %arg1[%c225] : memref<321xf32, #tpu.memory_space<smem>>
    %c226 = arith.constant 226 : index
    %226 = memref.load %arg1[%c226] : memref<321xf32, #tpu.memory_space<smem>>
    %c227 = arith.constant 227 : index
    %227 = memref.load %arg1[%c227] : memref<321xf32, #tpu.memory_space<smem>>
    %c228 = arith.constant 228 : index
    %228 = memref.load %arg1[%c228] : memref<321xf32, #tpu.memory_space<smem>>
    %c229 = arith.constant 229 : index
    %229 = memref.load %arg1[%c229] : memref<321xf32, #tpu.memory_space<smem>>
    %c230 = arith.constant 230 : index
    %230 = memref.load %arg1[%c230] : memref<321xf32, #tpu.memory_space<smem>>
    %c231 = arith.constant 231 : index
    %231 = memref.load %arg1[%c231] : memref<321xf32, #tpu.memory_space<smem>>
    %c232 = arith.constant 232 : index
    %232 = memref.load %arg1[%c232] : memref<321xf32, #tpu.memory_space<smem>>
    %c233 = arith.constant 233 : index
    %233 = memref.load %arg1[%c233] : memref<321xf32, #tpu.memory_space<smem>>
    %c234 = arith.constant 234 : index
    %234 = memref.load %arg1[%c234] : memref<321xf32, #tpu.memory_space<smem>>
    %c235 = arith.constant 235 : index
    %235 = memref.load %arg1[%c235] : memref<321xf32, #tpu.memory_space<smem>>
    %c236 = arith.constant 236 : index
    %236 = memref.load %arg1[%c236] : memref<321xf32, #tpu.memory_space<smem>>
    %c237 = arith.constant 237 : index
    %237 = memref.load %arg1[%c237] : memref<321xf32, #tpu.memory_space<smem>>
    %c238 = arith.constant 238 : index
    %238 = memref.load %arg1[%c238] : memref<321xf32, #tpu.memory_space<smem>>
    %c239 = arith.constant 239 : index
    %239 = memref.load %arg1[%c239] : memref<321xf32, #tpu.memory_space<smem>>
    %c240 = arith.constant 240 : index
    %240 = memref.load %arg1[%c240] : memref<321xf32, #tpu.memory_space<smem>>
    %c241 = arith.constant 241 : index
    %241 = memref.load %arg1[%c241] : memref<321xf32, #tpu.memory_space<smem>>
    %c242 = arith.constant 242 : index
    %242 = memref.load %arg1[%c242] : memref<321xf32, #tpu.memory_space<smem>>
    %c243 = arith.constant 243 : index
    %243 = memref.load %arg1[%c243] : memref<321xf32, #tpu.memory_space<smem>>
    %c244 = arith.constant 244 : index
    %244 = memref.load %arg1[%c244] : memref<321xf32, #tpu.memory_space<smem>>
    %c245 = arith.constant 245 : index
    %245 = memref.load %arg1[%c245] : memref<321xf32, #tpu.memory_space<smem>>
    %c246 = arith.constant 246 : index
    %246 = memref.load %arg1[%c246] : memref<321xf32, #tpu.memory_space<smem>>
    %c247 = arith.constant 247 : index
    %247 = memref.load %arg1[%c247] : memref<321xf32, #tpu.memory_space<smem>>
    %c248 = arith.constant 248 : index
    %248 = memref.load %arg1[%c248] : memref<321xf32, #tpu.memory_space<smem>>
    %c249 = arith.constant 249 : index
    %249 = memref.load %arg1[%c249] : memref<321xf32, #tpu.memory_space<smem>>
    %c250 = arith.constant 250 : index
    %250 = memref.load %arg1[%c250] : memref<321xf32, #tpu.memory_space<smem>>
    %c251 = arith.constant 251 : index
    %251 = memref.load %arg1[%c251] : memref<321xf32, #tpu.memory_space<smem>>
    %c252 = arith.constant 252 : index
    %252 = memref.load %arg1[%c252] : memref<321xf32, #tpu.memory_space<smem>>
    %c253 = arith.constant 253 : index
    %253 = memref.load %arg1[%c253] : memref<321xf32, #tpu.memory_space<smem>>
    %c254 = arith.constant 254 : index
    %254 = memref.load %arg1[%c254] : memref<321xf32, #tpu.memory_space<smem>>
    %c255 = arith.constant 255 : index
    %255 = memref.load %arg1[%c255] : memref<321xf32, #tpu.memory_space<smem>>
    %c256 = arith.constant 256 : index
    %256 = memref.load %arg1[%c256] : memref<321xf32, #tpu.memory_space<smem>>
    %c257 = arith.constant 257 : index
    %257 = memref.load %arg1[%c257] : memref<321xf32, #tpu.memory_space<smem>>
    %c258 = arith.constant 258 : index
    %258 = memref.load %arg1[%c258] : memref<321xf32, #tpu.memory_space<smem>>
    %c259 = arith.constant 259 : index
    %259 = memref.load %arg1[%c259] : memref<321xf32, #tpu.memory_space<smem>>
    %c260 = arith.constant 260 : index
    %260 = memref.load %arg1[%c260] : memref<321xf32, #tpu.memory_space<smem>>
    %c261 = arith.constant 261 : index
    %261 = memref.load %arg1[%c261] : memref<321xf32, #tpu.memory_space<smem>>
    %c262 = arith.constant 262 : index
    %262 = memref.load %arg1[%c262] : memref<321xf32, #tpu.memory_space<smem>>
    %c263 = arith.constant 263 : index
    %263 = memref.load %arg1[%c263] : memref<321xf32, #tpu.memory_space<smem>>
    %c264 = arith.constant 264 : index
    %264 = memref.load %arg1[%c264] : memref<321xf32, #tpu.memory_space<smem>>
    %c265 = arith.constant 265 : index
    %265 = memref.load %arg1[%c265] : memref<321xf32, #tpu.memory_space<smem>>
    %c266 = arith.constant 266 : index
    %266 = memref.load %arg1[%c266] : memref<321xf32, #tpu.memory_space<smem>>
    %c267 = arith.constant 267 : index
    %267 = memref.load %arg1[%c267] : memref<321xf32, #tpu.memory_space<smem>>
    %c268 = arith.constant 268 : index
    %268 = memref.load %arg1[%c268] : memref<321xf32, #tpu.memory_space<smem>>
    %c269 = arith.constant 269 : index
    %269 = memref.load %arg1[%c269] : memref<321xf32, #tpu.memory_space<smem>>
    %c270 = arith.constant 270 : index
    %270 = memref.load %arg1[%c270] : memref<321xf32, #tpu.memory_space<smem>>
    %c271 = arith.constant 271 : index
    %271 = memref.load %arg1[%c271] : memref<321xf32, #tpu.memory_space<smem>>
    %c272 = arith.constant 272 : index
    %272 = memref.load %arg1[%c272] : memref<321xf32, #tpu.memory_space<smem>>
    %c273 = arith.constant 273 : index
    %273 = memref.load %arg1[%c273] : memref<321xf32, #tpu.memory_space<smem>>
    %c274 = arith.constant 274 : index
    %274 = memref.load %arg1[%c274] : memref<321xf32, #tpu.memory_space<smem>>
    %c275 = arith.constant 275 : index
    %275 = memref.load %arg1[%c275] : memref<321xf32, #tpu.memory_space<smem>>
    %c276 = arith.constant 276 : index
    %276 = memref.load %arg1[%c276] : memref<321xf32, #tpu.memory_space<smem>>
    %c277 = arith.constant 277 : index
    %277 = memref.load %arg1[%c277] : memref<321xf32, #tpu.memory_space<smem>>
    %c278 = arith.constant 278 : index
    %278 = memref.load %arg1[%c278] : memref<321xf32, #tpu.memory_space<smem>>
    %c279 = arith.constant 279 : index
    %279 = memref.load %arg1[%c279] : memref<321xf32, #tpu.memory_space<smem>>
    %c280 = arith.constant 280 : index
    %280 = memref.load %arg1[%c280] : memref<321xf32, #tpu.memory_space<smem>>
    %c281 = arith.constant 281 : index
    %281 = memref.load %arg1[%c281] : memref<321xf32, #tpu.memory_space<smem>>
    %c282 = arith.constant 282 : index
    %282 = memref.load %arg1[%c282] : memref<321xf32, #tpu.memory_space<smem>>
    %c283 = arith.constant 283 : index
    %283 = memref.load %arg1[%c283] : memref<321xf32, #tpu.memory_space<smem>>
    %c284 = arith.constant 284 : index
    %284 = memref.load %arg1[%c284] : memref<321xf32, #tpu.memory_space<smem>>
    %c285 = arith.constant 285 : index
    %285 = memref.load %arg1[%c285] : memref<321xf32, #tpu.memory_space<smem>>
    %c286 = arith.constant 286 : index
    %286 = memref.load %arg1[%c286] : memref<321xf32, #tpu.memory_space<smem>>
    %c287 = arith.constant 287 : index
    %287 = memref.load %arg1[%c287] : memref<321xf32, #tpu.memory_space<smem>>
    %c288 = arith.constant 288 : index
    %288 = memref.load %arg1[%c288] : memref<321xf32, #tpu.memory_space<smem>>
    %c289 = arith.constant 289 : index
    %289 = memref.load %arg1[%c289] : memref<321xf32, #tpu.memory_space<smem>>
    %c290 = arith.constant 290 : index
    %290 = memref.load %arg1[%c290] : memref<321xf32, #tpu.memory_space<smem>>
    %c291 = arith.constant 291 : index
    %291 = memref.load %arg1[%c291] : memref<321xf32, #tpu.memory_space<smem>>
    %c292 = arith.constant 292 : index
    %292 = memref.load %arg1[%c292] : memref<321xf32, #tpu.memory_space<smem>>
    %c293 = arith.constant 293 : index
    %293 = memref.load %arg1[%c293] : memref<321xf32, #tpu.memory_space<smem>>
    %c294 = arith.constant 294 : index
    %294 = memref.load %arg1[%c294] : memref<321xf32, #tpu.memory_space<smem>>
    %c295 = arith.constant 295 : index
    %295 = memref.load %arg1[%c295] : memref<321xf32, #tpu.memory_space<smem>>
    %c296 = arith.constant 296 : index
    %296 = memref.load %arg1[%c296] : memref<321xf32, #tpu.memory_space<smem>>
    %c297 = arith.constant 297 : index
    %297 = memref.load %arg1[%c297] : memref<321xf32, #tpu.memory_space<smem>>
    %c298 = arith.constant 298 : index
    %298 = memref.load %arg1[%c298] : memref<321xf32, #tpu.memory_space<smem>>
    %c299 = arith.constant 299 : index
    %299 = memref.load %arg1[%c299] : memref<321xf32, #tpu.memory_space<smem>>
    %c300 = arith.constant 300 : index
    %300 = memref.load %arg1[%c300] : memref<321xf32, #tpu.memory_space<smem>>
    %c301 = arith.constant 301 : index
    %301 = memref.load %arg1[%c301] : memref<321xf32, #tpu.memory_space<smem>>
    %c302 = arith.constant 302 : index
    %302 = memref.load %arg1[%c302] : memref<321xf32, #tpu.memory_space<smem>>
    %c303 = arith.constant 303 : index
    %303 = memref.load %arg1[%c303] : memref<321xf32, #tpu.memory_space<smem>>
    %c304 = arith.constant 304 : index
    %304 = memref.load %arg1[%c304] : memref<321xf32, #tpu.memory_space<smem>>
    %c305 = arith.constant 305 : index
    %305 = memref.load %arg1[%c305] : memref<321xf32, #tpu.memory_space<smem>>
    %c306 = arith.constant 306 : index
    %306 = memref.load %arg1[%c306] : memref<321xf32, #tpu.memory_space<smem>>
    %c307 = arith.constant 307 : index
    %307 = memref.load %arg1[%c307] : memref<321xf32, #tpu.memory_space<smem>>
    %c308 = arith.constant 308 : index
    %308 = memref.load %arg1[%c308] : memref<321xf32, #tpu.memory_space<smem>>
    %c309 = arith.constant 309 : index
    %309 = memref.load %arg1[%c309] : memref<321xf32, #tpu.memory_space<smem>>
    %c310 = arith.constant 310 : index
    %310 = memref.load %arg1[%c310] : memref<321xf32, #tpu.memory_space<smem>>
    %c311 = arith.constant 311 : index
    %311 = memref.load %arg1[%c311] : memref<321xf32, #tpu.memory_space<smem>>
    %c312 = arith.constant 312 : index
    %312 = memref.load %arg1[%c312] : memref<321xf32, #tpu.memory_space<smem>>
    %c313 = arith.constant 313 : index
    %313 = memref.load %arg1[%c313] : memref<321xf32, #tpu.memory_space<smem>>
    %c314 = arith.constant 314 : index
    %314 = memref.load %arg1[%c314] : memref<321xf32, #tpu.memory_space<smem>>
    %c315 = arith.constant 315 : index
    %315 = memref.load %arg1[%c315] : memref<321xf32, #tpu.memory_space<smem>>
    %c316 = arith.constant 316 : index
    %316 = memref.load %arg1[%c316] : memref<321xf32, #tpu.memory_space<smem>>
    %c317 = arith.constant 317 : index
    %317 = memref.load %arg1[%c317] : memref<321xf32, #tpu.memory_space<smem>>
    %c318 = arith.constant 318 : index
    %318 = memref.load %arg1[%c318] : memref<321xf32, #tpu.memory_space<smem>>
    %c319 = arith.constant 319 : index
    %319 = memref.load %arg1[%c319] : memref<321xf32, #tpu.memory_space<smem>>
    %c320 = arith.constant 320 : index
    %320 = memref.load %arg1[%c320] : memref<321xf32, #tpu.memory_space<smem>>
    %c0_0 = arith.constant 0 : index
    %c0_1 = arith.constant 0 : index
    %321 = vector.load %arg2[%c0_0, %c0_1] : memref<8x128xf32, #tpu.memory_space<vmem>>, vector<8x128xf32>
    %322 = vector.broadcast %0 : f32 to vector<8x128xf32>
    %323 = arith.mulf %321, %322 : vector<8x128xf32>
    %324 = vector.broadcast %16 : f32 to vector<8x128xf32>
    %325 = arith.addf %323, %324 : vector<8x128xf32>
    %cst = arith.constant 0.000000e+00 : f32
    %326 = vector.broadcast %cst : f32 to vector<8x128xf32>
    %327 = arith.maximumf %325, %326 : vector<8x128xf32>
    %328 = vector.broadcast %32 : f32 to vector<8x128xf32>
    %329 = arith.mulf %327, %328 : vector<8x128xf32>
    %330 = vector.broadcast %33 : f32 to vector<8x128xf32>
    %331 = arith.mulf %327, %330 : vector<8x128xf32>
    %332 = vector.broadcast %34 : f32 to vector<8x128xf32>
    %333 = arith.mulf %327, %332 : vector<8x128xf32>
    %334 = vector.broadcast %35 : f32 to vector<8x128xf32>
    %335 = arith.mulf %327, %334 : vector<8x128xf32>
    %336 = vector.broadcast %36 : f32 to vector<8x128xf32>
    %337 = arith.mulf %327, %336 : vector<8x128xf32>
    %338 = vector.broadcast %37 : f32 to vector<8x128xf32>
    %339 = arith.mulf %327, %338 : vector<8x128xf32>
    %340 = vector.broadcast %38 : f32 to vector<8x128xf32>
    %341 = arith.mulf %327, %340 : vector<8x128xf32>
    %342 = vector.broadcast %39 : f32 to vector<8x128xf32>
    %343 = arith.mulf %327, %342 : vector<8x128xf32>
    %344 = vector.broadcast %40 : f32 to vector<8x128xf32>
    %345 = arith.mulf %327, %344 : vector<8x128xf32>
    %346 = vector.broadcast %41 : f32 to vector<8x128xf32>
    %347 = arith.mulf %327, %346 : vector<8x128xf32>
    %348 = vector.broadcast %42 : f32 to vector<8x128xf32>
    %349 = arith.mulf %327, %348 : vector<8x128xf32>
    %350 = vector.broadcast %43 : f32 to vector<8x128xf32>
    %351 = arith.mulf %327, %350 : vector<8x128xf32>
    %352 = vector.broadcast %44 : f32 to vector<8x128xf32>
    %353 = arith.mulf %327, %352 : vector<8x128xf32>
    %354 = vector.broadcast %45 : f32 to vector<8x128xf32>
    %355 = arith.mulf %327, %354 : vector<8x128xf32>
    %356 = vector.broadcast %46 : f32 to vector<8x128xf32>
    %357 = arith.mulf %327, %356 : vector<8x128xf32>
    %358 = vector.broadcast %47 : f32 to vector<8x128xf32>
    %359 = arith.mulf %327, %358 : vector<8x128xf32>
    %360 = vector.broadcast %1 : f32 to vector<8x128xf32>
    %361 = arith.mulf %321, %360 : vector<8x128xf32>
    %362 = vector.broadcast %17 : f32 to vector<8x128xf32>
    %363 = arith.addf %361, %362 : vector<8x128xf32>
    %cst_2 = arith.constant 0.000000e+00 : f32
    %364 = vector.broadcast %cst_2 : f32 to vector<8x128xf32>
    %365 = arith.maximumf %363, %364 : vector<8x128xf32>
    %366 = vector.broadcast %48 : f32 to vector<8x128xf32>
    %367 = arith.mulf %365, %366 : vector<8x128xf32>
    %368 = arith.addf %329, %367 : vector<8x128xf32>
    %369 = vector.broadcast %49 : f32 to vector<8x128xf32>
    %370 = arith.mulf %365, %369 : vector<8x128xf32>
    %371 = arith.addf %331, %370 : vector<8x128xf32>
    %372 = vector.broadcast %50 : f32 to vector<8x128xf32>
    %373 = arith.mulf %365, %372 : vector<8x128xf32>
    %374 = arith.addf %333, %373 : vector<8x128xf32>
    %375 = vector.broadcast %51 : f32 to vector<8x128xf32>
    %376 = arith.mulf %365, %375 : vector<8x128xf32>
    %377 = arith.addf %335, %376 : vector<8x128xf32>
    %378 = vector.broadcast %52 : f32 to vector<8x128xf32>
    %379 = arith.mulf %365, %378 : vector<8x128xf32>
    %380 = arith.addf %337, %379 : vector<8x128xf32>
    %381 = vector.broadcast %53 : f32 to vector<8x128xf32>
    %382 = arith.mulf %365, %381 : vector<8x128xf32>
    %383 = arith.addf %339, %382 : vector<8x128xf32>
    %384 = vector.broadcast %54 : f32 to vector<8x128xf32>
    %385 = arith.mulf %365, %384 : vector<8x128xf32>
    %386 = arith.addf %341, %385 : vector<8x128xf32>
    %387 = vector.broadcast %55 : f32 to vector<8x128xf32>
    %388 = arith.mulf %365, %387 : vector<8x128xf32>
    %389 = arith.addf %343, %388 : vector<8x128xf32>
    %390 = vector.broadcast %56 : f32 to vector<8x128xf32>
    %391 = arith.mulf %365, %390 : vector<8x128xf32>
    %392 = arith.addf %345, %391 : vector<8x128xf32>
    %393 = vector.broadcast %57 : f32 to vector<8x128xf32>
    %394 = arith.mulf %365, %393 : vector<8x128xf32>
    %395 = arith.addf %347, %394 : vector<8x128xf32>
    %396 = vector.broadcast %58 : f32 to vector<8x128xf32>
    %397 = arith.mulf %365, %396 : vector<8x128xf32>
    %398 = arith.addf %349, %397 : vector<8x128xf32>
    %399 = vector.broadcast %59 : f32 to vector<8x128xf32>
    %400 = arith.mulf %365, %399 : vector<8x128xf32>
    %401 = arith.addf %351, %400 : vector<8x128xf32>
    %402 = vector.broadcast %60 : f32 to vector<8x128xf32>
    %403 = arith.mulf %365, %402 : vector<8x128xf32>
    %404 = arith.addf %353, %403 : vector<8x128xf32>
    %405 = vector.broadcast %61 : f32 to vector<8x128xf32>
    %406 = arith.mulf %365, %405 : vector<8x128xf32>
    %407 = arith.addf %355, %406 : vector<8x128xf32>
    %408 = vector.broadcast %62 : f32 to vector<8x128xf32>
    %409 = arith.mulf %365, %408 : vector<8x128xf32>
    %410 = arith.addf %357, %409 : vector<8x128xf32>
    %411 = vector.broadcast %63 : f32 to vector<8x128xf32>
    %412 = arith.mulf %365, %411 : vector<8x128xf32>
    %413 = arith.addf %359, %412 : vector<8x128xf32>
    %414 = vector.broadcast %2 : f32 to vector<8x128xf32>
    %415 = arith.mulf %321, %414 : vector<8x128xf32>
    %416 = vector.broadcast %18 : f32 to vector<8x128xf32>
    %417 = arith.addf %415, %416 : vector<8x128xf32>
    %cst_3 = arith.constant 0.000000e+00 : f32
    %418 = vector.broadcast %cst_3 : f32 to vector<8x128xf32>
    %419 = arith.maximumf %417, %418 : vector<8x128xf32>
    %420 = vector.broadcast %64 : f32 to vector<8x128xf32>
    %421 = arith.mulf %419, %420 : vector<8x128xf32>
    %422 = arith.addf %368, %421 : vector<8x128xf32>
    %423 = vector.broadcast %65 : f32 to vector<8x128xf32>
    %424 = arith.mulf %419, %423 : vector<8x128xf32>
    %425 = arith.addf %371, %424 : vector<8x128xf32>
    %426 = vector.broadcast %66 : f32 to vector<8x128xf32>
    %427 = arith.mulf %419, %426 : vector<8x128xf32>
    %428 = arith.addf %374, %427 : vector<8x128xf32>
    %429 = vector.broadcast %67 : f32 to vector<8x128xf32>
    %430 = arith.mulf %419, %429 : vector<8x128xf32>
    %431 = arith.addf %377, %430 : vector<8x128xf32>
    %432 = vector.broadcast %68 : f32 to vector<8x128xf32>
    %433 = arith.mulf %419, %432 : vector<8x128xf32>
    %434 = arith.addf %380, %433 : vector<8x128xf32>
    %435 = vector.broadcast %69 : f32 to vector<8x128xf32>
    %436 = arith.mulf %419, %435 : vector<8x128xf32>
    %437 = arith.addf %383, %436 : vector<8x128xf32>
    %438 = vector.broadcast %70 : f32 to vector<8x128xf32>
    %439 = arith.mulf %419, %438 : vector<8x128xf32>
    %440 = arith.addf %386, %439 : vector<8x128xf32>
    %441 = vector.broadcast %71 : f32 to vector<8x128xf32>
    %442 = arith.mulf %419, %441 : vector<8x128xf32>
    %443 = arith.addf %389, %442 : vector<8x128xf32>
    %444 = vector.broadcast %72 : f32 to vector<8x128xf32>
    %445 = arith.mulf %419, %444 : vector<8x128xf32>
    %446 = arith.addf %392, %445 : vector<8x128xf32>
    %447 = vector.broadcast %73 : f32 to vector<8x128xf32>
    %448 = arith.mulf %419, %447 : vector<8x128xf32>
    %449 = arith.addf %395, %448 : vector<8x128xf32>
    %450 = vector.broadcast %74 : f32 to vector<8x128xf32>
    %451 = arith.mulf %419, %450 : vector<8x128xf32>
    %452 = arith.addf %398, %451 : vector<8x128xf32>
    %453 = vector.broadcast %75 : f32 to vector<8x128xf32>
    %454 = arith.mulf %419, %453 : vector<8x128xf32>
    %455 = arith.addf %401, %454 : vector<8x128xf32>
    %456 = vector.broadcast %76 : f32 to vector<8x128xf32>
    %457 = arith.mulf %419, %456 : vector<8x128xf32>
    %458 = arith.addf %404, %457 : vector<8x128xf32>
    %459 = vector.broadcast %77 : f32 to vector<8x128xf32>
    %460 = arith.mulf %419, %459 : vector<8x128xf32>
    %461 = arith.addf %407, %460 : vector<8x128xf32>
    %462 = vector.broadcast %78 : f32 to vector<8x128xf32>
    %463 = arith.mulf %419, %462 : vector<8x128xf32>
    %464 = arith.addf %410, %463 : vector<8x128xf32>
    %465 = vector.broadcast %79 : f32 to vector<8x128xf32>
    %466 = arith.mulf %419, %465 : vector<8x128xf32>
    %467 = arith.addf %413, %466 : vector<8x128xf32>
    %468 = vector.broadcast %3 : f32 to vector<8x128xf32>
    %469 = arith.mulf %321, %468 : vector<8x128xf32>
    %470 = vector.broadcast %19 : f32 to vector<8x128xf32>
    %471 = arith.addf %469, %470 : vector<8x128xf32>
    %cst_4 = arith.constant 0.000000e+00 : f32
    %472 = vector.broadcast %cst_4 : f32 to vector<8x128xf32>
    %473 = arith.maximumf %471, %472 : vector<8x128xf32>
    %474 = vector.broadcast %80 : f32 to vector<8x128xf32>
    %475 = arith.mulf %473, %474 : vector<8x128xf32>
    %476 = arith.addf %422, %475 : vector<8x128xf32>
    %477 = vector.broadcast %81 : f32 to vector<8x128xf32>
    %478 = arith.mulf %473, %477 : vector<8x128xf32>
    %479 = arith.addf %425, %478 : vector<8x128xf32>
    %480 = vector.broadcast %82 : f32 to vector<8x128xf32>
    %481 = arith.mulf %473, %480 : vector<8x128xf32>
    %482 = arith.addf %428, %481 : vector<8x128xf32>
    %483 = vector.broadcast %83 : f32 to vector<8x128xf32>
    %484 = arith.mulf %473, %483 : vector<8x128xf32>
    %485 = arith.addf %431, %484 : vector<8x128xf32>
    %486 = vector.broadcast %84 : f32 to vector<8x128xf32>
    %487 = arith.mulf %473, %486 : vector<8x128xf32>
    %488 = arith.addf %434, %487 : vector<8x128xf32>
    %489 = vector.broadcast %85 : f32 to vector<8x128xf32>
    %490 = arith.mulf %473, %489 : vector<8x128xf32>
    %491 = arith.addf %437, %490 : vector<8x128xf32>
    %492 = vector.broadcast %86 : f32 to vector<8x128xf32>
    %493 = arith.mulf %473, %492 : vector<8x128xf32>
    %494 = arith.addf %440, %493 : vector<8x128xf32>
    %495 = vector.broadcast %87 : f32 to vector<8x128xf32>
    %496 = arith.mulf %473, %495 : vector<8x128xf32>
    %497 = arith.addf %443, %496 : vector<8x128xf32>
    %498 = vector.broadcast %88 : f32 to vector<8x128xf32>
    %499 = arith.mulf %473, %498 : vector<8x128xf32>
    %500 = arith.addf %446, %499 : vector<8x128xf32>
    %501 = vector.broadcast %89 : f32 to vector<8x128xf32>
    %502 = arith.mulf %473, %501 : vector<8x128xf32>
    %503 = arith.addf %449, %502 : vector<8x128xf32>
    %504 = vector.broadcast %90 : f32 to vector<8x128xf32>
    %505 = arith.mulf %473, %504 : vector<8x128xf32>
    %506 = arith.addf %452, %505 : vector<8x128xf32>
    %507 = vector.broadcast %91 : f32 to vector<8x128xf32>
    %508 = arith.mulf %473, %507 : vector<8x128xf32>
    %509 = arith.addf %455, %508 : vector<8x128xf32>
    %510 = vector.broadcast %92 : f32 to vector<8x128xf32>
    %511 = arith.mulf %473, %510 : vector<8x128xf32>
    %512 = arith.addf %458, %511 : vector<8x128xf32>
    %513 = vector.broadcast %93 : f32 to vector<8x128xf32>
    %514 = arith.mulf %473, %513 : vector<8x128xf32>
    %515 = arith.addf %461, %514 : vector<8x128xf32>
    %516 = vector.broadcast %94 : f32 to vector<8x128xf32>
    %517 = arith.mulf %473, %516 : vector<8x128xf32>
    %518 = arith.addf %464, %517 : vector<8x128xf32>
    %519 = vector.broadcast %95 : f32 to vector<8x128xf32>
    %520 = arith.mulf %473, %519 : vector<8x128xf32>
    %521 = arith.addf %467, %520 : vector<8x128xf32>
    %522 = vector.broadcast %4 : f32 to vector<8x128xf32>
    %523 = arith.mulf %321, %522 : vector<8x128xf32>
    %524 = vector.broadcast %20 : f32 to vector<8x128xf32>
    %525 = arith.addf %523, %524 : vector<8x128xf32>
    %cst_5 = arith.constant 0.000000e+00 : f32
    %526 = vector.broadcast %cst_5 : f32 to vector<8x128xf32>
    %527 = arith.maximumf %525, %526 : vector<8x128xf32>
    %528 = vector.broadcast %96 : f32 to vector<8x128xf32>
    %529 = arith.mulf %527, %528 : vector<8x128xf32>
    %530 = arith.addf %476, %529 : vector<8x128xf32>
    %531 = vector.broadcast %97 : f32 to vector<8x128xf32>
    %532 = arith.mulf %527, %531 : vector<8x128xf32>
    %533 = arith.addf %479, %532 : vector<8x128xf32>
    %534 = vector.broadcast %98 : f32 to vector<8x128xf32>
    %535 = arith.mulf %527, %534 : vector<8x128xf32>
    %536 = arith.addf %482, %535 : vector<8x128xf32>
    %537 = vector.broadcast %99 : f32 to vector<8x128xf32>
    %538 = arith.mulf %527, %537 : vector<8x128xf32>
    %539 = arith.addf %485, %538 : vector<8x128xf32>
    %540 = vector.broadcast %100 : f32 to vector<8x128xf32>
    %541 = arith.mulf %527, %540 : vector<8x128xf32>
    %542 = arith.addf %488, %541 : vector<8x128xf32>
    %543 = vector.broadcast %101 : f32 to vector<8x128xf32>
    %544 = arith.mulf %527, %543 : vector<8x128xf32>
    %545 = arith.addf %491, %544 : vector<8x128xf32>
    %546 = vector.broadcast %102 : f32 to vector<8x128xf32>
    %547 = arith.mulf %527, %546 : vector<8x128xf32>
    %548 = arith.addf %494, %547 : vector<8x128xf32>
    %549 = vector.broadcast %103 : f32 to vector<8x128xf32>
    %550 = arith.mulf %527, %549 : vector<8x128xf32>
    %551 = arith.addf %497, %550 : vector<8x128xf32>
    %552 = vector.broadcast %104 : f32 to vector<8x128xf32>
    %553 = arith.mulf %527, %552 : vector<8x128xf32>
    %554 = arith.addf %500, %553 : vector<8x128xf32>
    %555 = vector.broadcast %105 : f32 to vector<8x128xf32>
    %556 = arith.mulf %527, %555 : vector<8x128xf32>
    %557 = arith.addf %503, %556 : vector<8x128xf32>
    %558 = vector.broadcast %106 : f32 to vector<8x128xf32>
    %559 = arith.mulf %527, %558 : vector<8x128xf32>
    %560 = arith.addf %506, %559 : vector<8x128xf32>
    %561 = vector.broadcast %107 : f32 to vector<8x128xf32>
    %562 = arith.mulf %527, %561 : vector<8x128xf32>
    %563 = arith.addf %509, %562 : vector<8x128xf32>
    %564 = vector.broadcast %108 : f32 to vector<8x128xf32>
    %565 = arith.mulf %527, %564 : vector<8x128xf32>
    %566 = arith.addf %512, %565 : vector<8x128xf32>
    %567 = vector.broadcast %109 : f32 to vector<8x128xf32>
    %568 = arith.mulf %527, %567 : vector<8x128xf32>
    %569 = arith.addf %515, %568 : vector<8x128xf32>
    %570 = vector.broadcast %110 : f32 to vector<8x128xf32>
    %571 = arith.mulf %527, %570 : vector<8x128xf32>
    %572 = arith.addf %518, %571 : vector<8x128xf32>
    %573 = vector.broadcast %111 : f32 to vector<8x128xf32>
    %574 = arith.mulf %527, %573 : vector<8x128xf32>
    %575 = arith.addf %521, %574 : vector<8x128xf32>
    %576 = vector.broadcast %5 : f32 to vector<8x128xf32>
    %577 = arith.mulf %321, %576 : vector<8x128xf32>
    %578 = vector.broadcast %21 : f32 to vector<8x128xf32>
    %579 = arith.addf %577, %578 : vector<8x128xf32>
    %cst_6 = arith.constant 0.000000e+00 : f32
    %580 = vector.broadcast %cst_6 : f32 to vector<8x128xf32>
    %581 = arith.maximumf %579, %580 : vector<8x128xf32>
    %582 = vector.broadcast %112 : f32 to vector<8x128xf32>
    %583 = arith.mulf %581, %582 : vector<8x128xf32>
    %584 = arith.addf %530, %583 : vector<8x128xf32>
    %585 = vector.broadcast %113 : f32 to vector<8x128xf32>
    %586 = arith.mulf %581, %585 : vector<8x128xf32>
    %587 = arith.addf %533, %586 : vector<8x128xf32>
    %588 = vector.broadcast %114 : f32 to vector<8x128xf32>
    %589 = arith.mulf %581, %588 : vector<8x128xf32>
    %590 = arith.addf %536, %589 : vector<8x128xf32>
    %591 = vector.broadcast %115 : f32 to vector<8x128xf32>
    %592 = arith.mulf %581, %591 : vector<8x128xf32>
    %593 = arith.addf %539, %592 : vector<8x128xf32>
    %594 = vector.broadcast %116 : f32 to vector<8x128xf32>
    %595 = arith.mulf %581, %594 : vector<8x128xf32>
    %596 = arith.addf %542, %595 : vector<8x128xf32>
    %597 = vector.broadcast %117 : f32 to vector<8x128xf32>
    %598 = arith.mulf %581, %597 : vector<8x128xf32>
    %599 = arith.addf %545, %598 : vector<8x128xf32>
    %600 = vector.broadcast %118 : f32 to vector<8x128xf32>
    %601 = arith.mulf %581, %600 : vector<8x128xf32>
    %602 = arith.addf %548, %601 : vector<8x128xf32>
    %603 = vector.broadcast %119 : f32 to vector<8x128xf32>
    %604 = arith.mulf %581, %603 : vector<8x128xf32>
    %605 = arith.addf %551, %604 : vector<8x128xf32>
    %606 = vector.broadcast %120 : f32 to vector<8x128xf32>
    %607 = arith.mulf %581, %606 : vector<8x128xf32>
    %608 = arith.addf %554, %607 : vector<8x128xf32>
    %609 = vector.broadcast %121 : f32 to vector<8x128xf32>
    %610 = arith.mulf %581, %609 : vector<8x128xf32>
    %611 = arith.addf %557, %610 : vector<8x128xf32>
    %612 = vector.broadcast %122 : f32 to vector<8x128xf32>
    %613 = arith.mulf %581, %612 : vector<8x128xf32>
    %614 = arith.addf %560, %613 : vector<8x128xf32>
    %615 = vector.broadcast %123 : f32 to vector<8x128xf32>
    %616 = arith.mulf %581, %615 : vector<8x128xf32>
    %617 = arith.addf %563, %616 : vector<8x128xf32>
    %618 = vector.broadcast %124 : f32 to vector<8x128xf32>
    %619 = arith.mulf %581, %618 : vector<8x128xf32>
    %620 = arith.addf %566, %619 : vector<8x128xf32>
    %621 = vector.broadcast %125 : f32 to vector<8x128xf32>
    %622 = arith.mulf %581, %621 : vector<8x128xf32>
    %623 = arith.addf %569, %622 : vector<8x128xf32>
    %624 = vector.broadcast %126 : f32 to vector<8x128xf32>
    %625 = arith.mulf %581, %624 : vector<8x128xf32>
    %626 = arith.addf %572, %625 : vector<8x128xf32>
    %627 = vector.broadcast %127 : f32 to vector<8x128xf32>
    %628 = arith.mulf %581, %627 : vector<8x128xf32>
    %629 = arith.addf %575, %628 : vector<8x128xf32>
    %630 = vector.broadcast %6 : f32 to vector<8x128xf32>
    %631 = arith.mulf %321, %630 : vector<8x128xf32>
    %632 = vector.broadcast %22 : f32 to vector<8x128xf32>
    %633 = arith.addf %631, %632 : vector<8x128xf32>
    %cst_7 = arith.constant 0.000000e+00 : f32
    %634 = vector.broadcast %cst_7 : f32 to vector<8x128xf32>
    %635 = arith.maximumf %633, %634 : vector<8x128xf32>
    %636 = vector.broadcast %128 : f32 to vector<8x128xf32>
    %637 = arith.mulf %635, %636 : vector<8x128xf32>
    %638 = arith.addf %584, %637 : vector<8x128xf32>
    %639 = vector.broadcast %129 : f32 to vector<8x128xf32>
    %640 = arith.mulf %635, %639 : vector<8x128xf32>
    %641 = arith.addf %587, %640 : vector<8x128xf32>
    %642 = vector.broadcast %130 : f32 to vector<8x128xf32>
    %643 = arith.mulf %635, %642 : vector<8x128xf32>
    %644 = arith.addf %590, %643 : vector<8x128xf32>
    %645 = vector.broadcast %131 : f32 to vector<8x128xf32>
    %646 = arith.mulf %635, %645 : vector<8x128xf32>
    %647 = arith.addf %593, %646 : vector<8x128xf32>
    %648 = vector.broadcast %132 : f32 to vector<8x128xf32>
    %649 = arith.mulf %635, %648 : vector<8x128xf32>
    %650 = arith.addf %596, %649 : vector<8x128xf32>
    %651 = vector.broadcast %133 : f32 to vector<8x128xf32>
    %652 = arith.mulf %635, %651 : vector<8x128xf32>
    %653 = arith.addf %599, %652 : vector<8x128xf32>
    %654 = vector.broadcast %134 : f32 to vector<8x128xf32>
    %655 = arith.mulf %635, %654 : vector<8x128xf32>
    %656 = arith.addf %602, %655 : vector<8x128xf32>
    %657 = vector.broadcast %135 : f32 to vector<8x128xf32>
    %658 = arith.mulf %635, %657 : vector<8x128xf32>
    %659 = arith.addf %605, %658 : vector<8x128xf32>
    %660 = vector.broadcast %136 : f32 to vector<8x128xf32>
    %661 = arith.mulf %635, %660 : vector<8x128xf32>
    %662 = arith.addf %608, %661 : vector<8x128xf32>
    %663 = vector.broadcast %137 : f32 to vector<8x128xf32>
    %664 = arith.mulf %635, %663 : vector<8x128xf32>
    %665 = arith.addf %611, %664 : vector<8x128xf32>
    %666 = vector.broadcast %138 : f32 to vector<8x128xf32>
    %667 = arith.mulf %635, %666 : vector<8x128xf32>
    %668 = arith.addf %614, %667 : vector<8x128xf32>
    %669 = vector.broadcast %139 : f32 to vector<8x128xf32>
    %670 = arith.mulf %635, %669 : vector<8x128xf32>
    %671 = arith.addf %617, %670 : vector<8x128xf32>
    %672 = vector.broadcast %140 : f32 to vector<8x128xf32>
    %673 = arith.mulf %635, %672 : vector<8x128xf32>
    %674 = arith.addf %620, %673 : vector<8x128xf32>
    %675 = vector.broadcast %141 : f32 to vector<8x128xf32>
    %676 = arith.mulf %635, %675 : vector<8x128xf32>
    %677 = arith.addf %623, %676 : vector<8x128xf32>
    %678 = vector.broadcast %142 : f32 to vector<8x128xf32>
    %679 = arith.mulf %635, %678 : vector<8x128xf32>
    %680 = arith.addf %626, %679 : vector<8x128xf32>
    %681 = vector.broadcast %143 : f32 to vector<8x128xf32>
    %682 = arith.mulf %635, %681 : vector<8x128xf32>
    %683 = arith.addf %629, %682 : vector<8x128xf32>
    %684 = vector.broadcast %7 : f32 to vector<8x128xf32>
    %685 = arith.mulf %321, %684 : vector<8x128xf32>
    %686 = vector.broadcast %23 : f32 to vector<8x128xf32>
    %687 = arith.addf %685, %686 : vector<8x128xf32>
    %cst_8 = arith.constant 0.000000e+00 : f32
    %688 = vector.broadcast %cst_8 : f32 to vector<8x128xf32>
    %689 = arith.maximumf %687, %688 : vector<8x128xf32>
    %690 = vector.broadcast %144 : f32 to vector<8x128xf32>
    %691 = arith.mulf %689, %690 : vector<8x128xf32>
    %692 = arith.addf %638, %691 : vector<8x128xf32>
    %693 = vector.broadcast %145 : f32 to vector<8x128xf32>
    %694 = arith.mulf %689, %693 : vector<8x128xf32>
    %695 = arith.addf %641, %694 : vector<8x128xf32>
    %696 = vector.broadcast %146 : f32 to vector<8x128xf32>
    %697 = arith.mulf %689, %696 : vector<8x128xf32>
    %698 = arith.addf %644, %697 : vector<8x128xf32>
    %699 = vector.broadcast %147 : f32 to vector<8x128xf32>
    %700 = arith.mulf %689, %699 : vector<8x128xf32>
    %701 = arith.addf %647, %700 : vector<8x128xf32>
    %702 = vector.broadcast %148 : f32 to vector<8x128xf32>
    %703 = arith.mulf %689, %702 : vector<8x128xf32>
    %704 = arith.addf %650, %703 : vector<8x128xf32>
    %705 = vector.broadcast %149 : f32 to vector<8x128xf32>
    %706 = arith.mulf %689, %705 : vector<8x128xf32>
    %707 = arith.addf %653, %706 : vector<8x128xf32>
    %708 = vector.broadcast %150 : f32 to vector<8x128xf32>
    %709 = arith.mulf %689, %708 : vector<8x128xf32>
    %710 = arith.addf %656, %709 : vector<8x128xf32>
    %711 = vector.broadcast %151 : f32 to vector<8x128xf32>
    %712 = arith.mulf %689, %711 : vector<8x128xf32>
    %713 = arith.addf %659, %712 : vector<8x128xf32>
    %714 = vector.broadcast %152 : f32 to vector<8x128xf32>
    %715 = arith.mulf %689, %714 : vector<8x128xf32>
    %716 = arith.addf %662, %715 : vector<8x128xf32>
    %717 = vector.broadcast %153 : f32 to vector<8x128xf32>
    %718 = arith.mulf %689, %717 : vector<8x128xf32>
    %719 = arith.addf %665, %718 : vector<8x128xf32>
    %720 = vector.broadcast %154 : f32 to vector<8x128xf32>
    %721 = arith.mulf %689, %720 : vector<8x128xf32>
    %722 = arith.addf %668, %721 : vector<8x128xf32>
    %723 = vector.broadcast %155 : f32 to vector<8x128xf32>
    %724 = arith.mulf %689, %723 : vector<8x128xf32>
    %725 = arith.addf %671, %724 : vector<8x128xf32>
    %726 = vector.broadcast %156 : f32 to vector<8x128xf32>
    %727 = arith.mulf %689, %726 : vector<8x128xf32>
    %728 = arith.addf %674, %727 : vector<8x128xf32>
    %729 = vector.broadcast %157 : f32 to vector<8x128xf32>
    %730 = arith.mulf %689, %729 : vector<8x128xf32>
    %731 = arith.addf %677, %730 : vector<8x128xf32>
    %732 = vector.broadcast %158 : f32 to vector<8x128xf32>
    %733 = arith.mulf %689, %732 : vector<8x128xf32>
    %734 = arith.addf %680, %733 : vector<8x128xf32>
    %735 = vector.broadcast %159 : f32 to vector<8x128xf32>
    %736 = arith.mulf %689, %735 : vector<8x128xf32>
    %737 = arith.addf %683, %736 : vector<8x128xf32>
    %738 = vector.broadcast %8 : f32 to vector<8x128xf32>
    %739 = arith.mulf %321, %738 : vector<8x128xf32>
    %740 = vector.broadcast %24 : f32 to vector<8x128xf32>
    %741 = arith.addf %739, %740 : vector<8x128xf32>
    %cst_9 = arith.constant 0.000000e+00 : f32
    %742 = vector.broadcast %cst_9 : f32 to vector<8x128xf32>
    %743 = arith.maximumf %741, %742 : vector<8x128xf32>
    %744 = vector.broadcast %160 : f32 to vector<8x128xf32>
    %745 = arith.mulf %743, %744 : vector<8x128xf32>
    %746 = arith.addf %692, %745 : vector<8x128xf32>
    %747 = vector.broadcast %161 : f32 to vector<8x128xf32>
    %748 = arith.mulf %743, %747 : vector<8x128xf32>
    %749 = arith.addf %695, %748 : vector<8x128xf32>
    %750 = vector.broadcast %162 : f32 to vector<8x128xf32>
    %751 = arith.mulf %743, %750 : vector<8x128xf32>
    %752 = arith.addf %698, %751 : vector<8x128xf32>
    %753 = vector.broadcast %163 : f32 to vector<8x128xf32>
    %754 = arith.mulf %743, %753 : vector<8x128xf32>
    %755 = arith.addf %701, %754 : vector<8x128xf32>
    %756 = vector.broadcast %164 : f32 to vector<8x128xf32>
    %757 = arith.mulf %743, %756 : vector<8x128xf32>
    %758 = arith.addf %704, %757 : vector<8x128xf32>
    %759 = vector.broadcast %165 : f32 to vector<8x128xf32>
    %760 = arith.mulf %743, %759 : vector<8x128xf32>
    %761 = arith.addf %707, %760 : vector<8x128xf32>
    %762 = vector.broadcast %166 : f32 to vector<8x128xf32>
    %763 = arith.mulf %743, %762 : vector<8x128xf32>
    %764 = arith.addf %710, %763 : vector<8x128xf32>
    %765 = vector.broadcast %167 : f32 to vector<8x128xf32>
    %766 = arith.mulf %743, %765 : vector<8x128xf32>
    %767 = arith.addf %713, %766 : vector<8x128xf32>
    %768 = vector.broadcast %168 : f32 to vector<8x128xf32>
    %769 = arith.mulf %743, %768 : vector<8x128xf32>
    %770 = arith.addf %716, %769 : vector<8x128xf32>
    %771 = vector.broadcast %169 : f32 to vector<8x128xf32>
    %772 = arith.mulf %743, %771 : vector<8x128xf32>
    %773 = arith.addf %719, %772 : vector<8x128xf32>
    %774 = vector.broadcast %170 : f32 to vector<8x128xf32>
    %775 = arith.mulf %743, %774 : vector<8x128xf32>
    %776 = arith.addf %722, %775 : vector<8x128xf32>
    %777 = vector.broadcast %171 : f32 to vector<8x128xf32>
    %778 = arith.mulf %743, %777 : vector<8x128xf32>
    %779 = arith.addf %725, %778 : vector<8x128xf32>
    %780 = vector.broadcast %172 : f32 to vector<8x128xf32>
    %781 = arith.mulf %743, %780 : vector<8x128xf32>
    %782 = arith.addf %728, %781 : vector<8x128xf32>
    %783 = vector.broadcast %173 : f32 to vector<8x128xf32>
    %784 = arith.mulf %743, %783 : vector<8x128xf32>
    %785 = arith.addf %731, %784 : vector<8x128xf32>
    %786 = vector.broadcast %174 : f32 to vector<8x128xf32>
    %787 = arith.mulf %743, %786 : vector<8x128xf32>
    %788 = arith.addf %734, %787 : vector<8x128xf32>
    %789 = vector.broadcast %175 : f32 to vector<8x128xf32>
    %790 = arith.mulf %743, %789 : vector<8x128xf32>
    %791 = arith.addf %737, %790 : vector<8x128xf32>
    %792 = vector.broadcast %9 : f32 to vector<8x128xf32>
    %793 = arith.mulf %321, %792 : vector<8x128xf32>
    %794 = vector.broadcast %25 : f32 to vector<8x128xf32>
    %795 = arith.addf %793, %794 : vector<8x128xf32>
    %cst_10 = arith.constant 0.000000e+00 : f32
    %796 = vector.broadcast %cst_10 : f32 to vector<8x128xf32>
    %797 = arith.maximumf %795, %796 : vector<8x128xf32>
    %798 = vector.broadcast %176 : f32 to vector<8x128xf32>
    %799 = arith.mulf %797, %798 : vector<8x128xf32>
    %800 = arith.addf %746, %799 : vector<8x128xf32>
    %801 = vector.broadcast %177 : f32 to vector<8x128xf32>
    %802 = arith.mulf %797, %801 : vector<8x128xf32>
    %803 = arith.addf %749, %802 : vector<8x128xf32>
    %804 = vector.broadcast %178 : f32 to vector<8x128xf32>
    %805 = arith.mulf %797, %804 : vector<8x128xf32>
    %806 = arith.addf %752, %805 : vector<8x128xf32>
    %807 = vector.broadcast %179 : f32 to vector<8x128xf32>
    %808 = arith.mulf %797, %807 : vector<8x128xf32>
    %809 = arith.addf %755, %808 : vector<8x128xf32>
    %810 = vector.broadcast %180 : f32 to vector<8x128xf32>
    %811 = arith.mulf %797, %810 : vector<8x128xf32>
    %812 = arith.addf %758, %811 : vector<8x128xf32>
    %813 = vector.broadcast %181 : f32 to vector<8x128xf32>
    %814 = arith.mulf %797, %813 : vector<8x128xf32>
    %815 = arith.addf %761, %814 : vector<8x128xf32>
    %816 = vector.broadcast %182 : f32 to vector<8x128xf32>
    %817 = arith.mulf %797, %816 : vector<8x128xf32>
    %818 = arith.addf %764, %817 : vector<8x128xf32>
    %819 = vector.broadcast %183 : f32 to vector<8x128xf32>
    %820 = arith.mulf %797, %819 : vector<8x128xf32>
    %821 = arith.addf %767, %820 : vector<8x128xf32>
    %822 = vector.broadcast %184 : f32 to vector<8x128xf32>
    %823 = arith.mulf %797, %822 : vector<8x128xf32>
    %824 = arith.addf %770, %823 : vector<8x128xf32>
    %825 = vector.broadcast %185 : f32 to vector<8x128xf32>
    %826 = arith.mulf %797, %825 : vector<8x128xf32>
    %827 = arith.addf %773, %826 : vector<8x128xf32>
    %828 = vector.broadcast %186 : f32 to vector<8x128xf32>
    %829 = arith.mulf %797, %828 : vector<8x128xf32>
    %830 = arith.addf %776, %829 : vector<8x128xf32>
    %831 = vector.broadcast %187 : f32 to vector<8x128xf32>
    %832 = arith.mulf %797, %831 : vector<8x128xf32>
    %833 = arith.addf %779, %832 : vector<8x128xf32>
    %834 = vector.broadcast %188 : f32 to vector<8x128xf32>
    %835 = arith.mulf %797, %834 : vector<8x128xf32>
    %836 = arith.addf %782, %835 : vector<8x128xf32>
    %837 = vector.broadcast %189 : f32 to vector<8x128xf32>
    %838 = arith.mulf %797, %837 : vector<8x128xf32>
    %839 = arith.addf %785, %838 : vector<8x128xf32>
    %840 = vector.broadcast %190 : f32 to vector<8x128xf32>
    %841 = arith.mulf %797, %840 : vector<8x128xf32>
    %842 = arith.addf %788, %841 : vector<8x128xf32>
    %843 = vector.broadcast %191 : f32 to vector<8x128xf32>
    %844 = arith.mulf %797, %843 : vector<8x128xf32>
    %845 = arith.addf %791, %844 : vector<8x128xf32>
    %846 = vector.broadcast %10 : f32 to vector<8x128xf32>
    %847 = arith.mulf %321, %846 : vector<8x128xf32>
    %848 = vector.broadcast %26 : f32 to vector<8x128xf32>
    %849 = arith.addf %847, %848 : vector<8x128xf32>
    %cst_11 = arith.constant 0.000000e+00 : f32
    %850 = vector.broadcast %cst_11 : f32 to vector<8x128xf32>
    %851 = arith.maximumf %849, %850 : vector<8x128xf32>
    %852 = vector.broadcast %192 : f32 to vector<8x128xf32>
    %853 = arith.mulf %851, %852 : vector<8x128xf32>
    %854 = arith.addf %800, %853 : vector<8x128xf32>
    %855 = vector.broadcast %193 : f32 to vector<8x128xf32>
    %856 = arith.mulf %851, %855 : vector<8x128xf32>
    %857 = arith.addf %803, %856 : vector<8x128xf32>
    %858 = vector.broadcast %194 : f32 to vector<8x128xf32>
    %859 = arith.mulf %851, %858 : vector<8x128xf32>
    %860 = arith.addf %806, %859 : vector<8x128xf32>
    %861 = vector.broadcast %195 : f32 to vector<8x128xf32>
    %862 = arith.mulf %851, %861 : vector<8x128xf32>
    %863 = arith.addf %809, %862 : vector<8x128xf32>
    %864 = vector.broadcast %196 : f32 to vector<8x128xf32>
    %865 = arith.mulf %851, %864 : vector<8x128xf32>
    %866 = arith.addf %812, %865 : vector<8x128xf32>
    %867 = vector.broadcast %197 : f32 to vector<8x128xf32>
    %868 = arith.mulf %851, %867 : vector<8x128xf32>
    %869 = arith.addf %815, %868 : vector<8x128xf32>
    %870 = vector.broadcast %198 : f32 to vector<8x128xf32>
    %871 = arith.mulf %851, %870 : vector<8x128xf32>
    %872 = arith.addf %818, %871 : vector<8x128xf32>
    %873 = vector.broadcast %199 : f32 to vector<8x128xf32>
    %874 = arith.mulf %851, %873 : vector<8x128xf32>
    %875 = arith.addf %821, %874 : vector<8x128xf32>
    %876 = vector.broadcast %200 : f32 to vector<8x128xf32>
    %877 = arith.mulf %851, %876 : vector<8x128xf32>
    %878 = arith.addf %824, %877 : vector<8x128xf32>
    %879 = vector.broadcast %201 : f32 to vector<8x128xf32>
    %880 = arith.mulf %851, %879 : vector<8x128xf32>
    %881 = arith.addf %827, %880 : vector<8x128xf32>
    %882 = vector.broadcast %202 : f32 to vector<8x128xf32>
    %883 = arith.mulf %851, %882 : vector<8x128xf32>
    %884 = arith.addf %830, %883 : vector<8x128xf32>
    %885 = vector.broadcast %203 : f32 to vector<8x128xf32>
    %886 = arith.mulf %851, %885 : vector<8x128xf32>
    %887 = arith.addf %833, %886 : vector<8x128xf32>
    %888 = vector.broadcast %204 : f32 to vector<8x128xf32>
    %889 = arith.mulf %851, %888 : vector<8x128xf32>
    %890 = arith.addf %836, %889 : vector<8x128xf32>
    %891 = vector.broadcast %205 : f32 to vector<8x128xf32>
    %892 = arith.mulf %851, %891 : vector<8x128xf32>
    %893 = arith.addf %839, %892 : vector<8x128xf32>
    %894 = vector.broadcast %206 : f32 to vector<8x128xf32>
    %895 = arith.mulf %851, %894 : vector<8x128xf32>
    %896 = arith.addf %842, %895 : vector<8x128xf32>
    %897 = vector.broadcast %207 : f32 to vector<8x128xf32>
    %898 = arith.mulf %851, %897 : vector<8x128xf32>
    %899 = arith.addf %845, %898 : vector<8x128xf32>
    %900 = vector.broadcast %11 : f32 to vector<8x128xf32>
    %901 = arith.mulf %321, %900 : vector<8x128xf32>
    %902 = vector.broadcast %27 : f32 to vector<8x128xf32>
    %903 = arith.addf %901, %902 : vector<8x128xf32>
    %cst_12 = arith.constant 0.000000e+00 : f32
    %904 = vector.broadcast %cst_12 : f32 to vector<8x128xf32>
    %905 = arith.maximumf %903, %904 : vector<8x128xf32>
    %906 = vector.broadcast %208 : f32 to vector<8x128xf32>
    %907 = arith.mulf %905, %906 : vector<8x128xf32>
    %908 = arith.addf %854, %907 : vector<8x128xf32>
    %909 = vector.broadcast %209 : f32 to vector<8x128xf32>
    %910 = arith.mulf %905, %909 : vector<8x128xf32>
    %911 = arith.addf %857, %910 : vector<8x128xf32>
    %912 = vector.broadcast %210 : f32 to vector<8x128xf32>
    %913 = arith.mulf %905, %912 : vector<8x128xf32>
    %914 = arith.addf %860, %913 : vector<8x128xf32>
    %915 = vector.broadcast %211 : f32 to vector<8x128xf32>
    %916 = arith.mulf %905, %915 : vector<8x128xf32>
    %917 = arith.addf %863, %916 : vector<8x128xf32>
    %918 = vector.broadcast %212 : f32 to vector<8x128xf32>
    %919 = arith.mulf %905, %918 : vector<8x128xf32>
    %920 = arith.addf %866, %919 : vector<8x128xf32>
    %921 = vector.broadcast %213 : f32 to vector<8x128xf32>
    %922 = arith.mulf %905, %921 : vector<8x128xf32>
    %923 = arith.addf %869, %922 : vector<8x128xf32>
    %924 = vector.broadcast %214 : f32 to vector<8x128xf32>
    %925 = arith.mulf %905, %924 : vector<8x128xf32>
    %926 = arith.addf %872, %925 : vector<8x128xf32>
    %927 = vector.broadcast %215 : f32 to vector<8x128xf32>
    %928 = arith.mulf %905, %927 : vector<8x128xf32>
    %929 = arith.addf %875, %928 : vector<8x128xf32>
    %930 = vector.broadcast %216 : f32 to vector<8x128xf32>
    %931 = arith.mulf %905, %930 : vector<8x128xf32>
    %932 = arith.addf %878, %931 : vector<8x128xf32>
    %933 = vector.broadcast %217 : f32 to vector<8x128xf32>
    %934 = arith.mulf %905, %933 : vector<8x128xf32>
    %935 = arith.addf %881, %934 : vector<8x128xf32>
    %936 = vector.broadcast %218 : f32 to vector<8x128xf32>
    %937 = arith.mulf %905, %936 : vector<8x128xf32>
    %938 = arith.addf %884, %937 : vector<8x128xf32>
    %939 = vector.broadcast %219 : f32 to vector<8x128xf32>
    %940 = arith.mulf %905, %939 : vector<8x128xf32>
    %941 = arith.addf %887, %940 : vector<8x128xf32>
    %942 = vector.broadcast %220 : f32 to vector<8x128xf32>
    %943 = arith.mulf %905, %942 : vector<8x128xf32>
    %944 = arith.addf %890, %943 : vector<8x128xf32>
    %945 = vector.broadcast %221 : f32 to vector<8x128xf32>
    %946 = arith.mulf %905, %945 : vector<8x128xf32>
    %947 = arith.addf %893, %946 : vector<8x128xf32>
    %948 = vector.broadcast %222 : f32 to vector<8x128xf32>
    %949 = arith.mulf %905, %948 : vector<8x128xf32>
    %950 = arith.addf %896, %949 : vector<8x128xf32>
    %951 = vector.broadcast %223 : f32 to vector<8x128xf32>
    %952 = arith.mulf %905, %951 : vector<8x128xf32>
    %953 = arith.addf %899, %952 : vector<8x128xf32>
    %954 = vector.broadcast %12 : f32 to vector<8x128xf32>
    %955 = arith.mulf %321, %954 : vector<8x128xf32>
    %956 = vector.broadcast %28 : f32 to vector<8x128xf32>
    %957 = arith.addf %955, %956 : vector<8x128xf32>
    %cst_13 = arith.constant 0.000000e+00 : f32
    %958 = vector.broadcast %cst_13 : f32 to vector<8x128xf32>
    %959 = arith.maximumf %957, %958 : vector<8x128xf32>
    %960 = vector.broadcast %224 : f32 to vector<8x128xf32>
    %961 = arith.mulf %959, %960 : vector<8x128xf32>
    %962 = arith.addf %908, %961 : vector<8x128xf32>
    %963 = vector.broadcast %225 : f32 to vector<8x128xf32>
    %964 = arith.mulf %959, %963 : vector<8x128xf32>
    %965 = arith.addf %911, %964 : vector<8x128xf32>
    %966 = vector.broadcast %226 : f32 to vector<8x128xf32>
    %967 = arith.mulf %959, %966 : vector<8x128xf32>
    %968 = arith.addf %914, %967 : vector<8x128xf32>
    %969 = vector.broadcast %227 : f32 to vector<8x128xf32>
    %970 = arith.mulf %959, %969 : vector<8x128xf32>
    %971 = arith.addf %917, %970 : vector<8x128xf32>
    %972 = vector.broadcast %228 : f32 to vector<8x128xf32>
    %973 = arith.mulf %959, %972 : vector<8x128xf32>
    %974 = arith.addf %920, %973 : vector<8x128xf32>
    %975 = vector.broadcast %229 : f32 to vector<8x128xf32>
    %976 = arith.mulf %959, %975 : vector<8x128xf32>
    %977 = arith.addf %923, %976 : vector<8x128xf32>
    %978 = vector.broadcast %230 : f32 to vector<8x128xf32>
    %979 = arith.mulf %959, %978 : vector<8x128xf32>
    %980 = arith.addf %926, %979 : vector<8x128xf32>
    %981 = vector.broadcast %231 : f32 to vector<8x128xf32>
    %982 = arith.mulf %959, %981 : vector<8x128xf32>
    %983 = arith.addf %929, %982 : vector<8x128xf32>
    %984 = vector.broadcast %232 : f32 to vector<8x128xf32>
    %985 = arith.mulf %959, %984 : vector<8x128xf32>
    %986 = arith.addf %932, %985 : vector<8x128xf32>
    %987 = vector.broadcast %233 : f32 to vector<8x128xf32>
    %988 = arith.mulf %959, %987 : vector<8x128xf32>
    %989 = arith.addf %935, %988 : vector<8x128xf32>
    %990 = vector.broadcast %234 : f32 to vector<8x128xf32>
    %991 = arith.mulf %959, %990 : vector<8x128xf32>
    %992 = arith.addf %938, %991 : vector<8x128xf32>
    %993 = vector.broadcast %235 : f32 to vector<8x128xf32>
    %994 = arith.mulf %959, %993 : vector<8x128xf32>
    %995 = arith.addf %941, %994 : vector<8x128xf32>
    %996 = vector.broadcast %236 : f32 to vector<8x128xf32>
    %997 = arith.mulf %959, %996 : vector<8x128xf32>
    %998 = arith.addf %944, %997 : vector<8x128xf32>
    %999 = vector.broadcast %237 : f32 to vector<8x128xf32>
    %1000 = arith.mulf %959, %999 : vector<8x128xf32>
    %1001 = arith.addf %947, %1000 : vector<8x128xf32>
    %1002 = vector.broadcast %238 : f32 to vector<8x128xf32>
    %1003 = arith.mulf %959, %1002 : vector<8x128xf32>
    %1004 = arith.addf %950, %1003 : vector<8x128xf32>
    %1005 = vector.broadcast %239 : f32 to vector<8x128xf32>
    %1006 = arith.mulf %959, %1005 : vector<8x128xf32>
    %1007 = arith.addf %953, %1006 : vector<8x128xf32>
    %1008 = vector.broadcast %13 : f32 to vector<8x128xf32>
    %1009 = arith.mulf %321, %1008 : vector<8x128xf32>
    %1010 = vector.broadcast %29 : f32 to vector<8x128xf32>
    %1011 = arith.addf %1009, %1010 : vector<8x128xf32>
    %cst_14 = arith.constant 0.000000e+00 : f32
    %1012 = vector.broadcast %cst_14 : f32 to vector<8x128xf32>
    %1013 = arith.maximumf %1011, %1012 : vector<8x128xf32>
    %1014 = vector.broadcast %240 : f32 to vector<8x128xf32>
    %1015 = arith.mulf %1013, %1014 : vector<8x128xf32>
    %1016 = arith.addf %962, %1015 : vector<8x128xf32>
    %1017 = vector.broadcast %241 : f32 to vector<8x128xf32>
    %1018 = arith.mulf %1013, %1017 : vector<8x128xf32>
    %1019 = arith.addf %965, %1018 : vector<8x128xf32>
    %1020 = vector.broadcast %242 : f32 to vector<8x128xf32>
    %1021 = arith.mulf %1013, %1020 : vector<8x128xf32>
    %1022 = arith.addf %968, %1021 : vector<8x128xf32>
    %1023 = vector.broadcast %243 : f32 to vector<8x128xf32>
    %1024 = arith.mulf %1013, %1023 : vector<8x128xf32>
    %1025 = arith.addf %971, %1024 : vector<8x128xf32>
    %1026 = vector.broadcast %244 : f32 to vector<8x128xf32>
    %1027 = arith.mulf %1013, %1026 : vector<8x128xf32>
    %1028 = arith.addf %974, %1027 : vector<8x128xf32>
    %1029 = vector.broadcast %245 : f32 to vector<8x128xf32>
    %1030 = arith.mulf %1013, %1029 : vector<8x128xf32>
    %1031 = arith.addf %977, %1030 : vector<8x128xf32>
    %1032 = vector.broadcast %246 : f32 to vector<8x128xf32>
    %1033 = arith.mulf %1013, %1032 : vector<8x128xf32>
    %1034 = arith.addf %980, %1033 : vector<8x128xf32>
    %1035 = vector.broadcast %247 : f32 to vector<8x128xf32>
    %1036 = arith.mulf %1013, %1035 : vector<8x128xf32>
    %1037 = arith.addf %983, %1036 : vector<8x128xf32>
    %1038 = vector.broadcast %248 : f32 to vector<8x128xf32>
    %1039 = arith.mulf %1013, %1038 : vector<8x128xf32>
    %1040 = arith.addf %986, %1039 : vector<8x128xf32>
    %1041 = vector.broadcast %249 : f32 to vector<8x128xf32>
    %1042 = arith.mulf %1013, %1041 : vector<8x128xf32>
    %1043 = arith.addf %989, %1042 : vector<8x128xf32>
    %1044 = vector.broadcast %250 : f32 to vector<8x128xf32>
    %1045 = arith.mulf %1013, %1044 : vector<8x128xf32>
    %1046 = arith.addf %992, %1045 : vector<8x128xf32>
    %1047 = vector.broadcast %251 : f32 to vector<8x128xf32>
    %1048 = arith.mulf %1013, %1047 : vector<8x128xf32>
    %1049 = arith.addf %995, %1048 : vector<8x128xf32>
    %1050 = vector.broadcast %252 : f32 to vector<8x128xf32>
    %1051 = arith.mulf %1013, %1050 : vector<8x128xf32>
    %1052 = arith.addf %998, %1051 : vector<8x128xf32>
    %1053 = vector.broadcast %253 : f32 to vector<8x128xf32>
    %1054 = arith.mulf %1013, %1053 : vector<8x128xf32>
    %1055 = arith.addf %1001, %1054 : vector<8x128xf32>
    %1056 = vector.broadcast %254 : f32 to vector<8x128xf32>
    %1057 = arith.mulf %1013, %1056 : vector<8x128xf32>
    %1058 = arith.addf %1004, %1057 : vector<8x128xf32>
    %1059 = vector.broadcast %255 : f32 to vector<8x128xf32>
    %1060 = arith.mulf %1013, %1059 : vector<8x128xf32>
    %1061 = arith.addf %1007, %1060 : vector<8x128xf32>
    %1062 = vector.broadcast %14 : f32 to vector<8x128xf32>
    %1063 = arith.mulf %321, %1062 : vector<8x128xf32>
    %1064 = vector.broadcast %30 : f32 to vector<8x128xf32>
    %1065 = arith.addf %1063, %1064 : vector<8x128xf32>
    %cst_15 = arith.constant 0.000000e+00 : f32
    %1066 = vector.broadcast %cst_15 : f32 to vector<8x128xf32>
    %1067 = arith.maximumf %1065, %1066 : vector<8x128xf32>
    %1068 = vector.broadcast %256 : f32 to vector<8x128xf32>
    %1069 = arith.mulf %1067, %1068 : vector<8x128xf32>
    %1070 = arith.addf %1016, %1069 : vector<8x128xf32>
    %1071 = vector.broadcast %257 : f32 to vector<8x128xf32>
    %1072 = arith.mulf %1067, %1071 : vector<8x128xf32>
    %1073 = arith.addf %1019, %1072 : vector<8x128xf32>
    %1074 = vector.broadcast %258 : f32 to vector<8x128xf32>
    %1075 = arith.mulf %1067, %1074 : vector<8x128xf32>
    %1076 = arith.addf %1022, %1075 : vector<8x128xf32>
    %1077 = vector.broadcast %259 : f32 to vector<8x128xf32>
    %1078 = arith.mulf %1067, %1077 : vector<8x128xf32>
    %1079 = arith.addf %1025, %1078 : vector<8x128xf32>
    %1080 = vector.broadcast %260 : f32 to vector<8x128xf32>
    %1081 = arith.mulf %1067, %1080 : vector<8x128xf32>
    %1082 = arith.addf %1028, %1081 : vector<8x128xf32>
    %1083 = vector.broadcast %261 : f32 to vector<8x128xf32>
    %1084 = arith.mulf %1067, %1083 : vector<8x128xf32>
    %1085 = arith.addf %1031, %1084 : vector<8x128xf32>
    %1086 = vector.broadcast %262 : f32 to vector<8x128xf32>
    %1087 = arith.mulf %1067, %1086 : vector<8x128xf32>
    %1088 = arith.addf %1034, %1087 : vector<8x128xf32>
    %1089 = vector.broadcast %263 : f32 to vector<8x128xf32>
    %1090 = arith.mulf %1067, %1089 : vector<8x128xf32>
    %1091 = arith.addf %1037, %1090 : vector<8x128xf32>
    %1092 = vector.broadcast %264 : f32 to vector<8x128xf32>
    %1093 = arith.mulf %1067, %1092 : vector<8x128xf32>
    %1094 = arith.addf %1040, %1093 : vector<8x128xf32>
    %1095 = vector.broadcast %265 : f32 to vector<8x128xf32>
    %1096 = arith.mulf %1067, %1095 : vector<8x128xf32>
    %1097 = arith.addf %1043, %1096 : vector<8x128xf32>
    %1098 = vector.broadcast %266 : f32 to vector<8x128xf32>
    %1099 = arith.mulf %1067, %1098 : vector<8x128xf32>
    %1100 = arith.addf %1046, %1099 : vector<8x128xf32>
    %1101 = vector.broadcast %267 : f32 to vector<8x128xf32>
    %1102 = arith.mulf %1067, %1101 : vector<8x128xf32>
    %1103 = arith.addf %1049, %1102 : vector<8x128xf32>
    %1104 = vector.broadcast %268 : f32 to vector<8x128xf32>
    %1105 = arith.mulf %1067, %1104 : vector<8x128xf32>
    %1106 = arith.addf %1052, %1105 : vector<8x128xf32>
    %1107 = vector.broadcast %269 : f32 to vector<8x128xf32>
    %1108 = arith.mulf %1067, %1107 : vector<8x128xf32>
    %1109 = arith.addf %1055, %1108 : vector<8x128xf32>
    %1110 = vector.broadcast %270 : f32 to vector<8x128xf32>
    %1111 = arith.mulf %1067, %1110 : vector<8x128xf32>
    %1112 = arith.addf %1058, %1111 : vector<8x128xf32>
    %1113 = vector.broadcast %271 : f32 to vector<8x128xf32>
    %1114 = arith.mulf %1067, %1113 : vector<8x128xf32>
    %1115 = arith.addf %1061, %1114 : vector<8x128xf32>
    %1116 = vector.broadcast %15 : f32 to vector<8x128xf32>
    %1117 = arith.mulf %321, %1116 : vector<8x128xf32>
    %1118 = vector.broadcast %31 : f32 to vector<8x128xf32>
    %1119 = arith.addf %1117, %1118 : vector<8x128xf32>
    %cst_16 = arith.constant 0.000000e+00 : f32
    %1120 = vector.broadcast %cst_16 : f32 to vector<8x128xf32>
    %1121 = arith.maximumf %1119, %1120 : vector<8x128xf32>
    %1122 = vector.broadcast %272 : f32 to vector<8x128xf32>
    %1123 = arith.mulf %1121, %1122 : vector<8x128xf32>
    %1124 = arith.addf %1070, %1123 : vector<8x128xf32>
    %1125 = vector.broadcast %273 : f32 to vector<8x128xf32>
    %1126 = arith.mulf %1121, %1125 : vector<8x128xf32>
    %1127 = arith.addf %1073, %1126 : vector<8x128xf32>
    %1128 = vector.broadcast %274 : f32 to vector<8x128xf32>
    %1129 = arith.mulf %1121, %1128 : vector<8x128xf32>
    %1130 = arith.addf %1076, %1129 : vector<8x128xf32>
    %1131 = vector.broadcast %275 : f32 to vector<8x128xf32>
    %1132 = arith.mulf %1121, %1131 : vector<8x128xf32>
    %1133 = arith.addf %1079, %1132 : vector<8x128xf32>
    %1134 = vector.broadcast %276 : f32 to vector<8x128xf32>
    %1135 = arith.mulf %1121, %1134 : vector<8x128xf32>
    %1136 = arith.addf %1082, %1135 : vector<8x128xf32>
    %1137 = vector.broadcast %277 : f32 to vector<8x128xf32>
    %1138 = arith.mulf %1121, %1137 : vector<8x128xf32>
    %1139 = arith.addf %1085, %1138 : vector<8x128xf32>
    %1140 = vector.broadcast %278 : f32 to vector<8x128xf32>
    %1141 = arith.mulf %1121, %1140 : vector<8x128xf32>
    %1142 = arith.addf %1088, %1141 : vector<8x128xf32>
    %1143 = vector.broadcast %279 : f32 to vector<8x128xf32>
    %1144 = arith.mulf %1121, %1143 : vector<8x128xf32>
    %1145 = arith.addf %1091, %1144 : vector<8x128xf32>
    %1146 = vector.broadcast %280 : f32 to vector<8x128xf32>
    %1147 = arith.mulf %1121, %1146 : vector<8x128xf32>
    %1148 = arith.addf %1094, %1147 : vector<8x128xf32>
    %1149 = vector.broadcast %281 : f32 to vector<8x128xf32>
    %1150 = arith.mulf %1121, %1149 : vector<8x128xf32>
    %1151 = arith.addf %1097, %1150 : vector<8x128xf32>
    %1152 = vector.broadcast %282 : f32 to vector<8x128xf32>
    %1153 = arith.mulf %1121, %1152 : vector<8x128xf32>
    %1154 = arith.addf %1100, %1153 : vector<8x128xf32>
    %1155 = vector.broadcast %283 : f32 to vector<8x128xf32>
    %1156 = arith.mulf %1121, %1155 : vector<8x128xf32>
    %1157 = arith.addf %1103, %1156 : vector<8x128xf32>
    %1158 = vector.broadcast %284 : f32 to vector<8x128xf32>
    %1159 = arith.mulf %1121, %1158 : vector<8x128xf32>
    %1160 = arith.addf %1106, %1159 : vector<8x128xf32>
    %1161 = vector.broadcast %285 : f32 to vector<8x128xf32>
    %1162 = arith.mulf %1121, %1161 : vector<8x128xf32>
    %1163 = arith.addf %1109, %1162 : vector<8x128xf32>
    %1164 = vector.broadcast %286 : f32 to vector<8x128xf32>
    %1165 = arith.mulf %1121, %1164 : vector<8x128xf32>
    %1166 = arith.addf %1112, %1165 : vector<8x128xf32>
    %1167 = vector.broadcast %287 : f32 to vector<8x128xf32>
    %1168 = arith.mulf %1121, %1167 : vector<8x128xf32>
    %1169 = arith.addf %1115, %1168 : vector<8x128xf32>
    %1170 = vector.broadcast %288 : f32 to vector<8x128xf32>
    %1171 = arith.addf %1124, %1170 : vector<8x128xf32>
    %cst_17 = arith.constant 0.000000e+00 : f32
    %1172 = vector.broadcast %cst_17 : f32 to vector<8x128xf32>
    %1173 = arith.maximumf %1171, %1172 : vector<8x128xf32>
    %1174 = vector.broadcast %304 : f32 to vector<8x128xf32>
    %1175 = arith.mulf %1173, %1174 : vector<8x128xf32>
    %1176 = vector.broadcast %289 : f32 to vector<8x128xf32>
    %1177 = arith.addf %1127, %1176 : vector<8x128xf32>
    %cst_18 = arith.constant 0.000000e+00 : f32
    %1178 = vector.broadcast %cst_18 : f32 to vector<8x128xf32>
    %1179 = arith.maximumf %1177, %1178 : vector<8x128xf32>
    %1180 = vector.broadcast %305 : f32 to vector<8x128xf32>
    %1181 = arith.mulf %1179, %1180 : vector<8x128xf32>
    %1182 = arith.addf %1175, %1181 : vector<8x128xf32>
    %1183 = vector.broadcast %290 : f32 to vector<8x128xf32>
    %1184 = arith.addf %1130, %1183 : vector<8x128xf32>
    %cst_19 = arith.constant 0.000000e+00 : f32
    %1185 = vector.broadcast %cst_19 : f32 to vector<8x128xf32>
    %1186 = arith.maximumf %1184, %1185 : vector<8x128xf32>
    %1187 = vector.broadcast %306 : f32 to vector<8x128xf32>
    %1188 = arith.mulf %1186, %1187 : vector<8x128xf32>
    %1189 = arith.addf %1182, %1188 : vector<8x128xf32>
    %1190 = vector.broadcast %291 : f32 to vector<8x128xf32>
    %1191 = arith.addf %1133, %1190 : vector<8x128xf32>
    %cst_20 = arith.constant 0.000000e+00 : f32
    %1192 = vector.broadcast %cst_20 : f32 to vector<8x128xf32>
    %1193 = arith.maximumf %1191, %1192 : vector<8x128xf32>
    %1194 = vector.broadcast %307 : f32 to vector<8x128xf32>
    %1195 = arith.mulf %1193, %1194 : vector<8x128xf32>
    %1196 = arith.addf %1189, %1195 : vector<8x128xf32>
    %1197 = vector.broadcast %292 : f32 to vector<8x128xf32>
    %1198 = arith.addf %1136, %1197 : vector<8x128xf32>
    %cst_21 = arith.constant 0.000000e+00 : f32
    %1199 = vector.broadcast %cst_21 : f32 to vector<8x128xf32>
    %1200 = arith.maximumf %1198, %1199 : vector<8x128xf32>
    %1201 = vector.broadcast %308 : f32 to vector<8x128xf32>
    %1202 = arith.mulf %1200, %1201 : vector<8x128xf32>
    %1203 = arith.addf %1196, %1202 : vector<8x128xf32>
    %1204 = vector.broadcast %293 : f32 to vector<8x128xf32>
    %1205 = arith.addf %1139, %1204 : vector<8x128xf32>
    %cst_22 = arith.constant 0.000000e+00 : f32
    %1206 = vector.broadcast %cst_22 : f32 to vector<8x128xf32>
    %1207 = arith.maximumf %1205, %1206 : vector<8x128xf32>
    %1208 = vector.broadcast %309 : f32 to vector<8x128xf32>
    %1209 = arith.mulf %1207, %1208 : vector<8x128xf32>
    %1210 = arith.addf %1203, %1209 : vector<8x128xf32>
    %1211 = vector.broadcast %294 : f32 to vector<8x128xf32>
    %1212 = arith.addf %1142, %1211 : vector<8x128xf32>
    %cst_23 = arith.constant 0.000000e+00 : f32
    %1213 = vector.broadcast %cst_23 : f32 to vector<8x128xf32>
    %1214 = arith.maximumf %1212, %1213 : vector<8x128xf32>
    %1215 = vector.broadcast %310 : f32 to vector<8x128xf32>
    %1216 = arith.mulf %1214, %1215 : vector<8x128xf32>
    %1217 = arith.addf %1210, %1216 : vector<8x128xf32>
    %1218 = vector.broadcast %295 : f32 to vector<8x128xf32>
    %1219 = arith.addf %1145, %1218 : vector<8x128xf32>
    %cst_24 = arith.constant 0.000000e+00 : f32
    %1220 = vector.broadcast %cst_24 : f32 to vector<8x128xf32>
    %1221 = arith.maximumf %1219, %1220 : vector<8x128xf32>
    %1222 = vector.broadcast %311 : f32 to vector<8x128xf32>
    %1223 = arith.mulf %1221, %1222 : vector<8x128xf32>
    %1224 = arith.addf %1217, %1223 : vector<8x128xf32>
    %1225 = vector.broadcast %296 : f32 to vector<8x128xf32>
    %1226 = arith.addf %1148, %1225 : vector<8x128xf32>
    %cst_25 = arith.constant 0.000000e+00 : f32
    %1227 = vector.broadcast %cst_25 : f32 to vector<8x128xf32>
    %1228 = arith.maximumf %1226, %1227 : vector<8x128xf32>
    %1229 = vector.broadcast %312 : f32 to vector<8x128xf32>
    %1230 = arith.mulf %1228, %1229 : vector<8x128xf32>
    %1231 = arith.addf %1224, %1230 : vector<8x128xf32>
    %1232 = vector.broadcast %297 : f32 to vector<8x128xf32>
    %1233 = arith.addf %1151, %1232 : vector<8x128xf32>
    %cst_26 = arith.constant 0.000000e+00 : f32
    %1234 = vector.broadcast %cst_26 : f32 to vector<8x128xf32>
    %1235 = arith.maximumf %1233, %1234 : vector<8x128xf32>
    %1236 = vector.broadcast %313 : f32 to vector<8x128xf32>
    %1237 = arith.mulf %1235, %1236 : vector<8x128xf32>
    %1238 = arith.addf %1231, %1237 : vector<8x128xf32>
    %1239 = vector.broadcast %298 : f32 to vector<8x128xf32>
    %1240 = arith.addf %1154, %1239 : vector<8x128xf32>
    %cst_27 = arith.constant 0.000000e+00 : f32
    %1241 = vector.broadcast %cst_27 : f32 to vector<8x128xf32>
    %1242 = arith.maximumf %1240, %1241 : vector<8x128xf32>
    %1243 = vector.broadcast %314 : f32 to vector<8x128xf32>
    %1244 = arith.mulf %1242, %1243 : vector<8x128xf32>
    %1245 = arith.addf %1238, %1244 : vector<8x128xf32>
    %1246 = vector.broadcast %299 : f32 to vector<8x128xf32>
    %1247 = arith.addf %1157, %1246 : vector<8x128xf32>
    %cst_28 = arith.constant 0.000000e+00 : f32
    %1248 = vector.broadcast %cst_28 : f32 to vector<8x128xf32>
    %1249 = arith.maximumf %1247, %1248 : vector<8x128xf32>
    %1250 = vector.broadcast %315 : f32 to vector<8x128xf32>
    %1251 = arith.mulf %1249, %1250 : vector<8x128xf32>
    %1252 = arith.addf %1245, %1251 : vector<8x128xf32>
    %1253 = vector.broadcast %300 : f32 to vector<8x128xf32>
    %1254 = arith.addf %1160, %1253 : vector<8x128xf32>
    %cst_29 = arith.constant 0.000000e+00 : f32
    %1255 = vector.broadcast %cst_29 : f32 to vector<8x128xf32>
    %1256 = arith.maximumf %1254, %1255 : vector<8x128xf32>
    %1257 = vector.broadcast %316 : f32 to vector<8x128xf32>
    %1258 = arith.mulf %1256, %1257 : vector<8x128xf32>
    %1259 = arith.addf %1252, %1258 : vector<8x128xf32>
    %1260 = vector.broadcast %301 : f32 to vector<8x128xf32>
    %1261 = arith.addf %1163, %1260 : vector<8x128xf32>
    %cst_30 = arith.constant 0.000000e+00 : f32
    %1262 = vector.broadcast %cst_30 : f32 to vector<8x128xf32>
    %1263 = arith.maximumf %1261, %1262 : vector<8x128xf32>
    %1264 = vector.broadcast %317 : f32 to vector<8x128xf32>
    %1265 = arith.mulf %1263, %1264 : vector<8x128xf32>
    %1266 = arith.addf %1259, %1265 : vector<8x128xf32>
    %1267 = vector.broadcast %302 : f32 to vector<8x128xf32>
    %1268 = arith.addf %1166, %1267 : vector<8x128xf32>
    %cst_31 = arith.constant 0.000000e+00 : f32
    %1269 = vector.broadcast %cst_31 : f32 to vector<8x128xf32>
    %1270 = arith.maximumf %1268, %1269 : vector<8x128xf32>
    %1271 = vector.broadcast %318 : f32 to vector<8x128xf32>
    %1272 = arith.mulf %1270, %1271 : vector<8x128xf32>
    %1273 = arith.addf %1266, %1272 : vector<8x128xf32>
    %1274 = vector.broadcast %303 : f32 to vector<8x128xf32>
    %1275 = arith.addf %1169, %1274 : vector<8x128xf32>
    %cst_32 = arith.constant 0.000000e+00 : f32
    %1276 = vector.broadcast %cst_32 : f32 to vector<8x128xf32>
    %1277 = arith.maximumf %1275, %1276 : vector<8x128xf32>
    %1278 = vector.broadcast %319 : f32 to vector<8x128xf32>
    %1279 = arith.mulf %1277, %1278 : vector<8x128xf32>
    %1280 = arith.addf %1273, %1279 : vector<8x128xf32>
    %1281 = vector.broadcast %320 : f32 to vector<8x128xf32>
    %1282 = arith.addf %1280, %1281 : vector<8x128xf32>
    %cst_33 = arith.constant 0.000000e+00 : f32
    %1283 = vector.broadcast %cst_33 : f32 to vector<8x128xf32>
    %1284 = arith.maximumf %1282, %1283 : vector<8x128xf32>
    %c0_34 = arith.constant 0 : index
    %c0_35 = arith.constant 0 : index
    %1285 = vector.load %arg3[%c0_34, %c0_35] : memref<8x128xf32, #tpu.memory_space<vmem>>, vector<8x128xf32>
    tpu.vector_store %arg3[%c0_34, %c0_35], %1284 {strides = array<i32>} : memref<8x128xf32, #tpu.memory_space<vmem>>, vector<8x128xf32>,
    return
  }
  func.func @transform_0(%arg0: i32, %arg1: memref<321xf32, #tpu.memory_space<smem>>) -> (i32, i32) {
    %c0_i32 = arith.constant 0 : i32
    %c0_i32_0 = arith.constant 0 : i32
    return %arg0, %c0_i32 : i32, i32
  }
  func.func @transform_1(%arg0: i32, %arg1: memref<321xf32, #tpu.memory_space<smem>>) -> (i32, i32) {
    %c0_i32 = arith.constant 0 : i32
    %c0_i32_0 = arith.constant 0 : i32
    return %arg0, %c0_i32 : i32, i32
  }
}

</mosaic_0001>

<llo_original>
// kernel: tpu_custom_call.1
$region0: #{tpu_custom_call.1}
  #allocation0 [shape = 'u32[]', space=smem, size = 0x4, offset = 0x4, fixed_abs, tag = 'smem constant byte address 0x4 - core index']
  #allocation1 [shape = 'u32[72,128]{1,0:T(1,128)}', space=vmem, size = 0x9000, scoped, tag = 'internal scratch']
  #allocation2 [shape = 's32[1]{0}', space=sflag, size = 0x4, scoped, tag = 'scoped memory for tpu_custom_call.1']
  #allocation3 [shape = 'u8[1536]{0}', space=smem, size = 0x600, scoped, tag = 'prefetched SMEM operand 0']
  %s0 = inlined_call_operand.hbm [shape: f32[321], index: 0, kind: input, shape index: {}]
  %s1 = inlined_call_operand.hbm [shape: f32[16,128], index: 1, kind: input, shape index: {}]
  %s2 = inlined_call_operand.hbm [shape: f32[16,128], index: 2, kind: output, shape index: {}]
  %s3 = sld [smem:[#allocation0]]
  $region41: #{tpu_custom_call.1} parent=0
    _
  %s5 = ssub.s32 1, %s3
  %s6 = scalar_select 0, %s5, %s3
  %s8 = sshll.u32 %s0, 4
  %s9 = int_to_ptr.hbm [resolvable:$true] %s8
  %11 = dma.hbm_to_smem %s9, 48, [#allocation3], [#allocation2]
  %13 = dma.done [#allocation2], 48
  %14 = sfence
  $region1: #{tpu_custom_call.1} parent=0
    #allocation4 [shape = 'u8[8192]{0}', space=vmem, size = 0x2000, scoped, tag = 'input window, operand 1']
    #allocation5 [shape = 's32[2]{0}', space=sflag, size = 0x8, scoped, tag = 'scoped memory for tpu_custom_call.1']
    #allocation6 [shape = 's32[2]{0}', space=sflag, size = 0x8, scoped, tag = 'scoped memory for tpu_custom_call.1']
    #allocation7 [shape = 'u8[8192]{0}', space=vmem, size = 0x2000, scoped, tag = 'output window, operand 0']
    %15 = vsyncpa [#allocation5], 0
    %s16 = scalar_lea.sflag [#allocation5], 1
    %17 = vsyncpa %s16, 0
    %18 = vsyncpa [#allocation6], 0
    %s19 = scalar_lea.sflag [#allocation6], 1
    %20 = vsyncpa %s19, 0
    loop: start=0, step=1, limit=4
    $region2: #{tpu_custom_call.1} parent=1 // loop_pre_header
      _
    $region3: #{tpu_custom_call.1} parent=1 // loop_header
      %s22 = sphi 0, %s26
      %p23 = scmp.ge.s32.totalorder %s22, 4
      %s32 = sphi 0, %s34
      %s35 = sphi 0, %s32
      %s36 = sphi 0, %s35
      %s52 = sphi 0, %s36
      %s58 = sphi 0, %s60
      %s61 = sphi 0, %s58
      %s62 = sphi 0, %s61
      %s78 = sphi 0, %s62
    $region4: #{tpu_custom_call.1} parent=1 // loop_header_branch
      %25 = sbr.rel (%p23) target = $region8
    $region5: #{tpu_custom_call.1} parent=1 // loop_body
      %s27 = ssub.s32 %s22, 1
      %s28 = ssub.s32 %s22, 2
      %s29 = sadd.s32 %s22, 1
      %s30 = ssub.s32 %s22, %s29
      %p31 = scmp.eq.s32.totalorder %s30, 0
      %s33 = sadd.s32 %s32, 1
      %s34 = scalar_select %p31, %s32, %s33
      %p37 = pneg %p31
      %p38 = scmp.eq.s32.totalorder %s22, 1
      %p39 = por %p37, %p38
      %p40 = scmp.ne.s32.totalorder %s32, %s35
      %p41 = scmp.eq.s32.totalorder %s22, 0
      %p42 = por %p40, %p41
      %p43 = scmp.ne.s32.totalorder %s32, %s35
      %p44 = scmp.eq.s32.totalorder %s27, 1
      %p45 = por %p43, %p44
      %p46 = scmp.ne.s32.totalorder %s35, %s36
      %p47 = scmp.eq.s32.totalorder %s27, 0
      %p48 = por %p46, %p47
      %p49 = scmp.ne.s32.totalorder %s35, %s36
      %p50 = scmp.eq.s32.totalorder %s28, 1
      %p51 = por %p49, %p50
      %p53 = scmp.ne.s32.totalorder %s36, %s52
      %p54 = scmp.eq.s32.totalorder %s28, 0
      %p55 = por %p53, %p54
      %s56 = ssub.s32 %s22, %s29
      %p57 = scmp.eq.s32.totalorder %s56, 0
      %s59 = sadd.s32 %s58, 1
      %s60 = scalar_select %p57, %s58, %s59
      %p63 = pneg %p57
      %p64 = scmp.eq.s32.totalorder %s22, 1
      %p65 = por %p63, %p64
      %p66 = scmp.ne.s32.totalorder %s58, %s61
      %p67 = scmp.eq.s32.totalorder %s22, 0
      %p68 = por %p66, %p67
      %p69 = scmp.ne.s32.totalorder %s58, %s61
      %p70 = scmp.eq.s32.totalorder %s27, 1
      %p71 = por %p69, %p70
      %p72 = scmp.ne.s32.totalorder %s61, %s62
      %p73 = scmp.eq.s32.totalorder %s27, 0
      %p74 = por %p72, %p73
      %p75 = scmp.ne.s32.totalorder %s61, %s62
      %p76 = scmp.eq.s32.totalorder %s28, 1
      %p77 = por %p75, %p76
      %p79 = scmp.ne.s32.totalorder %s62, %s78
      %p80 = scmp.eq.s32.totalorder %s28, 0
      %p81 = por %p79, %p80
      %p82 = scmp.le.s32.totalorder 1, %s22
      %p83 = scmp.lt.s32.totalorder %s22, 3
      %p84 = pnand %p82, %p83
      %p85 = pneg %p84
      // Predicated region
      $region9: #{tpu_custom_call.1} parent=5 // pred_check
        _
      $region10: #{tpu_custom_call.1} parent=5 // pred_check_branch
        %87 = sbr.rel (%p84) target = $region12
      $region11: #{tpu_custom_call.1} parent=5 // pred_region
        %s88 = ssub.s32 %s22, 1
      $region12: #{tpu_custom_call.1} parent=5 // pred_fallthru
        _
      %p89 = scmp.lt.s32.totalorder %s22, 2
      // Predicated region
      $region13: #{tpu_custom_call.1} parent=5 // pred_check
        %p90 = pneg %p89
      $region14: #{tpu_custom_call.1} parent=5 // pred_check_branch
        %92 = sbr.rel (%p90) target = $region16
      $region15: #{tpu_custom_call.1} parent=5 // pred_region
        // Predicated region
        $region17: #{tpu_custom_call.1} parent=15 // pred_check
          %p93 = pneg %p42
        $region18: #{tpu_custom_call.1} parent=15 // pred_check_branch
          %95 = sbr.rel (%p93) target = $region20
        $region19: #{tpu_custom_call.1} parent=15 // pred_region
          %s96 = sand.u32 %s32, 1
          %s97 = scalar_lea.sflag [#allocation5], %s96
          %s98 = sand.u32 %s32, 1
          %s99 = smul.addr %s98, 8
          %s100 = scalar_lea.vmem [#allocation4], %s99
          %102 = vsyncadd %s97, 0
          %s103 = smul.addr %s22, 8
          %s104 = scalar_lea.hbm %s1, %s103
          %s106 = sshll.u32 %s104, 4
          %s107 = int_to_ptr.hbm [resolvable:$true] %s106
          %s108 = sshll.u32 %s100, 4
          %s109 = int_to_ptr.vmem [resolvable:$true] %s108
          %111 = dma.hbm_to_vmem [thread:$0]  %s107, 128, %s109, %s97
        $region20: #{tpu_custom_call.1} parent=15 // pred_fallthru
          _
      $region16: #{tpu_custom_call.1} parent=5 // pred_fallthru
        _
      %p112 = scmp.le.s32.totalorder 1, %s22
      %p113 = scmp.lt.s32.totalorder %s22, 3
      %p114 = pnand %p112, %p113
      %p115 = pneg %p114
      // Predicated region
      $region21: #{tpu_custom_call.1} parent=5 // pred_check
        _
      $region22: #{tpu_custom_call.1} parent=5 // pred_check_branch
        %117 = sbr.rel (%p114) target = $region24
      $region23: #{tpu_custom_call.1} parent=5 // pred_region
        %s118 = ssub.s32 %s22, 1
        %s119 = sand.u32 %s35, 1
        %s120 = scalar_lea.sflag [#allocation5], %s119
        %s121 = sand.u32 %s35, 1
        %s122 = smul.addr %s121, 8
        %s123 = scalar_lea.vmem [#allocation4], %s122
        // Predicated region
        $region25: #{tpu_custom_call.1} parent=23 // pred_check
          %p124 = pneg %p48
        $region26: #{tpu_custom_call.1} parent=23 // pred_check_branch
          %126 = sbr.rel (%p124) target = $region28
        $region27: #{tpu_custom_call.1} parent=23 // pred_region
          %128 = dma.done %s120, 128
        $region28: #{tpu_custom_call.1} parent=23 // pred_fallthru
          _
        %s129 = sand.u32 %s35, 1
        %s130 = scalar_lea.sflag [#allocation5], %s129
        %s131 = sand.u32 %s35, 1
        %s132 = smul.addr %s131, 8
        %s133 = scalar_lea.vmem [#allocation4], %s132
        %p134 = pneg %p48
        %p135 = pneg %p45
        %p136 = pneg %p74
        %p137 = pneg %p71
        %s138 = sand.u32 %s61, 1
        %s139 = scalar_lea.sflag [#allocation6], %s138
        %s140 = sand.u32 %s61, 1
        %s141 = smul.addr %s140, 8
        %s142 = scalar_lea.vmem [#allocation7], %s141
        %s143 = sld [smem:[#allocation3]]
        %s144 = sld [smem:[#allocation3 + $0x1]]
        %s145 = sld [smem:[#allocation3 + $0x2]]
        %s146 = sld [smem:[#allocation3 + $0x3]]
        %s147 = sld [smem:[#allocation3 + $0x4]]
        %s148 = sld [smem:[#allocation3 + $0x5]]
        %s149 = sld [smem:[#allocation3 + $0x6]]
        %s150 = sld [smem:[#allocation3 + $0x7]]
        %s151 = sld [smem:[#allocation3 + $0x8]]
        %s152 = sld [smem:[#allocation3 + $0x9]]
        %s153 = sld [smem:[#allocation3 + $0xa]]
        %s154 = sld [smem:[#allocation3 + $0xb]]
        %s155 = sld [smem:[#allocation3 + $0xc]]
        %s156 = sld [smem:[#allocation3 + $0xd]]
        %s157 = sld [smem:[#allocation3 + $0xe]]
        %s158 = sld [smem:[#allocation3 + $0xf]]
        %s159 = sld [smem:[#allocation3 + $0x10]]
        %s160 = sld [smem:[#allocation3 + $0x11]]
        %s161 = sld [smem:[#allocation3 + $0x12]]
        %s162 = sld [smem:[#allocation3 + $0x13]]
        %s163 = sld [smem:[#allocation3 + $0x14]]
        %s164 = sld [smem:[#allocation3 + $0x15]]
        %s165 = sld [smem:[#allocation3 + $0x16]]
        %s166 = sld [smem:[#allocation3 + $0x17]]
        %s167 = sld [smem:[#allocation3 + $0x18]]
        %s168 = sld [smem:[#allocation3 + $0x19]]
        %s169 = sld [smem:[#allocation3 + $0x1a]]
        %s170 = sld [smem:[#allocation3 + $0x1b]]
        %s171 = sld [smem:[#allocation3 + $0x1c]]
        %s172 = sld [smem:[#allocation3 + $0x1d]]
        %s173 = sld [smem:[#allocation3 + $0x1e]]
        %s174 = sld [smem:[#allocation3 + $0x1f]]
        %s175 = sld [smem:[#allocation3 + $0x20]]
        %s176 = sld [smem:[#allocation3 + $0x21]]
        %s177 = sld [smem:[#allocation3 + $0x22]]
        %s178 = sld [smem:[#allocation3 + $0x23]]
        %s179 = sld [smem:[#allocation3 + $0x24]]
        %s180 = sld [smem:[#allocation3 + $0x25]]
        %s181 = sld [smem:[#allocation3 + $0x26]]
        %s182 = sld [smem:[#allocation3 + $0x27]]
        %s183 = sld [smem:[#allocation3 + $0x28]]
        %s184 = sld [smem:[#allocation3 + $0x29]]
        %s185 = sld [smem:[#allocation3 + $0x2a]]
        %s186 = sld [smem:[#allocation3 + $0x2b]]
        %s187 = sld [smem:[#allocation3 + $0x2c]]
        %s188 = sld [smem:[#allocation3 + $0x2d]]
        %s189 = sld [smem:[#allocation3 + $0x2e]]
        %s190 = sld [smem:[#allocation3 + $0x2f]]
        %s191 = sld [smem:[#allocation3 + $0x30]]
        %s192 = sld [smem:[#allocation3 + $0x31]]
        %s193 = sld [smem:[#allocation3 + $0x32]]
        %s194 = sld [smem:[#allocation3 + $0x33]]
        %s195 = sld [smem:[#allocation3 + $0x34]]
        %s196 = sld [smem:[#allocation3 + $0x35]]
        %s197 = sld [smem:[#allocation3 + $0x36]]
        %s198 = sld [smem:[#allocation3 + $0x37]]
        %s199 = sld [smem:[#allocation3 + $0x38]]
        %s200 = sld [smem:[#allocation3 + $0x39]]
        %s201 = sld [smem:[#allocation3 + $0x3a]]
        %s202 = sld [smem:[#allocation3 + $0x3b]]
        %s203 = sld [smem:[#allocation3 + $0x3c]]
        %s204 = sld [smem:[#allocation3 + $0x3d]]
        %s205 = sld [smem:[#allocation3 + $0x3e]]
        %s206 = sld [smem:[#allocation3 + $0x3f]]
        %s207 = sld [smem:[#allocation3 + $0x40]]
        %s208 = sld [smem:[#allocation3 + $0x41]]
        %s209 = sld [smem:[#allocation3 + $0x42]]
        %s210 = sld [smem:[#allocation3 + $0x43]]
        %s211 = sld [smem:[#allocation3 + $0x44]]
        %s212 = sld [smem:[#allocation3 + $0x45]]
        %s213 = sld [smem:[#allocation3 + $0x46]]
        %s214 = sld [smem:[#allocation3 + $0x47]]
        %s215 = sld [smem:[#allocation3 + $0x48]]
        %s216 = sld [smem:[#allocation3 + $0x49]]
        %s217 = sld [smem:[#allocation3 + $0x4a]]
        %s218 = sld [smem:[#allocation3 + $0x4b]]
        %s219 = sld [smem:[#allocation3 + $0x4c]]
        %s220 = sld [smem:[#allocation3 + $0x4d]]
        %s221 = sld [smem:[#allocation3 + $0x4e]]
        %s222 = sld [smem:[#allocation3 + $0x4f]]
        %s223 = sld [smem:[#allocation3 + $0x50]]
        %s224 = sld [smem:[#allocation3 + $0x51]]
        %s225 = sld [smem:[#allocation3 + $0x52]]
        %s226 = sld [smem:[#allocation3 + $0x53]]
        %s227 = sld [smem:[#allocation3 + $0x54]]
        %s228 = sld [smem:[#allocation3 + $0x55]]
        %s229 = sld [smem:[#allocation3 + $0x56]]
        %s230 = sld [smem:[#allocation3 + $0x57]]
        %s231 = sld [smem:[#allocation3 + $0x58]]
        %s232 = sld [smem:[#allocation3 + $0x59]]
        %s233 = sld [smem:[#allocation3 + $0x5a]]
        %s234 = sld [smem:[#allocation3 + $0x5b]]
        %s235 = sld [smem:[#allocation3 + $0x5c]]
        %s236 = sld [smem:[#allocation3 + $0x5d]]
        %s237 = sld [smem:[#allocation3 + $0x5e]]
        %s238 = sld [smem:[#allocation3 + $0x5f]]
        %s239 = sld [smem:[#allocation3 + $0x60]]
        %s240 = sld [smem:[#allocation3 + $0x61]]
        %s241 = sld [smem:[#allocation3 + $0x62]]
        %s242 = sld [smem:[#allocation3 + $0x63]]
        %s243 = sld [smem:[#allocation3 + $0x64]]
        %s244 = sld [smem:[#allocation3 + $0x65]]
        %s245 = sld [smem:[#allocation3 + $0x66]]
        %s246 = sld [smem:[#allocation3 + $0x67]]
        %s247 = sld [smem:[#allocation3 + $0x68]]
        %s248 = sld [smem:[#allocation3 + $0x69]]
        %s249 = sld [smem:[#allocation3 + $0x6a]]
        %s250 = sld [smem:[#allocation3 + $0x6b]]
        %s251 = sld [smem:[#allocation3 + $0x6c]]
        %s252 = sld [smem:[#allocation3 + $0x6d]]
        %s253 = sld [smem:[#allocation3 + $0x6e]]
        %s254 = sld [smem:[#allocation3 + $0x6f]]
        %s255 = sld [smem:[#allocation3 + $0x70]]
        %s256 = sld [smem:[#allocation3 + $0x71]]
        %s257 = sld [smem:[#allocation3 + $0x72]]
        %s258 = sld [smem:[#allocation3 + $0x73]]
        %s259 = sld [smem:[#allocation3 + $0x74]]
        %s260 = sld [smem:[#allocation3 + $0x75]]
        %s261 = sld [smem:[#allocation3 + $0x76]]
        %s262 = sld [smem:[#allocation3 + $0x77]]
        %s263 = sld [smem:[#allocation3 + $0x78]]
        %s264 = sld [smem:[#allocation3 + $0x79]]
        %s265 = sld [smem:[#allocation3 + $0x7a]]
        %s266 = sld [smem:[#allocation3 + $0x7b]]
        %s267 = sld [smem:[#allocation3 + $0x7c]]
        %s268 = sld [smem:[#allocation3 + $0x7d]]
        %s269 = sld [smem:[#allocation3 + $0x7e]]
        %s270 = sld [smem:[#allocation3 + $0x7f]]
        %s271 = sld [smem:[#allocation3 + $0x80]]
        %s272 = sld [smem:[#allocation3 + $0x81]]
        %s273 = sld [smem:[#allocation3 + $0x82]]
        %s274 = sld [smem:[#allocation3 + $0x83]]
        %s275 = sld [smem:[#allocation3 + $0x84]]
        %s276 = sld [smem:[#allocation3 + $0x85]]
        %s277 = sld [smem:[#allocation3 + $0x86]]
        %s278 = sld [smem:[#allocation3 + $0x87]]
        %s279 = sld [smem:[#allocation3 + $0x88]]
        %s280 = sld [smem:[#allocation3 + $0x89]]
        %s281 = sld [smem:[#allocation3 + $0x8a]]
        %s282 = sld [smem:[#allocation3 + $0x8b]]
        %s283 = sld [smem:[#allocation3 + $0x8c]]
        %s284 = sld [smem:[#allocation3 + $0x8d]]
        %s285 = sld [smem:[#allocation3 + $0x8e]]
        %s286 = sld [smem:[#allocation3 + $0x8f]]
        %s287 = sld [smem:[#allocation3 + $0x90]]
        %s288 = sld [smem:[#allocation3 + $0x91]]
        %s289 = sld [smem:[#allocation3 + $0x92]]
        %s290 = sld [smem:[#allocation3 + $0x93]]
        %s291 = sld [smem:[#allocation3 + $0x94]]
        %s292 = sld [smem:[#allocation3 + $0x95]]
        %s293 = sld [smem:[#allocation3 + $0x96]]
        %s294 = sld [smem:[#allocation3 + $0x97]]
        %s295 = sld [smem:[#allocation3 + $0x98]]
        %s296 = sld [smem:[#allocation3 + $0x99]]
        %s297 = sld [smem:[#allocation3 + $0x9a]]
        %s298 = sld [smem:[#allocation3 + $0x9b]]
        %s299 = sld [smem:[#allocation3 + $0x9c]]
        %s300 = sld [smem:[#allocation3 + $0x9d]]
        %s301 = sld [smem:[#allocation3 + $0x9e]]
        %s302 = sld [smem:[#allocation3 + $0x9f]]
        %s303 = sld [smem:[#allocation3 + $0xa0]]
        %s304 = sld [smem:[#allocation3 + $0xa1]]
        %s305 = sld [smem:[#allocation3 + $0xa2]]
        %s306 = sld [smem:[#allocation3 + $0xa3]]
        %s307 = sld [smem:[#allocation3 + $0xa4]]
        %s308 = sld [smem:[#allocation3 + $0xa5]]
        %s309 = sld [smem:[#allocation3 + $0xa6]]
        %s310 = sld [smem:[#allocation3 + $0xa7]]
        %s311 = sld [smem:[#allocation3 + $0xa8]]
        %s312 = sld [smem:[#allocation3 + $0xa9]]
        %s313 = sld [smem:[#allocation3 + $0xaa]]
        %s314 = sld [smem:[#allocation3 + $0xab]]
        %s315 = sld [smem:[#allocation3 + $0xac]]
        %s316 = sld [smem:[#allocation3 + $0xad]]
        %s317 = sld [smem:[#allocation3 + $0xae]]
        %s318 = sld [smem:[#allocation3 + $0xaf]]
        %s319 = sld [smem:[#allocation3 + $0xb0]]
        %s320 = sld [smem:[#allocation3 + $0xb1]]
        %s321 = sld [smem:[#allocation3 + $0xb2]]
        %s322 = sld [smem:[#allocation3 + $0xb3]]
        %s323 = sld [smem:[#allocation3 + $0xb4]]
        %s324 = sld [smem:[#allocation3 + $0xb5]]
        %s325 = sld [smem:[#allocation3 + $0xb6]]
        %s326 = sld [smem:[#allocation3 + $0xb7]]
        %s327 = sld [smem:[#allocation3 + $0xb8]]
        %s328 = sld [smem:[#allocation3 + $0xb9]]
        %s329 = sld [smem:[#allocation3 + $0xba]]
        %s330 = sld [smem:[#allocation3 + $0xbb]]
        %s331 = sld [smem:[#allocation3 + $0xbc]]
        %s332 = sld [smem:[#allocation3 + $0xbd]]
        %s333 = sld [smem:[#allocation3 + $0xbe]]
        %s334 = sld [smem:[#allocation3 + $0xbf]]
        %s335 = sld [smem:[#allocation3 + $0xc0]]
        %s336 = sld [smem:[#allocation3 + $0xc1]]
        %s337 = sld [smem:[#allocation3 + $0xc2]]
        %s338 = sld [smem:[#allocation3 + $0xc3]]
        %s339 = sld [smem:[#allocation3 + $0xc4]]
        %s340 = sld [smem:[#allocation3 + $0xc5]]
        %s341 = sld [smem:[#allocation3 + $0xc6]]
        %s342 = sld [smem:[#allocation3 + $0xc7]]
        %s343 = sld [smem:[#allocation3 + $0xc8]]
        %s344 = sld [smem:[#allocation3 + $0xc9]]
        %s345 = sld [smem:[#allocation3 + $0xca]]
        %s346 = sld [smem:[#allocation3 + $0xcb]]
        %s347 = sld [smem:[#allocation3 + $0xcc]]
        %s348 = sld [smem:[#allocation3 + $0xcd]]
        %s349 = sld [smem:[#allocation3 + $0xce]]
        %s350 = sld [smem:[#allocation3 + $0xcf]]
        %s351 = sld [smem:[#allocation3 + $0xd0]]
        %s352 = sld [smem:[#allocation3 + $0xd1]]
        %s353 = sld [smem:[#allocation3 + $0xd2]]
        %s354 = sld [smem:[#allocation3 + $0xd3]]
        %s355 = sld [smem:[#allocation3 + $0xd4]]
        %s356 = sld [smem:[#allocation3 + $0xd5]]
        %s357 = sld [smem:[#allocation3 + $0xd6]]
        %s358 = sld [smem:[#allocation3 + $0xd7]]
        %s359 = sld [smem:[#allocation3 + $0xd8]]
        %s360 = sld [smem:[#allocation3 + $0xd9]]
        %s361 = sld [smem:[#allocation3 + $0xda]]
        %s362 = sld [smem:[#allocation3 + $0xdb]]
        %s363 = sld [smem:[#allocation3 + $0xdc]]
        %s364 = sld [smem:[#allocation3 + $0xdd]]
        %s365 = sld [smem:[#allocation3 + $0xde]]
        %s366 = sld [smem:[#allocation3 + $0xdf]]
        %s367 = sld [smem:[#allocation3 + $0xe0]]
        %s368 = sld [smem:[#allocation3 + $0xe1]]
        %s369 = sld [smem:[#allocation3 + $0xe2]]
        %s370 = sld [smem:[#allocation3 + $0xe3]]
        %s371 = sld [smem:[#allocation3 + $0xe4]]
        %s372 = sld [smem:[#allocation3 + $0xe5]]
        %s373 = sld [smem:[#allocation3 + $0xe6]]
        %s374 = sld [smem:[#allocation3 + $0xe7]]
        %s375 = sld [smem:[#allocation3 + $0xe8]]
        %s376 = sld [smem:[#allocation3 + $0xe9]]
        %s377 = sld [smem:[#allocation3 + $0xea]]
        %s378 = sld [smem:[#allocation3 + $0xeb]]
        %s379 = sld [smem:[#allocation3 + $0xec]]
        %s380 = sld [smem:[#allocation3 + $0xed]]
        %s381 = sld [smem:[#allocation3 + $0xee]]
        %s382 = sld [smem:[#allocation3 + $0xef]]
        %s383 = sld [smem:[#allocation3 + $0xf0]]
        %s384 = sld [smem:[#allocation3 + $0xf1]]
        %s385 = sld [smem:[#allocation3 + $0xf2]]
        %s386 = sld [smem:[#allocation3 + $0xf3]]
        %s387 = sld [smem:[#allocation3 + $0xf4]]
        %s388 = sld [smem:[#allocation3 + $0xf5]]
        %s389 = sld [smem:[#allocation3 + $0xf6]]
        %s390 = sld [smem:[#allocation3 + $0xf7]]
        %s391 = sld [smem:[#allocation3 + $0xf8]]
        %s392 = sld [smem:[#allocation3 + $0xf9]]
        %s393 = sld [smem:[#allocation3 + $0xfa]]
        %s394 = sld [smem:[#allocation3 + $0xfb]]
        %s395 = sld [smem:[#allocation3 + $0xfc]]
        %s396 = sld [smem:[#allocation3 + $0xfd]]
        %s397 = sld [smem:[#allocation3 + $0xfe]]
        %s398 = sld [smem:[#allocation3 + $0xff]]
        %s399 = sld [smem:[#allocation3 + $0x100]]
        %s400 = sld [smem:[#allocation3 + $0x101]]
        %s401 = sld [smem:[#allocation3 + $0x102]]
        %s402 = sld [smem:[#allocation3 + $0x103]]
        %s403 = sld [smem:[#allocation3 + $0x104]]
        %s404 = sld [smem:[#allocation3 + $0x105]]
        %s405 = sld [smem:[#allocation3 + $0x106]]
        %s406 = sld [smem:[#allocation3 + $0x107]]
        %s407 = sld [smem:[#allocation3 + $0x108]]
        %s408 = sld [smem:[#allocation3 + $0x109]]
        %s409 = sld [smem:[#allocation3 + $0x10a]]
        %s410 = sld [smem:[#allocation3 + $0x10b]]
        %s411 = sld [smem:[#allocation3 + $0x10c]]
        %s412 = sld [smem:[#allocation3 + $0x10d]]
        %s413 = sld [smem:[#allocation3 + $0x10e]]
        %s414 = sld [smem:[#allocation3 + $0x10f]]
        %s415 = sld [smem:[#allocation3 + $0x110]]
        %s416 = sld [smem:[#allocation3 + $0x111]]
        %s417 = sld [smem:[#allocation3 + $0x112]]
        %s418 = sld [smem:[#allocation3 + $0x113]]
        %s419 = sld [smem:[#allocation3 + $0x114]]
        %s420 = sld [smem:[#allocation3 + $0x115]]
        %s421 = sld [smem:[#allocation3 + $0x116]]
        %s422 = sld [smem:[#allocation3 + $0x117]]
        %s423 = sld [smem:[#allocation3 + $0x118]]
        %s424 = sld [smem:[#allocation3 + $0x119]]
        %s425 = sld [smem:[#allocation3 + $0x11a]]
        %s426 = sld [smem:[#allocation3 + $0x11b]]
        %s427 = sld [smem:[#allocation3 + $0x11c]]
        %s428 = sld [smem:[#allocation3 + $0x11d]]
        %s429 = sld [smem:[#allocation3 + $0x11e]]
        %s430 = sld [smem:[#allocation3 + $0x11f]]
        %s431 = sld [smem:[#allocation3 + $0x120]]
        %s432 = sld [smem:[#allocation3 + $0x121]]
        %s433 = sld [smem:[#allocation3 + $0x122]]
        %s434 = sld [smem:[#allocation3 + $0x123]]
        %s435 = sld [smem:[#allocation3 + $0x124]]
        %s436 = sld [smem:[#allocation3 + $0x125]]
        %s437 = sld [smem:[#allocation3 + $0x126]]
        %s438 = sld [smem:[#allocation3 + $0x127]]
        %s439 = sld [smem:[#allocation3 + $0x128]]
        %s440 = sld [smem:[#allocation3 + $0x129]]
        %s441 = sld [smem:[#allocation3 + $0x12a]]
        %s442 = sld [smem:[#allocation3 + $0x12b]]
        %s443 = sld [smem:[#allocation3 + $0x12c]]
        %s444 = sld [smem:[#allocation3 + $0x12d]]
        %s445 = sld [smem:[#allocation3 + $0x12e]]
        %s446 = sld [smem:[#allocation3 + $0x12f]]
        %s447 = sld [smem:[#allocation3 + $0x130]]
        %s448 = sld [smem:[#allocation3 + $0x131]]
        %s449 = sld [smem:[#allocation3 + $0x132]]
        %s450 = sld [smem:[#allocation3 + $0x133]]
        %s451 = sld [smem:[#allocation3 + $0x134]]
        %s452 = sld [smem:[#allocation3 + $0x135]]
        %s453 = sld [smem:[#allocation3 + $0x136]]
        %s454 = sld [smem:[#allocation3 + $0x137]]
        %s455 = sld [smem:[#allocation3 + $0x138]]
        %s456 = sld [smem:[#allocation3 + $0x139]]
        %s457 = sld [smem:[#allocation3 + $0x13a]]
        %s458 = sld [smem:[#allocation3 + $0x13b]]
        %s459 = sld [smem:[#allocation3 + $0x13c]]
        %s460 = sld [smem:[#allocation3 + $0x13d]]
        %s461 = sld [smem:[#allocation3 + $0x13e]]
        %s462 = sld [smem:[#allocation3 + $0x13f]]
        %s463 = sld [smem:[#allocation3 + $0x140]]
        %v464 = vld [vmem:[%s123] sm:$0xff]
        %v465 = vstv %s143
        %v466 = vmul.f32 %v464, %v465
        %v467 = vstv %s159
        %v468 = vadd.f32 %v466, %v467
        %v469 = vmax.f32 %v468, 0.0
        %v470 = vstv %s175
        %v471 = vmul.f32 %v469, %v470
        %v472 = vstv %s176
        %v473 = vmul.f32 %v469, %v472
        %v474 = vstv %s177
        %v475 = vmul.f32 %v469, %v474
        %v476 = vstv %s178
        %v477 = vmul.f32 %v469, %v476
        %v478 = vstv %s179
        %v479 = vmul.f32 %v469, %v478
        %v480 = vstv %s180
        %v481 = vmul.f32 %v469, %v480
        %v482 = vstv %s181
        %v483 = vmul.f32 %v469, %v482
        %v484 = vstv %s182
        %v485 = vmul.f32 %v469, %v484
        %v486 = vstv %s183
        %v487 = vmul.f32 %v469, %v486
        %v488 = vstv %s184
        %v489 = vmul.f32 %v469, %v488
        %v490 = vstv %s185
        %v491 = vmul.f32 %v469, %v490
        %v492 = vstv %s186
        %v493 = vmul.f32 %v469, %v492
        %v494 = vstv %s187
        %v495 = vmul.f32 %v469, %v494
        %v496 = vstv %s188
        %v497 = vmul.f32 %v469, %v496
        %v498 = vstv %s189
        %v499 = vmul.f32 %v469, %v498
        %v500 = vstv %s190
        %v501 = vmul.f32 %v469, %v500
        %v502 = vstv %s144
        %v503 = vmul.f32 %v464, %v502
        %v504 = vstv %s160
        %v505 = vadd.f32 %v503, %v504
        %v506 = vmax.f32 %v505, 0.0
        %v507 = vstv %s191
        %v508 = vmul.f32 %v506, %v507
        %v509 = vadd.f32 %v471, %v508
        %v510 = vstv %s192
        %v511 = vmul.f32 %v506, %v510
        %v512 = vadd.f32 %v473, %v511
        %v513 = vstv %s193
        %v514 = vmul.f32 %v506, %v513
        %v515 = vadd.f32 %v475, %v514
        %v516 = vstv %s194
        %v517 = vmul.f32 %v506, %v516
        %v518 = vadd.f32 %v477, %v517
        %v519 = vstv %s195
        %v520 = vmul.f32 %v506, %v519
        %v521 = vadd.f32 %v479, %v520
        %v522 = vstv %s196
        %v523 = vmul.f32 %v506, %v522
        %v524 = vadd.f32 %v481, %v523
        %v525 = vstv %s197
        %v526 = vmul.f32 %v506, %v525
        %v527 = vadd.f32 %v483, %v526
        %v528 = vstv %s198
        %v529 = vmul.f32 %v506, %v528
        %v530 = vadd.f32 %v485, %v529
        %v531 = vstv %s199
        %v532 = vmul.f32 %v506, %v531
        %v533 = vadd.f32 %v487, %v532
        %v534 = vstv %s200
        %v535 = vmul.f32 %v506, %v534
        %v536 = vadd.f32 %v489, %v535
        %v537 = vstv %s201
        %v538 = vmul.f32 %v506, %v537
        %v539 = vadd.f32 %v491, %v538
        %v540 = vstv %s202
        %v541 = vmul.f32 %v506, %v540
        %v542 = vadd.f32 %v493, %v541
        %v543 = vstv %s203
        %v544 = vmul.f32 %v506, %v543
        %v545 = vadd.f32 %v495, %v544
        %v546 = vstv %s204
        %v547 = vmul.f32 %v506, %v546
        %v548 = vadd.f32 %v497, %v547
        %v549 = vstv %s205
        %v550 = vmul.f32 %v506, %v549
        %v551 = vadd.f32 %v499, %v550
        %v552 = vstv %s206
        %v553 = vmul.f32 %v506, %v552
        %v554 = vadd.f32 %v501, %v553
        %v555 = vstv %s145
        %v556 = vmul.f32 %v464, %v555
        %v557 = vstv %s161
        %v558 = vadd.f32 %v556, %v557
        %v559 = vmax.f32 %v558, 0.0
        %v560 = vstv %s207
        %v561 = vmul.f32 %v559, %v560
        %v562 = vadd.f32 %v509, %v561
        %v563 = vstv %s208
        %v564 = vmul.f32 %v559, %v563
        %v565 = vadd.f32 %v512, %v564
        %v566 = vstv %s209
        %v567 = vmul.f32 %v559, %v566
        %v568 = vadd.f32 %v515, %v567
        %v569 = vstv %s210
        %v570 = vmul.f32 %v559, %v569
        %v571 = vadd.f32 %v518, %v570
        %v572 = vstv %s211
        %v573 = vmul.f32 %v559, %v572
        %v574 = vadd.f32 %v521, %v573
        %v575 = vstv %s212
        %v576 = vmul.f32 %v559, %v575
        %v577 = vadd.f32 %v524, %v576
        %v578 = vstv %s213
        %v579 = vmul.f32 %v559, %v578
        %v580 = vadd.f32 %v527, %v579
        %v581 = vstv %s214
        %v582 = vmul.f32 %v559, %v581
        %v583 = vadd.f32 %v530, %v582
        %v584 = vstv %s215
        %v585 = vmul.f32 %v559, %v584
        %v586 = vadd.f32 %v533, %v585
        %v587 = vstv %s216
        %v588 = vmul.f32 %v559, %v587
        %v589 = vadd.f32 %v536, %v588
        %v590 = vstv %s217
        %v591 = vmul.f32 %v559, %v590
        %v592 = vadd.f32 %v539, %v591
        %v593 = vstv %s218
        %v594 = vmul.f32 %v559, %v593
        %v595 = vadd.f32 %v542, %v594
        %v596 = vstv %s219
        %v597 = vmul.f32 %v559, %v596
        %v598 = vadd.f32 %v545, %v597
        %v599 = vstv %s220
        %v600 = vmul.f32 %v559, %v599
        %v601 = vadd.f32 %v548, %v600
        %v602 = vstv %s221
        %v603 = vmul.f32 %v559, %v602
        %v604 = vadd.f32 %v551, %v603
        %v605 = vstv %s222
        %v606 = vmul.f32 %v559, %v605
        %v607 = vadd.f32 %v554, %v606
        %v608 = vstv %s146
        %v609 = vmul.f32 %v464, %v608
        %v610 = vstv %s162
        %v611 = vadd.f32 %v609, %v610
        %v612 = vmax.f32 %v611, 0.0
        %v613 = vstv %s223
        %v614 = vmul.f32 %v612, %v613
        %v615 = vadd.f32 %v562, %v614
        %v616 = vstv %s224
        %v617 = vmul.f32 %v612, %v616
        %v618 = vadd.f32 %v565, %v617
        %v619 = vstv %s225
        %v620 = vmul.f32 %v612, %v619
        %v621 = vadd.f32 %v568, %v620
        %v622 = vstv %s226
        %v623 = vmul.f32 %v612, %v622
        %v624 = vadd.f32 %v571, %v623
        %v625 = vstv %s227
        %v626 = vmul.f32 %v612, %v625
        %v627 = vadd.f32 %v574, %v626
        %v628 = vstv %s228
        %v629 = vmul.f32 %v612, %v628
        %v630 = vadd.f32 %v577, %v629
        %v631 = vstv %s229
        %v632 = vmul.f32 %v612, %v631
        %v633 = vadd.f32 %v580, %v632
        %v634 = vstv %s230
        %v635 = vmul.f32 %v612, %v634
        %v636 = vadd.f32 %v583, %v635
        %v637 = vstv %s231
        %v638 = vmul.f32 %v612, %v637
        %v639 = vadd.f32 %v586, %v638
        %v640 = vstv %s232
        %v641 = vmul.f32 %v612, %v640
        %v642 = vadd.f32 %v589, %v641
        %v643 = vstv %s233
        %v644 = vmul.f32 %v612, %v643
        %v645 = vadd.f32 %v592, %v644
        %v646 = vstv %s234
        %v647 = vmul.f32 %v612, %v646
        %v648 = vadd.f32 %v595, %v647
        %v649 = vstv %s235
        %v650 = vmul.f32 %v612, %v649
        %v651 = vadd.f32 %v598, %v650
        %v652 = vstv %s236
        %v653 = vmul.f32 %v612, %v652
        %v654 = vadd.f32 %v601, %v653
        %v655 = vstv %s237
        %v656 = vmul.f32 %v612, %v655
        %v657 = vadd.f32 %v604, %v656
        %v658 = vstv %s238
        %v659 = vmul.f32 %v612, %v658
        %v660 = vadd.f32 %v607, %v659
        %v661 = vstv %s147
        %v662 = vmul.f32 %v464, %v661
        %v663 = vstv %s163
        %v664 = vadd.f32 %v662, %v663
        %v665 = vmax.f32 %v664, 0.0
        %v666 = vstv %s239
        %v667 = vmul.f32 %v665, %v666
        %v668 = vadd.f32 %v615, %v667
        %v669 = vstv %s240
        %v670 = vmul.f32 %v665, %v669
        %v671 = vadd.f32 %v618, %v670
        %v672 = vstv %s241
        %v673 = vmul.f32 %v665, %v672
        %v674 = vadd.f32 %v621, %v673
        %v675 = vstv %s242
        %v676 = vmul.f32 %v665, %v675
        %v677 = vadd.f32 %v624, %v676
        %v678 = vstv %s243
        %v679 = vmul.f32 %v665, %v678
        %v680 = vadd.f32 %v627, %v679
        %v681 = vstv %s244
        %v682 = vmul.f32 %v665, %v681
        %v683 = vadd.f32 %v630, %v682
        %v684 = vstv %s245
        %v685 = vmul.f32 %v665, %v684
        %v686 = vadd.f32 %v633, %v685
        %v687 = vstv %s246
        %v688 = vmul.f32 %v665, %v687
        %v689 = vadd.f32 %v636, %v688
        %v690 = vstv %s247
        %v691 = vmul.f32 %v665, %v690
        %v692 = vadd.f32 %v639, %v691
        %v693 = vstv %s248
        %v694 = vmul.f32 %v665, %v693
        %v695 = vadd.f32 %v642, %v694
        %v696 = vstv %s249
        %v697 = vmul.f32 %v665, %v696
        %v698 = vadd.f32 %v645, %v697
        %v699 = vstv %s250
        %v700 = vmul.f32 %v665, %v699
        %v701 = vadd.f32 %v648, %v700
        %v702 = vstv %s251
        %v703 = vmul.f32 %v665, %v702
        %v704 = vadd.f32 %v651, %v703
        %v705 = vstv %s252
        %v706 = vmul.f32 %v665, %v705
        %v707 = vadd.f32 %v654, %v706
        %v708 = vstv %s253
        %v709 = vmul.f32 %v665, %v708
        %v710 = vadd.f32 %v657, %v709
        %v711 = vstv %s254
        %v712 = vmul.f32 %v665, %v711
        %v713 = vadd.f32 %v660, %v712
        %v714 = vstv %s148
        %v715 = vmul.f32 %v464, %v714
        %v716 = vstv %s164
        %v717 = vadd.f32 %v715, %v716
        %v718 = vmax.f32 %v717, 0.0
        %v719 = vstv %s255
        %v720 = vmul.f32 %v718, %v719
        %v721 = vadd.f32 %v668, %v720
        %v722 = vstv %s256
        %v723 = vmul.f32 %v718, %v722
        %v724 = vadd.f32 %v671, %v723
        %v725 = vstv %s257
        %v726 = vmul.f32 %v718, %v725
        %v727 = vadd.f32 %v674, %v726
        %v728 = vstv %s258
        %v729 = vmul.f32 %v718, %v728
        %v730 = vadd.f32 %v677, %v729
        %v731 = vstv %s259
        %v732 = vmul.f32 %v718, %v731
        %v733 = vadd.f32 %v680, %v732
        %v734 = vstv %s260
        %v735 = vmul.f32 %v718, %v734
        %v736 = vadd.f32 %v683, %v735
        %v737 = vstv %s261
        %v738 = vmul.f32 %v718, %v737
        %v739 = vadd.f32 %v686, %v738
        %v740 = vstv %s262
        %v741 = vmul.f32 %v718, %v740
        %v742 = vadd.f32 %v689, %v741
        %v743 = vstv %s263
        %v744 = vmul.f32 %v718, %v743
        %v745 = vadd.f32 %v692, %v744
        %v746 = vstv %s264
        %v747 = vmul.f32 %v718, %v746
        %v748 = vadd.f32 %v695, %v747
        %v749 = vstv %s265
        %v750 = vmul.f32 %v718, %v749
        %v751 = vadd.f32 %v698, %v750
        %v752 = vstv %s266
        %v753 = vmul.f32 %v718, %v752
        %v754 = vadd.f32 %v701, %v753
        %v755 = vstv %s267
        %v756 = vmul.f32 %v718, %v755
        %v757 = vadd.f32 %v704, %v756
        %v758 = vstv %s268
        %v759 = vmul.f32 %v718, %v758
        %v760 = vadd.f32 %v707, %v759
        %v761 = vstv %s269
        %v762 = vmul.f32 %v718, %v761
        %v763 = vadd.f32 %v710, %v762
        %v764 = vstv %s270
        %v765 = vmul.f32 %v718, %v764
        %v766 = vadd.f32 %v713, %v765
        %v767 = vstv %s149
        %v768 = vmul.f32 %v464, %v767
        %v769 = vstv %s165
        %v770 = vadd.f32 %v768, %v769
        %v771 = vmax.f32 %v770, 0.0
        %v772 = vstv %s271
        %v773 = vmul.f32 %v771, %v772
        %v774 = vadd.f32 %v721, %v773
        %v775 = vstv %s272
        %v776 = vmul.f32 %v771, %v775
        %v777 = vadd.f32 %v724, %v776
        %v778 = vstv %s273
        %v779 = vmul.f32 %v771, %v778
        %v780 = vadd.f32 %v727, %v779
        %v781 = vstv %s274
        %v782 = vmul.f32 %v771, %v781
        %v783 = vadd.f32 %v730, %v782
        %v784 = vstv %s275
        %v785 = vmul.f32 %v771, %v784
        %v786 = vadd.f32 %v733, %v785
        %v787 = vstv %s276
        %v788 = vmul.f32 %v771, %v787
        %v789 = vadd.f32 %v736, %v788
        %v790 = vstv %s277
        %v791 = vmul.f32 %v771, %v790
        %v792 = vadd.f32 %v739, %v791
        %v793 = vstv %s278
        %v794 = vmul.f32 %v771, %v793
        %v795 = vadd.f32 %v742, %v794
        %v796 = vstv %s279
        %v797 = vmul.f32 %v771, %v796
        %v798 = vadd.f32 %v745, %v797
        %v799 = vstv %s280
        %v800 = vmul.f32 %v771, %v799
        %v801 = vadd.f32 %v748, %v800
        %v802 = vstv %s281
        %v803 = vmul.f32 %v771, %v802
        %v804 = vadd.f32 %v751, %v803
        %v805 = vstv %s282
        %v806 = vmul.f32 %v771, %v805
        %v807 = vadd.f32 %v754, %v806
        %v808 = vstv %s283
        %v809 = vmul.f32 %v771, %v808
        %v810 = vadd.f32 %v757, %v809
        %v811 = vstv %s284
        %v812 = vmul.f32 %v771, %v811
        %v813 = vadd.f32 %v760, %v812
        %v814 = vstv %s285
        %v815 = vmul.f32 %v771, %v814
        %v816 = vadd.f32 %v763, %v815
        %v817 = vstv %s286
        %v818 = vmul.f32 %v771, %v817
        %v819 = vadd.f32 %v766, %v818
        %v820 = vstv %s150
        %v821 = vmul.f32 %v464, %v820
        %v822 = vstv %s166
        %v823 = vadd.f32 %v821, %v822
        %v824 = vmax.f32 %v823, 0.0
        %v825 = vstv %s287
        %v826 = vmul.f32 %v824, %v825
        %v827 = vadd.f32 %v774, %v826
        %v828 = vstv %s288
        %v829 = vmul.f32 %v824, %v828
        %v830 = vadd.f32 %v777, %v829
        %v831 = vstv %s289
        %v832 = vmul.f32 %v824, %v831
        %v833 = vadd.f32 %v780, %v832
        %v834 = vstv %s290
        %v835 = vmul.f32 %v824, %v834
        %v836 = vadd.f32 %v783, %v835
        %v837 = vstv %s291
        %v838 = vmul.f32 %v824, %v837
        %v839 = vadd.f32 %v786, %v838
        %v840 = vstv %s292
        %v841 = vmul.f32 %v824, %v840
        %v842 = vadd.f32 %v789, %v841
        %v843 = vstv %s293
        %v844 = vmul.f32 %v824, %v843
        %v845 = vadd.f32 %v792, %v844
        %v846 = vstv %s294
        %v847 = vmul.f32 %v824, %v846
        %v848 = vadd.f32 %v795, %v847
        %v849 = vstv %s295
        %v850 = vmul.f32 %v824, %v849
        %v851 = vadd.f32 %v798, %v850
        %v852 = vstv %s296
        %v853 = vmul.f32 %v824, %v852
        %v854 = vadd.f32 %v801, %v853
        %v855 = vstv %s297
        %v856 = vmul.f32 %v824, %v855
        %v857 = vadd.f32 %v804, %v856
        %v858 = vstv %s298
        %v859 = vmul.f32 %v824, %v858
        %v860 = vadd.f32 %v807, %v859
        %v861 = vstv %s299
        %v862 = vmul.f32 %v824, %v861
        %v863 = vadd.f32 %v810, %v862
        %v864 = vstv %s300
        %v865 = vmul.f32 %v824, %v864
        %v866 = vadd.f32 %v813, %v865
        %v867 = vstv %s301
        %v868 = vmul.f32 %v824, %v867
        %v869 = vadd.f32 %v816, %v868
        %v870 = vstv %s302
        %v871 = vmul.f32 %v824, %v870
        %v872 = vadd.f32 %v819, %v871
        %v873 = vstv %s151
        %v874 = vmul.f32 %v464, %v873
        %v875 = vstv %s167
        %v876 = vadd.f32 %v874, %v875
        %v877 = vmax.f32 %v876, 0.0
        %v878 = vstv %s303
        %v879 = vmul.f32 %v877, %v878
        %v880 = vadd.f32 %v827, %v879
        %v881 = vstv %s304
        %v882 = vmul.f32 %v877, %v881
        %v883 = vadd.f32 %v830, %v882
        %v884 = vstv %s305
        %v885 = vmul.f32 %v877, %v884
        %v886 = vadd.f32 %v833, %v885
        %v887 = vstv %s306
        %v888 = vmul.f32 %v877, %v887
        %v889 = vadd.f32 %v836, %v888
        %v890 = vstv %s307
        %v891 = vmul.f32 %v877, %v890
        %v892 = vadd.f32 %v839, %v891
        %v893 = vstv %s308
        %v894 = vmul.f32 %v877, %v893
        %v895 = vadd.f32 %v842, %v894
        %v896 = vstv %s309
        %v897 = vmul.f32 %v877, %v896
        %v898 = vadd.f32 %v845, %v897
        %v899 = vstv %s310
        %v900 = vmul.f32 %v877, %v899
        %v901 = vadd.f32 %v848, %v900
        %v902 = vstv %s311
        %v903 = vmul.f32 %v877, %v902
        %v904 = vadd.f32 %v851, %v903
        %v905 = vstv %s312
        %v906 = vmul.f32 %v877, %v905
        %v907 = vadd.f32 %v854, %v906
        %v908 = vstv %s313
        %v909 = vmul.f32 %v877, %v908
        %v910 = vadd.f32 %v857, %v909
        %v911 = vstv %s314
        %v912 = vmul.f32 %v877, %v911
        %v913 = vadd.f32 %v860, %v912
        %v914 = vstv %s315
        %v915 = vmul.f32 %v877, %v914
        %v916 = vadd.f32 %v863, %v915
        %v917 = vstv %s316
        %v918 = vmul.f32 %v877, %v917
        %v919 = vadd.f32 %v866, %v918
        %v920 = vstv %s317
        %v921 = vmul.f32 %v877, %v920
        %v922 = vadd.f32 %v869, %v921
        %v923 = vstv %s318
        %v924 = vmul.f32 %v877, %v923
        %v925 = vadd.f32 %v872, %v924
        %v926 = vstv %s152
        %v927 = vmul.f32 %v464, %v926
        %v928 = vstv %s168
        %v929 = vadd.f32 %v927, %v928
        %v930 = vmax.f32 %v929, 0.0
        %v931 = vstv %s319
        %v932 = vmul.f32 %v930, %v931
        %v933 = vadd.f32 %v880, %v932
        %v934 = vstv %s320
        %v935 = vmul.f32 %v930, %v934
        %v936 = vadd.f32 %v883, %v935
        %v937 = vstv %s321
        %v938 = vmul.f32 %v930, %v937
        %v939 = vadd.f32 %v886, %v938
        %v940 = vstv %s322
        %v941 = vmul.f32 %v930, %v940
        %v942 = vadd.f32 %v889, %v941
        %v943 = vstv %s323
        %v944 = vmul.f32 %v930, %v943
        %v945 = vadd.f32 %v892, %v944
        %v946 = vstv %s324
        %v947 = vmul.f32 %v930, %v946
        %v948 = vadd.f32 %v895, %v947
        %v949 = vstv %s325
        %v950 = vmul.f32 %v930, %v949
        %v951 = vadd.f32 %v898, %v950
        %v952 = vstv %s326
        %v953 = vmul.f32 %v930, %v952
        %v954 = vadd.f32 %v901, %v953
        %v955 = vstv %s327
        %v956 = vmul.f32 %v930, %v955
        %v957 = vadd.f32 %v904, %v956
        %v958 = vstv %s328
        %v959 = vmul.f32 %v930, %v958
        %v960 = vadd.f32 %v907, %v959
        %v961 = vstv %s329
        %v962 = vmul.f32 %v930, %v961
        %v963 = vadd.f32 %v910, %v962
        %v964 = vstv %s330
        %v965 = vmul.f32 %v930, %v964
        %v966 = vadd.f32 %v913, %v965
        %v967 = vstv %s331
        %v968 = vmul.f32 %v930, %v967
        %v969 = vadd.f32 %v916, %v968
        %v970 = vstv %s332
        %v971 = vmul.f32 %v930, %v970
        %v972 = vadd.f32 %v919, %v971
        %v973 = vstv %s333
        %v974 = vmul.f32 %v930, %v973
        %v975 = vadd.f32 %v922, %v974
        %v976 = vstv %s334
        %v977 = vmul.f32 %v930, %v976
        %v978 = vadd.f32 %v925, %v977
        %v979 = vstv %s153
        %v980 = vmul.f32 %v464, %v979
        %v981 = vstv %s169
        %v982 = vadd.f32 %v980, %v981
        %v983 = vmax.f32 %v982, 0.0
        %v984 = vstv %s335
        %v985 = vmul.f32 %v983, %v984
        %v986 = vadd.f32 %v933, %v985
        %v987 = vstv %s336
        %v988 = vmul.f32 %v983, %v987
        %v989 = vadd.f32 %v936, %v988
        %v990 = vstv %s337
        %v991 = vmul.f32 %v983, %v990
        %v992 = vadd.f32 %v939, %v991
        %v993 = vstv %s338
        %v994 = vmul.f32 %v983, %v993
        %v995 = vadd.f32 %v942, %v994
        %v996 = vstv %s339
        %v997 = vmul.f32 %v983, %v996
        %v998 = vadd.f32 %v945, %v997
        %v999 = vstv %s340
        %v1000 = vmul.f32 %v983, %v999
        %v1001 = vadd.f32 %v948, %v1000
        %v1002 = vstv %s341
        %v1003 = vmul.f32 %v983, %v1002
        %v1004 = vadd.f32 %v951, %v1003
        %v1005 = vstv %s342
        %v1006 = vmul.f32 %v983, %v1005
        %v1007 = vadd.f32 %v954, %v1006
        %v1008 = vstv %s343
        %v1009 = vmul.f32 %v983, %v1008
        %v1010 = vadd.f32 %v957, %v1009
        %v1011 = vstv %s344
        %v1012 = vmul.f32 %v983, %v1011
        %v1013 = vadd.f32 %v960, %v1012
        %v1014 = vstv %s345
        %v1015 = vmul.f32 %v983, %v1014
        %v1016 = vadd.f32 %v963, %v1015
        %v1017 = vstv %s346
        %v1018 = vmul.f32 %v983, %v1017
        %v1019 = vadd.f32 %v966, %v1018
        %v1020 = vstv %s347
        %v1021 = vmul.f32 %v983, %v1020
        %v1022 = vadd.f32 %v969, %v1021
        %v1023 = vstv %s348
        %v1024 = vmul.f32 %v983, %v1023
        %v1025 = vadd.f32 %v972, %v1024
        %v1026 = vstv %s349
        %v1027 = vmul.f32 %v983, %v1026
        %v1028 = vadd.f32 %v975, %v1027
        %v1029 = vstv %s350
        %v1030 = vmul.f32 %v983, %v1029
        %v1031 = vadd.f32 %v978, %v1030
        %v1032 = vstv %s154
        %v1033 = vmul.f32 %v464, %v1032
        %v1034 = vstv %s170
        %v1035 = vadd.f32 %v1033, %v1034
        %v1036 = vmax.f32 %v1035, 0.0
        %v1037 = vstv %s351
        %v1038 = vmul.f32 %v1036, %v1037
        %v1039 = vadd.f32 %v986, %v1038
        %v1040 = vstv %s352
        %v1041 = vmul.f32 %v1036, %v1040
        %v1042 = vadd.f32 %v989, %v1041
        %v1043 = vstv %s353
        %v1044 = vmul.f32 %v1036, %v1043
        %v1045 = vadd.f32 %v992, %v1044
        %v1046 = vstv %s354
        %v1047 = vmul.f32 %v1036, %v1046
        %v1048 = vadd.f32 %v995, %v1047
        %v1049 = vstv %s355
        %v1050 = vmul.f32 %v1036, %v1049
        %v1051 = vadd.f32 %v998, %v1050
        %v1052 = vstv %s356
        %v1053 = vmul.f32 %v1036, %v1052
        %v1054 = vadd.f32 %v1001, %v1053
        %v1055 = vstv %s357
        %v1056 = vmul.f32 %v1036, %v1055
        %v1057 = vadd.f32 %v1004, %v1056
        %v1058 = vstv %s358
        %v1059 = vmul.f32 %v1036, %v1058
        %v1060 = vadd.f32 %v1007, %v1059
        %v1061 = vstv %s359
        %v1062 = vmul.f32 %v1036, %v1061
        %v1063 = vadd.f32 %v1010, %v1062
        %v1064 = vstv %s360
        %v1065 = vmul.f32 %v1036, %v1064
        %v1066 = vadd.f32 %v1013, %v1065
        %v1067 = vstv %s361
        %v1068 = vmul.f32 %v1036, %v1067
        %v1069 = vadd.f32 %v1016, %v1068
        %v1070 = vstv %s362
        %v1071 = vmul.f32 %v1036, %v1070
        %v1072 = vadd.f32 %v1019, %v1071
        %v1073 = vstv %s363
        %v1074 = vmul.f32 %v1036, %v1073
        %v1075 = vadd.f32 %v1022, %v1074
        %v1076 = vstv %s364
        %v1077 = vmul.f32 %v1036, %v1076
        %v1078 = vadd.f32 %v1025, %v1077
        %v1079 = vstv %s365
        %v1080 = vmul.f32 %v1036, %v1079
        %v1081 = vadd.f32 %v1028, %v1080
        %v1082 = vstv %s366
        %v1083 = vmul.f32 %v1036, %v1082
        %v1084 = vadd.f32 %v1031, %v1083
        %v1085 = vstv %s155
        %v1086 = vmul.f32 %v464, %v1085
        %v1087 = vstv %s171
        %v1088 = vadd.f32 %v1086, %v1087
        %v1089 = vmax.f32 %v1088, 0.0
        %v1090 = vstv %s367
        %v1091 = vmul.f32 %v1089, %v1090
        %v1092 = vadd.f32 %v1039, %v1091
        %v1093 = vstv %s368
        %v1094 = vmul.f32 %v1089, %v1093
        %v1095 = vadd.f32 %v1042, %v1094
        %v1096 = vstv %s369
        %v1097 = vmul.f32 %v1089, %v1096
        %v1098 = vadd.f32 %v1045, %v1097
        %v1099 = vstv %s370
        %v1100 = vmul.f32 %v1089, %v1099
        %v1101 = vadd.f32 %v1048, %v1100
        %v1102 = vstv %s371
        %v1103 = vmul.f32 %v1089, %v1102
        %v1104 = vadd.f32 %v1051, %v1103
        %v1105 = vstv %s372
        %v1106 = vmul.f32 %v1089, %v1105
        %v1107 = vadd.f32 %v1054, %v1106
        %v1108 = vstv %s373
        %v1109 = vmul.f32 %v1089, %v1108
        %v1110 = vadd.f32 %v1057, %v1109
        %v1111 = vstv %s374
        %v1112 = vmul.f32 %v1089, %v1111
        %v1113 = vadd.f32 %v1060, %v1112
        %v1114 = vstv %s375
        %v1115 = vmul.f32 %v1089, %v1114
        %v1116 = vadd.f32 %v1063, %v1115
        %v1117 = vstv %s376
        %v1118 = vmul.f32 %v1089, %v1117
        %v1119 = vadd.f32 %v1066, %v1118
        %v1120 = vstv %s377
        %v1121 = vmul.f32 %v1089, %v1120
        %v1122 = vadd.f32 %v1069, %v1121
        %v1123 = vstv %s378
        %v1124 = vmul.f32 %v1089, %v1123
        %v1125 = vadd.f32 %v1072, %v1124
        %v1126 = vstv %s379
        %v1127 = vmul.f32 %v1089, %v1126
        %v1128 = vadd.f32 %v1075, %v1127
        %v1129 = vstv %s380
        %v1130 = vmul.f32 %v1089, %v1129
        %v1131 = vadd.f32 %v1078, %v1130
        %v1132 = vstv %s381
        %v1133 = vmul.f32 %v1089, %v1132
        %v1134 = vadd.f32 %v1081, %v1133
        %v1135 = vstv %s382
        %v1136 = vmul.f32 %v1089, %v1135
        %v1137 = vadd.f32 %v1084, %v1136
        %v1138 = vstv %s156
        %v1139 = vmul.f32 %v464, %v1138
        %v1140 = vstv %s172
        %v1141 = vadd.f32 %v1139, %v1140
        %v1142 = vmax.f32 %v1141, 0.0
        %v1143 = vstv %s383
        %v1144 = vmul.f32 %v1142, %v1143
        %v1145 = vadd.f32 %v1092, %v1144
        %v1146 = vstv %s384
        %v1147 = vmul.f32 %v1142, %v1146
        %v1148 = vadd.f32 %v1095, %v1147
        %v1149 = vstv %s385
        %v1150 = vmul.f32 %v1142, %v1149
        %v1151 = vadd.f32 %v1098, %v1150
        %v1152 = vstv %s386
        %v1153 = vmul.f32 %v1142, %v1152
        %v1154 = vadd.f32 %v1101, %v1153
        %v1155 = vstv %s387
        %v1156 = vmul.f32 %v1142, %v1155
        %v1157 = vadd.f32 %v1104, %v1156
        %v1158 = vstv %s388
        %v1159 = vmul.f32 %v1142, %v1158
        %v1160 = vadd.f32 %v1107, %v1159
        %v1161 = vstv %s389
        %v1162 = vmul.f32 %v1142, %v1161
        %v1163 = vadd.f32 %v1110, %v1162
        %v1164 = vstv %s390
        %v1165 = vmul.f32 %v1142, %v1164
        %v1166 = vadd.f32 %v1113, %v1165
        %v1167 = vstv %s391
        %v1168 = vmul.f32 %v1142, %v1167
        %v1169 = vadd.f32 %v1116, %v1168
        %v1170 = vstv %s392
        %v1171 = vmul.f32 %v1142, %v1170
        %v1172 = vadd.f32 %v1119, %v1171
        %v1173 = vstv %s393
        %v1174 = vmul.f32 %v1142, %v1173
        %v1175 = vadd.f32 %v1122, %v1174
        %v1176 = vstv %s394
        %v1177 = vmul.f32 %v1142, %v1176
        %v1178 = vadd.f32 %v1125, %v1177
        %v1179 = vstv %s395
        %v1180 = vmul.f32 %v1142, %v1179
        %v1181 = vadd.f32 %v1128, %v1180
        %v1182 = vstv %s396
        %v1183 = vmul.f32 %v1142, %v1182
        %v1184 = vadd.f32 %v1131, %v1183
        %v1185 = vstv %s397
        %v1186 = vmul.f32 %v1142, %v1185
        %v1187 = vadd.f32 %v1134, %v1186
        %v1188 = vstv %s398
        %v1189 = vmul.f32 %v1142, %v1188
        %v1190 = vadd.f32 %v1137, %v1189
        %v1191 = vstv %s157
        %v1192 = vmul.f32 %v464, %v1191
        %v1193 = vstv %s173
        %v1194 = vadd.f32 %v1192, %v1193
        %v1195 = vmax.f32 %v1194, 0.0
        %v1196 = vstv %s399
        %v1197 = vmul.f32 %v1195, %v1196
        %v1198 = vadd.f32 %v1145, %v1197
        %v1199 = vstv %s400
        %v1200 = vmul.f32 %v1195, %v1199
        %v1201 = vadd.f32 %v1148, %v1200
        %v1202 = vstv %s401
        %v1203 = vmul.f32 %v1195, %v1202
        %v1204 = vadd.f32 %v1151, %v1203
        %v1205 = vstv %s402
        %v1206 = vmul.f32 %v1195, %v1205
        %v1207 = vadd.f32 %v1154, %v1206
        %v1208 = vstv %s403
        %v1209 = vmul.f32 %v1195, %v1208
        %v1210 = vadd.f32 %v1157, %v1209
        %v1211 = vstv %s404
        %v1212 = vmul.f32 %v1195, %v1211
        %v1213 = vadd.f32 %v1160, %v1212
        %v1214 = vstv %s405
        %v1215 = vmul.f32 %v1195, %v1214
        %v1216 = vadd.f32 %v1163, %v1215
        %v1217 = vstv %s406
        %v1218 = vmul.f32 %v1195, %v1217
        %v1219 = vadd.f32 %v1166, %v1218
        %v1220 = vstv %s407
        %v1221 = vmul.f32 %v1195, %v1220
        %v1222 = vadd.f32 %v1169, %v1221
        %v1223 = vstv %s408
        %v1224 = vmul.f32 %v1195, %v1223
        %v1225 = vadd.f32 %v1172, %v1224
        %v1226 = vstv %s409
        %v1227 = vmul.f32 %v1195, %v1226
        %v1228 = vadd.f32 %v1175, %v1227
        %v1229 = vstv %s410
        %v1230 = vmul.f32 %v1195, %v1229
        %v1231 = vadd.f32 %v1178, %v1230
        %v1232 = vstv %s411
        %v1233 = vmul.f32 %v1195, %v1232
        %v1234 = vadd.f32 %v1181, %v1233
        %v1235 = vstv %s412
        %v1236 = vmul.f32 %v1195, %v1235
        %v1237 = vadd.f32 %v1184, %v1236
        %v1238 = vstv %s413
        %v1239 = vmul.f32 %v1195, %v1238
        %v1240 = vadd.f32 %v1187, %v1239
        %v1241 = vstv %s414
        %v1242 = vmul.f32 %v1195, %v1241
        %v1243 = vadd.f32 %v1190, %v1242
        %v1244 = vstv %s158
        %v1245 = vmul.f32 %v464, %v1244
        %v1246 = vstv %s174
        %v1247 = vadd.f32 %v1245, %v1246
        %v1248 = vmax.f32 %v1247, 0.0
        %v1249 = vstv %s415
        %v1250 = vmul.f32 %v1248, %v1249
        %v1251 = vadd.f32 %v1198, %v1250
        %v1252 = vstv %s416
        %v1253 = vmul.f32 %v1248, %v1252
        %v1254 = vadd.f32 %v1201, %v1253
        %v1255 = vstv %s417
        %v1256 = vmul.f32 %v1248, %v1255
        %v1257 = vadd.f32 %v1204, %v1256
        %v1258 = vstv %s418
        %v1259 = vmul.f32 %v1248, %v1258
        %v1260 = vadd.f32 %v1207, %v1259
        %v1261 = vstv %s419
        %v1262 = vmul.f32 %v1248, %v1261
        %v1263 = vadd.f32 %v1210, %v1262
        %v1264 = vstv %s420
        %v1265 = vmul.f32 %v1248, %v1264
        %v1266 = vadd.f32 %v1213, %v1265
        %v1267 = vstv %s421
        %v1268 = vmul.f32 %v1248, %v1267
        %v1269 = vadd.f32 %v1216, %v1268
        %v1270 = vstv %s422
        %v1271 = vmul.f32 %v1248, %v1270
        %v1272 = vadd.f32 %v1219, %v1271
        %v1273 = vstv %s423
        %v1274 = vmul.f32 %v1248, %v1273
        %v1275 = vadd.f32 %v1222, %v1274
        %v1276 = vstv %s424
        %v1277 = vmul.f32 %v1248, %v1276
        %v1278 = vadd.f32 %v1225, %v1277
        %v1279 = vstv %s425
        %v1280 = vmul.f32 %v1248, %v1279
        %v1281 = vadd.f32 %v1228, %v1280
        %v1282 = vstv %s426
        %v1283 = vmul.f32 %v1248, %v1282
        %v1284 = vadd.f32 %v1231, %v1283
        %v1285 = vstv %s427
        %v1286 = vmul.f32 %v1248, %v1285
        %v1287 = vadd.f32 %v1234, %v1286
        %v1288 = vstv %s428
        %v1289 = vmul.f32 %v1248, %v1288
        %v1290 = vadd.f32 %v1237, %v1289
        %v1291 = vstv %s429
        %v1292 = vmul.f32 %v1248, %v1291
        %v1293 = vadd.f32 %v1240, %v1292
        %v1294 = vstv %s430
        %v1295 = vmul.f32 %v1248, %v1294
        %v1296 = vadd.f32 %v1243, %v1295
        %v1297 = vstv %s431
        %v1298 = vadd.f32 %v1251, %v1297
        %v1299 = vmax.f32 %v1298, 0.0
        %v1300 = vstv %s447
        %v1301 = vmul.f32 %v1299, %v1300
        %v1302 = vstv %s432
        %v1303 = vadd.f32 %v1254, %v1302
        %v1304 = vmax.f32 %v1303, 0.0
        %v1305 = vstv %s448
        %v1306 = vmul.f32 %v1304, %v1305
        %v1307 = vadd.f32 %v1301, %v1306
        %v1308 = vstv %s433
        %v1309 = vadd.f32 %v1257, %v1308
        %v1310 = vmax.f32 %v1309, 0.0
        %v1311 = vstv %s449
        %v1312 = vmul.f32 %v1310, %v1311
        %v1313 = vadd.f32 %v1307, %v1312
        %v1314 = vstv %s434
        %v1315 = vadd.f32 %v1260, %v1314
        %v1316 = vmax.f32 %v1315, 0.0
        %v1317 = vstv %s450
        %v1318 = vmul.f32 %v1316, %v1317
        %v1319 = vadd.f32 %v1313, %v1318
        %v1320 = vstv %s435
        %v1321 = vadd.f32 %v1263, %v1320
        %v1322 = vmax.f32 %v1321, 0.0
        %v1323 = vstv %s451
        %v1324 = vmul.f32 %v1322, %v1323
        %v1325 = vadd.f32 %v1319, %v1324
        %v1326 = vstv %s436
        %v1327 = vadd.f32 %v1266, %v1326
        %v1328 = vmax.f32 %v1327, 0.0
        %v1329 = vstv %s452
        %v1330 = vmul.f32 %v1328, %v1329
        %v1331 = vadd.f32 %v1325, %v1330
        %v1332 = vstv %s437
        %v1333 = vadd.f32 %v1269, %v1332
        %v1334 = vmax.f32 %v1333, 0.0
        %v1335 = vstv %s453
        %v1336 = vmul.f32 %v1334, %v1335
        %v1337 = vadd.f32 %v1331, %v1336
        %v1338 = vstv %s438
        %v1339 = vadd.f32 %v1272, %v1338
        %v1340 = vmax.f32 %v1339, 0.0
        %v1341 = vstv %s454
        %v1342 = vmul.f32 %v1340, %v1341
        %v1343 = vadd.f32 %v1337, %v1342
        %v1344 = vstv %s439
        %v1345 = vadd.f32 %v1275, %v1344
        %v1346 = vmax.f32 %v1345, 0.0
        %v1347 = vstv %s455
        %v1348 = vmul.f32 %v1346, %v1347
        %v1349 = vadd.f32 %v1343, %v1348
        %v1350 = vstv %s440
        %v1351 = vadd.f32 %v1278, %v1350
        %v1352 = vmax.f32 %v1351, 0.0
        %v1353 = vstv %s456
        %v1354 = vmul.f32 %v1352, %v1353
        %v1355 = vadd.f32 %v1349, %v1354
        %v1356 = vstv %s441
        %v1357 = vadd.f32 %v1281, %v1356
        %v1358 = vmax.f32 %v1357, 0.0
        %v1359 = vstv %s457
        %v1360 = vmul.f32 %v1358, %v1359
        %v1361 = vadd.f32 %v1355, %v1360
        %v1362 = vstv %s442
        %v1363 = vadd.f32 %v1284, %v1362
        %v1364 = vmax.f32 %v1363, 0.0
        %v1365 = vstv %s458
        %v1366 = vmul.f32 %v1364, %v1365
        %v1367 = vadd.f32 %v1361, %v1366
        %v1368 = vstv %s443
        %v1369 = vadd.f32 %v1287, %v1368
        %v1370 = vmax.f32 %v1369, 0.0
        %v1371 = vstv %s459
        %v1372 = vmul.f32 %v1370, %v1371
        %v1373 = vadd.f32 %v1367, %v1372
        %v1374 = vstv %s444
        %v1375 = vadd.f32 %v1290, %v1374
        %v1376 = vmax.f32 %v1375, 0.0
        %v1377 = vstv %s460
        %v1378 = vmul.f32 %v1376, %v1377
        %v1379 = vadd.f32 %v1373, %v1378
        %v1380 = vstv %s445
        %v1381 = vadd.f32 %v1293, %v1380
        %v1382 = vmax.f32 %v1381, 0.0
        %v1383 = vstv %s461
        %v1384 = vmul.f32 %v1382, %v1383
        %v1385 = vadd.f32 %v1379, %v1384
        %v1386 = vstv %s446
        %v1387 = vadd.f32 %v1296, %v1386
        %v1388 = vmax.f32 %v1387, 0.0
        %v1389 = vstv %s462
        %v1390 = vmul.f32 %v1388, %v1389
        %v1391 = vadd.f32 %v1385, %v1390
        %v1392 = vstv %s463
        %v1393 = vadd.f32 %v1391, %v1392
        %v1394 = vmax.f32 %v1393, 0.0
        %1395 = vst [vmem:[%s142] sm:$0xff] %v1394
        %s1396 = sand.u32 %s61, 1
        %s1397 = scalar_lea.sflag [#allocation6], %s1396
        %s1398 = sand.u32 %s61, 1
        %s1399 = smul.addr %s1398, 8
        %s1400 = scalar_lea.vmem [#allocation7], %s1399
        // Predicated region
        $region29: #{tpu_custom_call.1} parent=23 // pred_check
          %p1401 = pneg %p71
        $region30: #{tpu_custom_call.1} parent=23 // pred_check_branch
          %1403 = sbr.rel (%p1401) target = $region32
        $region31: #{tpu_custom_call.1} parent=23 // pred_region
          %1405 = vsyncadd %s1397, 0
          %s1406 = smul.addr %s27, 8
          %s1407 = scalar_lea.hbm %s2, %s1406
          %s1409 = sshll.u32 %s1400, 4
          %s1410 = int_to_ptr.vmem [resolvable:$true] %s1409
          %s1411 = sshll.u32 %s1407, 4
          %s1412 = int_to_ptr.hbm [resolvable:$true] %s1411
          %1414 = dma.vmem_to_hbm [thread:$0]  %s1410, 128, %s1412, %s1397
        $region32: #{tpu_custom_call.1} parent=23 // pred_fallthru
          _
      $region24: #{tpu_custom_call.1} parent=5 // pred_fallthru
        _
      %p1415 = scmp.le.s32.totalorder 2, %s22
      // Predicated region
      $region33: #{tpu_custom_call.1} parent=5 // pred_check
        %p1416 = pneg %p1415
      $region34: #{tpu_custom_call.1} parent=5 // pred_check_branch
        %1418 = sbr.rel (%p1416) target = $region36
      $region35: #{tpu_custom_call.1} parent=5 // pred_region
        %s1419 = ssub.s32 %s22, 2
        // Predicated region
        $region37: #{tpu_custom_call.1} parent=35 // pred_check
          %p1420 = pneg %p77
        $region38: #{tpu_custom_call.1} parent=35 // pred_check_branch
          %1422 = sbr.rel (%p1420) target = $region40
        $region39: #{tpu_custom_call.1} parent=35 // pred_region
          %s1423 = sand.u32 %s62, 1
          %s1424 = scalar_lea.sflag [#allocation6], %s1423
          %s1425 = sand.u32 %s62, 1
          %s1426 = smul.addr %s1425, 8
          %s1427 = scalar_lea.vmem [#allocation7], %s1426
          %1429 = dma.done %s1424, 128
        $region40: #{tpu_custom_call.1} parent=35 // pred_fallthru
          _
      $region36: #{tpu_custom_call.1} parent=5 // pred_fallthru
        _
    $region6: #{tpu_custom_call.1} parent=1 // loop_footer
      %s26 = sadd.s32 1, %s22
    $region7: #{tpu_custom_call.1} parent=1 // loop_footer_branch
      %21 = sbr.rel target = $region3
    $region8: #{tpu_custom_call.1} parent=1 // loop_exit
      _
    %1430 = vsyncpa [#allocation5], 1
    %s1431 = scalar_lea.sflag [#allocation5], 1
    %1432 = vsyncpa %s1431, 1
    %1433 = vsyncpa [#allocation6], 1
    %s1434 = scalar_lea.sflag [#allocation6], 1
    %1435 = vsyncpa %s1434, 1

</llo_original>
